<compile_context>
chip_gen: v7x
topology: tpu7x:2x2x1
jax: 0.10.0
libtpu: 0.0.40
codegen_flags: <defaults>
</compile_context>

<pallas_src>
import functools

import jax
import jax.numpy as jnp
from jax.experimental import pallas as pl
from jax.experimental.pallas import tpu as pltpu


# ----------------------------------------------------------------------------
# Stand-in channel widths (real model: encoder 320ch, low-level 24ch, ASPP 256)
# ----------------------------------------------------------------------------
C_IN = 3                      # RGB input
PATCH = 4                     # output stride 4
C_PATCH = C_IN * PATCH * PATCH   # 48 : space-to-depth channels
C_STEM = 16                   # stand-in encoder features
C_LOW = 8                     # stand-in projected low-level features
C_ASPP = 16                   # stand-in ASPP features
HID = 8                       # ConvGRU hidden dim (after the 1x1 reduce conv)
NUM_CLASSES = 2

_VMEM_LIMIT = 32 * 1024 * 1024


# ----------------------------------------------------------------------------
# Kernel 1: fused OS4 head.  Everything operates on lane-flattened (C, S) slabs
# with S = Hq*Wq; 1x1 convs are channel-batched MXU matmuls, 3x3 convs are
# 9 masked-shift matmuls (shift matrices precomputed in the wrapper).
# ----------------------------------------------------------------------------
def _head_os4_kernel(x_ref, sh_ref,
                     stem_w, stem_b, low_w, low_b, aspp_w, aspp_b,
                     red_wa, red_wl, red_b, zn_w, zn_b,
                     c3_w, c3_b, c1_w, c1_b, o_ref, *, hid):
    f32 = jnp.float32
    mm = lambda a, b: jnp.dot(a, b, preferred_element_type=f32)
    relu = lambda a: jnp.maximum(a, 0.0)

    x = x_ref[...]                                            # (48, S)

    # --- backbone / head trunk: 1x1 convs as channel-batched matmuls --------
    feat = relu(mm(stem_w[...], x) + stem_b[...])             # (C_STEM, S)
    low = relu(mm(low_w[...], x) + low_b[...])                # (C_LOW,  S)
    aspp = relu(mm(aspp_w[...], feat) + aspp_b[...])          # (C_ASPP, S)
    # concat([aspp, low]) followed by the 1x1 reduce == a split matmul
    # (avoids an in-kernel concatenate).
    g_in = relu(mm(red_wa[...], aspp) + mm(red_wl[...], low) + red_b[...])  # (HID,S)

    # --- 3x3 convs via 9 zero-padded shift matrices (MXU, no misaligned
    #     lane slices, no padded scratch buffers) -----------------------------
    def shifted(a):                      # the 9 taps of `a`, computed once
        return [mm(a, sh_ref[t]) for t in range(9)]

    def conv3x3(w9, b, a_sh):            # w9: (9, cout, cin) tap-major weights
        acc = b[...]
        for t in range(9):
            acc = acc + mm(w9[t], a_sh[t])
        return acc

    # --- ConvGRU, single timestep, h0 = 0 ------------------------------------
    # z and n gate convs fused into one tap-major weight stack; reset gate and
    # hidden-tap weights are dropped at trace time because h0 = 0.
    g_sh = shifted(g_in)
    gates = conv3x3(zn_w, zn_b, g_sh)                         # (2*HID, S)
    z = jax.nn.sigmoid(gates[:hid, :])                        # update gate
    n = jnp.tanh(gates[hid:, :])                              # candidate
    h = z * n                                                 # (1-z)*h0 + z*n, h0=0

    # --- classifier: 3x3 conv + ReLU, then 1x1 -> num_classes ----------------
    y = relu(conv3x3(c3_w, c3_b, shifted(h)))                 # (HID, S)
    logits = mm(c1_w[...], y) + c1_b[...]                     # (NUM_CLASSES, S)
    o_ref[...] = logits.astype(o_ref.dtype)


def _tap_major(w):
    # (cout, cin, 3, 3) -> (9, cout, cin) with tap index t = kh*3 + kw.
    cout, cin = w.shape[0], w.shape[1]
    return w.transpose(2, 3, 0, 1).reshape(9, cout, cin)


def _shift_matrices(hq, wq):
    """9 (S,S) matrices M_t such that (X @ M_t)[:, p] is the zero-padded
    3x3 tap (dh, dw) of X on the row-major flattened spatial axis,
    t = (dh+1)*3 + (dw+1)."""
    s = hq * wq
    p = jnp.arange(s)
    rp, cp = p // wq, p % wq
    qi = jnp.arange(s)
    mats = []
    for dh in (-1, 0, 1):
        for dw in (-1, 0, 1):
            rq, cq = rp + dh, cp + dw
            valid = (rq >= 0) & (rq < hq) & (cq >= 0) & (cq < wq)
            src = rq * wq + cq
            m = ((qi[:, None] == src[None, :]) & valid[None, :]).astype(jnp.float32)
            mats.append(m)
    return jnp.stack(mats)                                    # (9, S, S)


def head_os4(params, x):
    """x: (N, 3, H, W) -> OS4 2-class logits, lane-flattened: (N, 2, Hq*Wq)."""
    n, c_in, h, w = x.shape
    hq, wq = h // PATCH, w // PATCH
    s = hq * wq

    # Stride-4 stem fused as space-to-depth + 1x1 matmul: all downstream work
    # runs at OS4, nothing is computed at full resolution and then decimated.
    x_s2d = (x.reshape(n, c_in, hq, PATCH, wq, PATCH)
              .transpose(0, 1, 3, 5, 2, 4)
              .reshape(n, C_PATCH, s))
    shifts = _shift_matrices(hq, wq)

    hid = HID
    col = lambda b: b[:, None]         # biases as (C, 1) for lane broadcast

    # First call: hidden is None -> h0 = 0, so only the x-halves of the update
    # gate (z) and candidate (n) convs matter; reset gate / hidden taps unused.
    zx_w = params["gru_zr_w"][:hid, :hid]                     # (HID, HID, 3, 3)
    nx_w = params["gru_cand_w"][:, :hid]                      # (HID, HID, 3, 3)
    zn_w = _tap_major(jnp.concatenate([zx_w, nx_w], axis=0))  # (9, 2*HID, HID)
    zn_b = col(jnp.concatenate([params["gru_zr_b"][:hid], params["gru_cand_b"]]))

    # split the post-concat 1x1 reduce so no in-kernel concatenate is needed
    red_wa = params["red_w"][:, :C_ASPP]
    red_wl = params["red_w"][:, C_ASPP:]

    args = (x_s2d, shifts,
            params["stem_w"], col(params["stem_b"]),
            params["low_w"], col(params["low_b"]),
            params["aspp_w"], col(params["aspp_b"]),
            red_wa, red_wl, col(params["red_b"]),
            zn_w, zn_b,
            _tap_major(params["cls3_w"]), col(params["cls3_b"]),
            params["cls1_w"], col(params["cls1_b"]))

    def wspec(a):                       # weights: full-extent, grid-invariant
        if len(a.shape) == 2:
            return pl.BlockSpec(a.shape, lambda i: (0, 0))
        return pl.BlockSpec(a.shape, lambda i: (0, 0, 0))

    in_specs = [pl.BlockSpec((None, C_PATCH, s), lambda i: (i, 0, 0))]
    in_specs += [wspec(a) for a in args[1:]]

    kern = functools.partial(_head_os4_kernel, hid=hid)
    return pl.pallas_call(
        kern,
        out_shape=jax.ShapeDtypeStruct((n, NUM_CLASSES, s), jnp.float32),
        # TODO(synk): at realistic resolutions also tile the OS4 spatial axis
        # (with 1-px halos for the 3x3 taps) for more grid depth / VMEM bound.
        grid=(n,),
        in_specs=in_specs,
        out_specs=pl.BlockSpec((None, NUM_CLASSES, s), lambda i: (i, 0, 0)),
        compiler_params=pltpu.CompilerParams(
            dimension_semantics=("parallel",),
            vmem_limit_bytes=_VMEM_LIMIT),
    )(*args)


# ----------------------------------------------------------------------------
# Kernel 2: bilinear upsample (align_corners=False) as two small MXU matmuls,
# tiled over output rows: grid = (N, Ho/TH) for pipelining / megacore and to
# bound the full-resolution output block (v7x VMEM).
# ----------------------------------------------------------------------------
def _bilinear_kernel(x_ref, wh_ref, wwt_ref, o_ref, *, c):
    wh = wh_ref[...]                                          # (TH, Hq)
    wwt = wwt_ref[...]                                        # (Wq, Wo)
    # num_classes == 2: the channel loop is two MXU calls on dense operands.
    for ci in range(c):
        t = jnp.dot(wh, x_ref[ci], preferred_element_type=jnp.float32)   # (TH, Wq)
        o_ref[ci] = jnp.dot(t, wwt,
                            preferred_element_type=jnp.float32).astype(o_ref.dtype)


def _interp_matrix(in_size, out_size):
    # PyTorch F.interpolate(mode='bilinear', align_corners=False) index math.
    scale = in_size / out_size
    o = jnp.arange(out_size, dtype=jnp.float32)
    src = jnp.maximum((o + 0.5) * scale - 0.5, 0.0)
    i0 = jnp.clip(jnp.floor(src).astype(jnp.int32), 0, in_size - 1)
    i1 = jnp.minimum(i0 + 1, in_size - 1)
    lam = src - i0.astype(jnp.float32)
    m = jnp.zeros((out_size, in_size), jnp.float32)
    m = m.at[jnp.arange(out_size), i0].add(1.0 - lam)
    m = m.at[jnp.arange(out_size), i1].add(lam)
    return m


def bilinear_upsample(x_os4, out_hw):
    """x_os4: (N, C, Hq, Wq) -> (N, C, Ho, Wo)."""
    n, c, hq, wq = x_os4.shape
    ho, wo = out_hw
    wh = _interp_matrix(hq, ho)                               # (Ho, Hq)
    wwt = _interp_matrix(wq, wo).T                            # (Wq, Wo)
    th = 8 if ho % 8 == 0 else ho                             # output-row tile
    kern = functools.partial(_bilinear_kernel, c=c)
    return pl.pallas_call(
        kern,
        out_shape=jax.ShapeDtypeStruct((n, c, ho, wo), jnp.float32),
        grid=(n, ho // th),
        in_specs=[
            pl.BlockSpec((None, c, hq, wq), lambda i, j: (i, 0, 0, 0)),
            pl.BlockSpec((th, hq), lambda i, j: (j, 0)),
            pl.BlockSpec((wq, wo), lambda i, j: (0, 0)),
        ],
        out_specs=pl.BlockSpec((None, c, th, wo), lambda i, j: (i, 0, j, 0)),
        compiler_params=pltpu.CompilerParams(
            dimension_semantics=("parallel", "parallel"),
            vmem_limit_bytes=_VMEM_LIMIT),
    )(x_os4, wh, wwt)


# ----------------------------------------------------------------------------
# Full forward pass (first call: GRU hidden is None -> zeros).
# ----------------------------------------------------------------------------
def deeplabv3plus_gru_v5_forward(params, x):
    n, _, h, w = x.shape
    hq, wq = h // PATCH, w // PATCH
    logits_os4 = head_os4(params, x)                          # (N, 2, Hq*Wq)
    # contiguous metadata reshape (free): lane-flattened -> 2-D spatial
    logits_os4 = logits_os4.reshape(n, NUM_CLASSES, hq, wq)
    return bilinear_upsample(logits_os4, (h, w))              # (N, 2, H, W)


def init_params(key):
    ks = jax.random.split(key, 16)
    w = lambda k, shape: 0.1 * jax.random.normal(k, shape, jnp.float32)
    hid = HID
    return {
        # TODO(synk): stand-in for the pretrained MobileNetV2 encoder: a
        # 4x4/stride-4 patch-embedding conv (space-to-depth + 1x1 matmul).
        "stem_w": w(ks[0], (C_STEM, C_PATCH)), "stem_b": w(ks[1], (C_STEM,)),
        # low-level feature projection (1x1 conv)
        "low_w": w(ks[2], (C_LOW, C_PATCH)), "low_b": w(ks[3], (C_LOW,)),
        # TODO(synk): ASPP (rates [12,24,36]) stands in as a single 1x1 conv.
        "aspp_w": w(ks[4], (C_ASPP, C_STEM)), "aspp_b": w(ks[5], (C_ASPP,)),
        # "1x1 conv to reduce complexity" after concat([aspp, low_level])
        "red_w": w(ks[6], (hid, C_ASPP + C_LOW)), "red_b": w(ks[7], (hid,)),
        # ConvGRU(input_dim=hid, hidden_dim=hid, k=3, pad=1):
        #   conv_gates: (z, r) on cat([x, h]);  conv_cand: n on cat([x, r*h])
        "gru_zr_w": w(ks[8], (2 * hid, 2 * hid, 3, 3)),
        "gru_zr_b": w(ks[9], (2 * hid,)),
        "gru_cand_w": w(ks[10], (hid, 2 * hid, 3, 3)),
        "gru_cand_b": w(ks[11], (hid,)),
        # classifier: 3x3 conv + ReLU, then 1x1 -> num_classes
        "cls3_w": w(ks[12], (hid, hid, 3, 3)), "cls3_b": w(ks[13], (hid,)),
        "cls1_w": w(ks[14], (NUM_CLASSES, hid)), "cls1_b": w(ks[15], (NUM_CLASSES,)),
    }


if __name__ == "__main__":
    key = jax.random.PRNGKey(0)
    pkey, xkey = jax.random.split(key)
    params = init_params(pkey)
    x = jax.random.normal(xkey, (2, 3, 16, 16), jnp.float32)     # NCHW input
    out = jax.jit(deeplabv3plus_gru_v5_forward)(params, x)
    out = jax.block_until_ready(out)
    assert out.shape == (2, 2, 16, 16) and out.dtype == jnp.float32
    assert bool(jnp.all(jnp.isfinite(out)))
    print("KERNEL_OK")
</pallas_src>

<mosaic_0001>
module attributes {stable_mosaic.version = 11 : i64} {
  func.func private @main(%arg0: i32) attributes {dimension_semantics = [#tpu.dimension_semantics<core_parallel>], iteration_bounds = array<i64: 2>, tpu.core_type = #tpu.core_type<sc_scalar_subcore>, window_params = []} {
    return
  }
}

module attributes {stable_mosaic.version = 11 : i64} {
  func.func private @main(%arg0: i32) attributes {dimension_semantics = [#tpu.dimension_semantics<core_parallel>], iteration_bounds = array<i64: 2>, tpu.core_type = #tpu.core_type<sc_scalar_subcore>, window_params = []} {
    return
  }
}

module attributes {stable_mosaic.version = 11 : i64} {
  func.func @_head_os4_kernel(%arg0: i32, %arg1: memref<1x48x16xf32, #tpu.memory_space<vmem>>, %arg2: memref<9x16x16xf32, #tpu.memory_space<vmem>>, %arg3: memref<16x48xf32, #tpu.memory_space<vmem>>, %arg4: memref<16x1xf32, #tpu.memory_space<vmem>>, %arg5: memref<8x48xf32, #tpu.memory_space<vmem>>, %arg6: memref<8x1xf32, #tpu.memory_space<vmem>>, %arg7: memref<16x16xf32, #tpu.memory_space<vmem>>, %arg8: memref<16x1xf32, #tpu.memory_space<vmem>>, %arg9: memref<8x16xf32, #tpu.memory_space<vmem>>, %arg10: memref<8x8xf32, #tpu.memory_space<vmem>>, %arg11: memref<8x1xf32, #tpu.memory_space<vmem>>, %arg12: memref<9x16x8xf32, #tpu.memory_space<vmem>>, %arg13: memref<16x1xf32, #tpu.memory_space<vmem>>, %arg14: memref<9x8x8xf32, #tpu.memory_space<vmem>>, %arg15: memref<8x1xf32, #tpu.memory_space<vmem>>, %arg16: memref<2x8xf32, #tpu.memory_space<vmem>>, %arg17: memref<2x1xf32, #tpu.memory_space<vmem>>, %arg18: memref<1x2x16xf32, #tpu.memory_space<vmem>>) attributes {dimension_semantics = [#tpu.dimension_semantics<parallel>], iteration_bounds = array<i64: 2>, scalar_prefetch = 0 : i64, scratch_operands = 0 : i64, tpu.core_type = #tpu.core_type<tc>, window_params = [{transform_indices = @transform_0, window_bounds = array<i64: 1, 48, 16>}, {pipeline_mode = #tpu.pipeline_mode<synchronous>, transform_indices = @transform_1, window_bounds = array<i64: 9, 16, 16>}, {pipeline_mode = #tpu.pipeline_mode<synchronous>, transform_indices = @transform_2, window_bounds = array<i64: 16, 48>}, {pipeline_mode = #tpu.pipeline_mode<synchronous>, transform_indices = @transform_3, window_bounds = array<i64: 16, 1>}, {pipeline_mode = #tpu.pipeline_mode<synchronous>, transform_indices = @transform_4, window_bounds = array<i64: 8, 48>}, {pipeline_mode = #tpu.pipeline_mode<synchronous>, transform_indices = @transform_5, window_bounds = array<i64: 8, 1>}, {pipeline_mode = #tpu.pipeline_mode<synchronous>, transform_indices = @transform_6, window_bounds = array<i64: 16, 16>}, {pipeline_mode = #tpu.pipeline_mode<synchronous>, transform_indices = @transform_7, window_bounds = array<i64: 16, 1>}, {pipeline_mode = #tpu.pipeline_mode<synchronous>, transform_indices = @transform_8, window_bounds = array<i64: 8, 16>}, {pipeline_mode = #tpu.pipeline_mode<synchronous>, transform_indices = @transform_9, window_bounds = array<i64: 8, 8>}, {pipeline_mode = #tpu.pipeline_mode<synchronous>, transform_indices = @transform_10, window_bounds = array<i64: 8, 1>}, {pipeline_mode = #tpu.pipeline_mode<synchronous>, transform_indices = @transform_11, window_bounds = array<i64: 9, 16, 8>}, {pipeline_mode = #tpu.pipeline_mode<synchronous>, transform_indices = @transform_12, window_bounds = array<i64: 16, 1>}, {pipeline_mode = #tpu.pipeline_mode<synchronous>, transform_indices = @transform_13, window_bounds = array<i64: 9, 8, 8>}, {pipeline_mode = #tpu.pipeline_mode<synchronous>, transform_indices = @transform_14, window_bounds = array<i64: 8, 1>}, {pipeline_mode = #tpu.pipeline_mode<synchronous>, transform_indices = @transform_15, window_bounds = array<i64: 2, 8>}, {pipeline_mode = #tpu.pipeline_mode<synchronous>, transform_indices = @transform_16, window_bounds = array<i64: 2, 1>}, {transform_indices = @transform_17, window_bounds = array<i64: 1, 2, 16>}]} {
    %c0 = arith.constant 0 : index
    %c0_0 = arith.constant 0 : index
    %c0_1 = arith.constant 0 : index
    %0 = vector.load %arg1[%c0, %c0_0, %c0_1] : memref<1x48x16xf32, #tpu.memory_space<vmem>>, vector<1x48x16xf32>
    %1 = vector.shape_cast %0 : vector<1x48x16xf32> to vector<48x16xf32>
    %c0_2 = arith.constant 0 : index
    %c0_3 = arith.constant 0 : index
    %2 = vector.load %arg3[%c0_2, %c0_3] : memref<16x48xf32, #tpu.memory_space<vmem>>, vector<16x48xf32>
    %cst = arith.constant dense<0.000000e+00> : vector<16x16xf32>
    %3 = tpu.matmul %2, %1, %cst {dimension_numbers = #tpu.dot_dimension_numbers<[1], [0], [0], [1], [0, 0, 1, 1], [], []>} : vector<16x48xf32>, vector<48x16xf32>, vector<16x16xf32> -> vector<16x16xf32>
    %c0_4 = arith.constant 0 : index
    %c0_5 = arith.constant 0 : index
    %4 = vector.load %arg4[%c0_4, %c0_5] : memref<16x1xf32, #tpu.memory_space<vmem>>, vector<16x1xf32>
    %5 = vector.broadcast %4 : vector<16x1xf32> to vector<16x16xf32>
    %6 = arith.addf %3, %5 : vector<16x16xf32>
    %cst_6 = arith.constant 0.000000e+00 : f32
    %7 = vector.broadcast %cst_6 : f32 to vector<16x16xf32>
    %8 = arith.maximumf %6, %7 : vector<16x16xf32>
    %c0_7 = arith.constant 0 : index
    %c0_8 = arith.constant 0 : index
    %9 = vector.load %arg5[%c0_7, %c0_8] : memref<8x48xf32, #tpu.memory_space<vmem>>, vector<8x48xf32>
    %cst_9 = arith.constant dense<0.000000e+00> : vector<8x16xf32>
    %10 = tpu.matmul %9, %1, %cst_9 {dimension_numbers = #tpu.dot_dimension_numbers<[1], [0], [0], [1], [0, 0, 1, 1], [], []>} : vector<8x48xf32>, vector<48x16xf32>, vector<8x16xf32> -> vector<8x16xf32>
    %c0_10 = arith.constant 0 : index
    %c0_11 = arith.constant 0 : index
    %11 = vector.load %arg6[%c0_10, %c0_11] : memref<8x1xf32, #tpu.memory_space<vmem>>, vector<8x1xf32>
    %12 = vector.broadcast %11 : vector<8x1xf32> to vector<8x16xf32>
    %13 = arith.addf %10, %12 : vector<8x16xf32>
    %cst_12 = arith.constant 0.000000e+00 : f32
    %14 = vector.broadcast %cst_12 : f32 to vector<8x16xf32>
    %15 = arith.maximumf %13, %14 : vector<8x16xf32>
    %c0_13 = arith.constant 0 : index
    %c0_14 = arith.constant 0 : index
    %16 = vector.load %arg7[%c0_13, %c0_14] : memref<16x16xf32, #tpu.memory_space<vmem>>, vector<16x16xf32>
    %cst_15 = arith.constant dense<0.000000e+00> : vector<16x16xf32>
    %17 = tpu.matmul %16, %8, %cst_15 {dimension_numbers = #tpu.dot_dimension_numbers<[1], [0], [0], [1], [0, 0, 1, 1], [], []>} : vector<16x16xf32>, vector<16x16xf32>, vector<16x16xf32> -> vector<16x16xf32>
    %c0_16 = arith.constant 0 : index
    %c0_17 = arith.constant 0 : index
    %18 = vector.load %arg8[%c0_16, %c0_17] : memref<16x1xf32, #tpu.memory_space<vmem>>, vector<16x1xf32>
    %19 = vector.broadcast %18 : vector<16x1xf32> to vector<16x16xf32>
    %20 = arith.addf %17, %19 : vector<16x16xf32>
    %cst_18 = arith.constant 0.000000e+00 : f32
    %21 = vector.broadcast %cst_18 : f32 to vector<16x16xf32>
    %22 = arith.maximumf %20, %21 : vector<16x16xf32>
    %c0_19 = arith.constant 0 : index
    %c0_20 = arith.constant 0 : index
    %23 = vector.load %arg9[%c0_19, %c0_20] : memref<8x16xf32, #tpu.memory_space<vmem>>, vector<8x16xf32>
    %cst_21 = arith.constant dense<0.000000e+00> : vector<8x16xf32>
    %24 = tpu.matmul %23, %22, %cst_21 {dimension_numbers = #tpu.dot_dimension_numbers<[1], [0], [0], [1], [0, 0, 1, 1], [], []>} : vector<8x16xf32>, vector<16x16xf32>, vector<8x16xf32> -> vector<8x16xf32>
    %c0_22 = arith.constant 0 : index
    %c0_23 = arith.constant 0 : index
    %25 = vector.load %arg10[%c0_22, %c0_23] : memref<8x8xf32, #tpu.memory_space<vmem>>, vector<8x8xf32>
    %cst_24 = arith.constant dense<0.000000e+00> : vector<8x16xf32>
    %26 = tpu.matmul %25, %15, %cst_24 {dimension_numbers = #tpu.dot_dimension_numbers<[1], [0], [0], [1], [0, 0, 1, 1], [], []>} : vector<8x8xf32>, vector<8x16xf32>, vector<8x16xf32> -> vector<8x16xf32>
    %27 = arith.addf %24, %26 : vector<8x16xf32>
    %c0_25 = arith.constant 0 : index
    %c0_26 = arith.constant 0 : index
    %28 = vector.load %arg11[%c0_25, %c0_26] : memref<8x1xf32, #tpu.memory_space<vmem>>, vector<8x1xf32>
    %29 = vector.broadcast %28 : vector<8x1xf32> to vector<8x16xf32>
    %30 = arith.addf %27, %29 : vector<8x16xf32>
    %cst_27 = arith.constant 0.000000e+00 : f32
    %31 = vector.broadcast %cst_27 : f32 to vector<8x16xf32>
    %32 = arith.maximumf %30, %31 : vector<8x16xf32>
    %c0_28 = arith.constant 0 : index
    %c0_29 = arith.constant 0 : index
    %c0_30 = arith.constant 0 : index
    %33 = vector.load %arg2[%c0_28, %c0_29, %c0_30] : memref<9x16x16xf32, #tpu.memory_space<vmem>>, vector<1x16x16xf32>
    %34 = vector.shape_cast %33 : vector<1x16x16xf32> to vector<16x16xf32>
    %cst_31 = arith.constant dense<0.000000e+00> : vector<8x16xf32>
    %35 = tpu.matmul %32, %34, %cst_31 {dimension_numbers = #tpu.dot_dimension_numbers<[1], [0], [0], [1], [0, 0, 1, 1], [], []>} : vector<8x16xf32>, vector<16x16xf32>, vector<8x16xf32> -> vector<8x16xf32>
    %c1 = arith.constant 1 : index
    %c0_32 = arith.constant 0 : index
    %c0_33 = arith.constant 0 : index
    %36 = vector.load %arg2[%c1, %c0_32, %c0_33] : memref<9x16x16xf32, #tpu.memory_space<vmem>>, vector<1x16x16xf32>
    %37 = vector.shape_cast %36 : vector<1x16x16xf32> to vector<16x16xf32>
    %cst_34 = arith.constant dense<0.000000e+00> : vector<8x16xf32>
    %38 = tpu.matmul %32, %37, %cst_34 {dimension_numbers = #tpu.dot_dimension_numbers<[1], [0], [0], [1], [0, 0, 1, 1], [], []>} : vector<8x16xf32>, vector<16x16xf32>, vector<8x16xf32> -> vector<8x16xf32>
    %c2 = arith.constant 2 : index
    %c0_35 = arith.constant 0 : index
    %c0_36 = arith.constant 0 : index
    %39 = vector.load %arg2[%c2, %c0_35, %c0_36] : memref<9x16x16xf32, #tpu.memory_space<vmem>>, vector<1x16x16xf32>
    %40 = vector.shape_cast %39 : vector<1x16x16xf32> to vector<16x16xf32>
    %cst_37 = arith.constant dense<0.000000e+00> : vector<8x16xf32>
    %41 = tpu.matmul %32, %40, %cst_37 {dimension_numbers = #tpu.dot_dimension_numbers<[1], [0], [0], [1], [0, 0, 1, 1], [], []>} : vector<8x16xf32>, vector<16x16xf32>, vector<8x16xf32> -> vector<8x16xf32>
    %c3 = arith.constant 3 : index
    %c0_38 = arith.constant 0 : index
    %c0_39 = arith.constant 0 : index
    %42 = vector.load %arg2[%c3, %c0_38, %c0_39] : memref<9x16x16xf32, #tpu.memory_space<vmem>>, vector<1x16x16xf32>
    %43 = vector.shape_cast %42 : vector<1x16x16xf32> to vector<16x16xf32>
    %cst_40 = arith.constant dense<0.000000e+00> : vector<8x16xf32>
    %44 = tpu.matmul %32, %43, %cst_40 {dimension_numbers = #tpu.dot_dimension_numbers<[1], [0], [0], [1], [0, 0, 1, 1], [], []>} : vector<8x16xf32>, vector<16x16xf32>, vector<8x16xf32> -> vector<8x16xf32>
    %c4 = arith.constant 4 : index
    %c0_41 = arith.constant 0 : index
    %c0_42 = arith.constant 0 : index
    %45 = vector.load %arg2[%c4, %c0_41, %c0_42] : memref<9x16x16xf32, #tpu.memory_space<vmem>>, vector<1x16x16xf32>
    %46 = vector.shape_cast %45 : vector<1x16x16xf32> to vector<16x16xf32>
    %cst_43 = arith.constant dense<0.000000e+00> : vector<8x16xf32>
    %47 = tpu.matmul %32, %46, %cst_43 {dimension_numbers = #tpu.dot_dimension_numbers<[1], [0], [0], [1], [0, 0, 1, 1], [], []>} : vector<8x16xf32>, vector<16x16xf32>, vector<8x16xf32> -> vector<8x16xf32>
    %c5 = arith.constant 5 : index
    %c0_44 = arith.constant 0 : index
    %c0_45 = arith.constant 0 : index
    %48 = vector.load %arg2[%c5, %c0_44, %c0_45] : memref<9x16x16xf32, #tpu.memory_space<vmem>>, vector<1x16x16xf32>
    %49 = vector.shape_cast %48 : vector<1x16x16xf32> to vector<16x16xf32>
    %cst_46 = arith.constant dense<0.000000e+00> : vector<8x16xf32>
    %50 = tpu.matmul %32, %49, %cst_46 {dimension_numbers = #tpu.dot_dimension_numbers<[1], [0], [0], [1], [0, 0, 1, 1], [], []>} : vector<8x16xf32>, vector<16x16xf32>, vector<8x16xf32> -> vector<8x16xf32>
    %c6 = arith.constant 6 : index
    %c0_47 = arith.constant 0 : index
    %c0_48 = arith.constant 0 : index
    %51 = vector.load %arg2[%c6, %c0_47, %c0_48] : memref<9x16x16xf32, #tpu.memory_space<vmem>>, vector<1x16x16xf32>
    %52 = vector.shape_cast %51 : vector<1x16x16xf32> to vector<16x16xf32>
    %cst_49 = arith.constant dense<0.000000e+00> : vector<8x16xf32>
    %53 = tpu.matmul %32, %52, %cst_49 {dimension_numbers = #tpu.dot_dimension_numbers<[1], [0], [0], [1], [0, 0, 1, 1], [], []>} : vector<8x16xf32>, vector<16x16xf32>, vector<8x16xf32> -> vector<8x16xf32>
    %c7 = arith.constant 7 : index
    %c0_50 = arith.constant 0 : index
    %c0_51 = arith.constant 0 : index
    %54 = vector.load %arg2[%c7, %c0_50, %c0_51] : memref<9x16x16xf32, #tpu.memory_space<vmem>>, vector<1x16x16xf32>
    %55 = vector.shape_cast %54 : vector<1x16x16xf32> to vector<16x16xf32>
    %cst_52 = arith.constant dense<0.000000e+00> : vector<8x16xf32>
    %56 = tpu.matmul %32, %55, %cst_52 {dimension_numbers = #tpu.dot_dimension_numbers<[1], [0], [0], [1], [0, 0, 1, 1], [], []>} : vector<8x16xf32>, vector<16x16xf32>, vector<8x16xf32> -> vector<8x16xf32>
    %c8 = arith.constant 8 : index
    %c0_53 = arith.constant 0 : index
    %c0_54 = arith.constant 0 : index
    %57 = vector.load %arg2[%c8, %c0_53, %c0_54] : memref<9x16x16xf32, #tpu.memory_space<vmem>>, vector<1x16x16xf32>
    %58 = vector.shape_cast %57 : vector<1x16x16xf32> to vector<16x16xf32>
    %cst_55 = arith.constant dense<0.000000e+00> : vector<8x16xf32>
    %59 = tpu.matmul %32, %58, %cst_55 {dimension_numbers = #tpu.dot_dimension_numbers<[1], [0], [0], [1], [0, 0, 1, 1], [], []>} : vector<8x16xf32>, vector<16x16xf32>, vector<8x16xf32> -> vector<8x16xf32>
    %c0_56 = arith.constant 0 : index
    %c0_57 = arith.constant 0 : index
    %60 = vector.load %arg13[%c0_56, %c0_57] : memref<16x1xf32, #tpu.memory_space<vmem>>, vector<16x1xf32>
    %c0_58 = arith.constant 0 : index
    %c0_59 = arith.constant 0 : index
    %c0_60 = arith.constant 0 : index
    %61 = vector.load %arg12[%c0_58, %c0_59, %c0_60] : memref<9x16x8xf32, #tpu.memory_space<vmem>>, vector<1x16x8xf32>
    %62 = vector.shape_cast %61 : vector<1x16x8xf32> to vector<16x8xf32>
    %cst_61 = arith.constant dense<0.000000e+00> : vector<16x16xf32>
    %63 = tpu.matmul %62, %35, %cst_61 {dimension_numbers = #tpu.dot_dimension_numbers<[1], [0], [0], [1], [0, 0, 1, 1], [], []>} : vector<16x8xf32>, vector<8x16xf32>, vector<16x16xf32> -> vector<16x16xf32>
    %64 = vector.broadcast %60 : vector<16x1xf32> to vector<16x16xf32>
    %65 = arith.addf %64, %63 : vector<16x16xf32>
    %c1_62 = arith.constant 1 : index
    %c0_63 = arith.constant 0 : index
    %c0_64 = arith.constant 0 : index
    %66 = vector.load %arg12[%c1_62, %c0_63, %c0_64] : memref<9x16x8xf32, #tpu.memory_space<vmem>>, vector<1x16x8xf32>
    %67 = vector.shape_cast %66 : vector<1x16x8xf32> to vector<16x8xf32>
    %cst_65 = arith.constant dense<0.000000e+00> : vector<16x16xf32>
    %68 = tpu.matmul %67, %38, %cst_65 {dimension_numbers = #tpu.dot_dimension_numbers<[1], [0], [0], [1], [0, 0, 1, 1], [], []>} : vector<16x8xf32>, vector<8x16xf32>, vector<16x16xf32> -> vector<16x16xf32>
    %69 = arith.addf %65, %68 : vector<16x16xf32>
    %c2_66 = arith.constant 2 : index
    %c0_67 = arith.constant 0 : index
    %c0_68 = arith.constant 0 : index
    %70 = vector.load %arg12[%c2_66, %c0_67, %c0_68] : memref<9x16x8xf32, #tpu.memory_space<vmem>>, vector<1x16x8xf32>
    %71 = vector.shape_cast %70 : vector<1x16x8xf32> to vector<16x8xf32>
    %cst_69 = arith.constant dense<0.000000e+00> : vector<16x16xf32>
    %72 = tpu.matmul %71, %41, %cst_69 {dimension_numbers = #tpu.dot_dimension_numbers<[1], [0], [0], [1], [0, 0, 1, 1], [], []>} : vector<16x8xf32>, vector<8x16xf32>, vector<16x16xf32> -> vector<16x16xf32>
    %73 = arith.addf %69, %72 : vector<16x16xf32>
    %c3_70 = arith.constant 3 : index
    %c0_71 = arith.constant 0 : index
    %c0_72 = arith.constant 0 : index
    %74 = vector.load %arg12[%c3_70, %c0_71, %c0_72] : memref<9x16x8xf32, #tpu.memory_space<vmem>>, vector<1x16x8xf32>
    %75 = vector.shape_cast %74 : vector<1x16x8xf32> to vector<16x8xf32>
    %cst_73 = arith.constant dense<0.000000e+00> : vector<16x16xf32>
    %76 = tpu.matmul %75, %44, %cst_73 {dimension_numbers = #tpu.dot_dimension_numbers<[1], [0], [0], [1], [0, 0, 1, 1], [], []>} : vector<16x8xf32>, vector<8x16xf32>, vector<16x16xf32> -> vector<16x16xf32>
    %77 = arith.addf %73, %76 : vector<16x16xf32>
    %c4_74 = arith.constant 4 : index
    %c0_75 = arith.constant 0 : index
    %c0_76 = arith.constant 0 : index
    %78 = vector.load %arg12[%c4_74, %c0_75, %c0_76] : memref<9x16x8xf32, #tpu.memory_space<vmem>>, vector<1x16x8xf32>
    %79 = vector.shape_cast %78 : vector<1x16x8xf32> to vector<16x8xf32>
    %cst_77 = arith.constant dense<0.000000e+00> : vector<16x16xf32>
    %80 = tpu.matmul %79, %47, %cst_77 {dimension_numbers = #tpu.dot_dimension_numbers<[1], [0], [0], [1], [0, 0, 1, 1], [], []>} : vector<16x8xf32>, vector<8x16xf32>, vector<16x16xf32> -> vector<16x16xf32>
    %81 = arith.addf %77, %80 : vector<16x16xf32>
    %c5_78 = arith.constant 5 : index
    %c0_79 = arith.constant 0 : index
    %c0_80 = arith.constant 0 : index
    %82 = vector.load %arg12[%c5_78, %c0_79, %c0_80] : memref<9x16x8xf32, #tpu.memory_space<vmem>>, vector<1x16x8xf32>
    %83 = vector.shape_cast %82 : vector<1x16x8xf32> to vector<16x8xf32>
    %cst_81 = arith.constant dense<0.000000e+00> : vector<16x16xf32>
    %84 = tpu.matmul %83, %50, %cst_81 {dimension_numbers = #tpu.dot_dimension_numbers<[1], [0], [0], [1], [0, 0, 1, 1], [], []>} : vector<16x8xf32>, vector<8x16xf32>, vector<16x16xf32> -> vector<16x16xf32>
    %85 = arith.addf %81, %84 : vector<16x16xf32>
    %c6_82 = arith.constant 6 : index
    %c0_83 = arith.constant 0 : index
    %c0_84 = arith.constant 0 : index
    %86 = vector.load %arg12[%c6_82, %c0_83, %c0_84] : memref<9x16x8xf32, #tpu.memory_space<vmem>>, vector<1x16x8xf32>
    %87 = vector.shape_cast %86 : vector<1x16x8xf32> to vector<16x8xf32>
    %cst_85 = arith.constant dense<0.000000e+00> : vector<16x16xf32>
    %88 = tpu.matmul %87, %53, %cst_85 {dimension_numbers = #tpu.dot_dimension_numbers<[1], [0], [0], [1], [0, 0, 1, 1], [], []>} : vector<16x8xf32>, vector<8x16xf32>, vector<16x16xf32> -> vector<16x16xf32>
    %89 = arith.addf %85, %88 : vector<16x16xf32>
    %c7_86 = arith.constant 7 : index
    %c0_87 = arith.constant 0 : index
    %c0_88 = arith.constant 0 : index
    %90 = vector.load %arg12[%c7_86, %c0_87, %c0_88] : memref<9x16x8xf32, #tpu.memory_space<vmem>>, vector<1x16x8xf32>
    %91 = vector.shape_cast %90 : vector<1x16x8xf32> to vector<16x8xf32>
    %cst_89 = arith.constant dense<0.000000e+00> : vector<16x16xf32>
    %92 = tpu.matmul %91, %56, %cst_89 {dimension_numbers = #tpu.dot_dimension_numbers<[1], [0], [0], [1], [0, 0, 1, 1], [], []>} : vector<16x8xf32>, vector<8x16xf32>, vector<16x16xf32> -> vector<16x16xf32>
    %93 = arith.addf %89, %92 : vector<16x16xf32>
    %c8_90 = arith.constant 8 : index
    %c0_91 = arith.constant 0 : index
    %c0_92 = arith.constant 0 : index
    %94 = vector.load %arg12[%c8_90, %c0_91, %c0_92] : memref<9x16x8xf32, #tpu.memory_space<vmem>>, vector<1x16x8xf32>
    %95 = vector.shape_cast %94 : vector<1x16x8xf32> to vector<16x8xf32>
    %cst_93 = arith.constant dense<0.000000e+00> : vector<16x16xf32>
    %96 = tpu.matmul %95, %59, %cst_93 {dimension_numbers = #tpu.dot_dimension_numbers<[1], [0], [0], [1], [0, 0, 1, 1], [], []>} : vector<16x8xf32>, vector<8x16xf32>, vector<16x16xf32> -> vector<16x16xf32>
    %97 = arith.addf %93, %96 : vector<16x16xf32>
    %98 = vector.extract_strided_slice %97 {offsets = [0, 0], sizes = [8, 16], strides = [1, 1]} : vector<16x16xf32> to vector<8x16xf32>
    %99 = arith.negf %98 : vector<8x16xf32>
    %100 = math.exp %99 : vector<8x16xf32>
    %cst_94 = arith.constant 1.000000e+00 : f32
    %101 = vector.broadcast %cst_94 : f32 to vector<8x16xf32>
    %102 = arith.addf %101, %100 : vector<8x16xf32>
    %103 = arith.divf %101, %102 : vector<8x16xf32>
    %104 = vector.extract_strided_slice %97 {offsets = [8, 0], sizes = [8, 16], strides = [1, 1]} : vector<16x16xf32> to vector<8x16xf32>
    %105 = math.tanh %104 : vector<8x16xf32>
    %106 = arith.mulf %103, %105 : vector<8x16xf32>
    %c0_95 = arith.constant 0 : index
    %c0_96 = arith.constant 0 : index
    %c0_97 = arith.constant 0 : index
    %107 = vector.load %arg2[%c0_95, %c0_96, %c0_97] : memref<9x16x16xf32, #tpu.memory_space<vmem>>, vector<1x16x16xf32>
    %108 = vector.shape_cast %107 : vector<1x16x16xf32> to vector<16x16xf32>
    %cst_98 = arith.constant dense<0.000000e+00> : vector<8x16xf32>
    %109 = tpu.matmul %106, %108, %cst_98 {dimension_numbers = #tpu.dot_dimension_numbers<[1], [0], [0], [1], [0, 0, 1, 1], [], []>} : vector<8x16xf32>, vector<16x16xf32>, vector<8x16xf32> -> vector<8x16xf32>
    %c1_99 = arith.constant 1 : index
    %c0_100 = arith.constant 0 : index
    %c0_101 = arith.constant 0 : index
    %110 = vector.load %arg2[%c1_99, %c0_100, %c0_101] : memref<9x16x16xf32, #tpu.memory_space<vmem>>, vector<1x16x16xf32>
    %111 = vector.shape_cast %110 : vector<1x16x16xf32> to vector<16x16xf32>
    %cst_102 = arith.constant dense<0.000000e+00> : vector<8x16xf32>
    %112 = tpu.matmul %106, %111, %cst_102 {dimension_numbers = #tpu.dot_dimension_numbers<[1], [0], [0], [1], [0, 0, 1, 1], [], []>} : vector<8x16xf32>, vector<16x16xf32>, vector<8x16xf32> -> vector<8x16xf32>
    %c2_103 = arith.constant 2 : index
    %c0_104 = arith.constant 0 : index
    %c0_105 = arith.constant 0 : index
    %113 = vector.load %arg2[%c2_103, %c0_104, %c0_105] : memref<9x16x16xf32, #tpu.memory_space<vmem>>, vector<1x16x16xf32>
    %114 = vector.shape_cast %113 : vector<1x16x16xf32> to vector<16x16xf32>
    %cst_106 = arith.constant dense<0.000000e+00> : vector<8x16xf32>
    %115 = tpu.matmul %106, %114, %cst_106 {dimension_numbers = #tpu.dot_dimension_numbers<[1], [0], [0], [1], [0, 0, 1, 1], [], []>} : vector<8x16xf32>, vector<16x16xf32>, vector<8x16xf32> -> vector<8x16xf32>
    %c3_107 = arith.constant 3 : index
    %c0_108 = arith.constant 0 : index
    %c0_109 = arith.constant 0 : index
    %116 = vector.load %arg2[%c3_107, %c0_108, %c0_109] : memref<9x16x16xf32, #tpu.memory_space<vmem>>, vector<1x16x16xf32>
    %117 = vector.shape_cast %116 : vector<1x16x16xf32> to vector<16x16xf32>
    %cst_110 = arith.constant dense<0.000000e+00> : vector<8x16xf32>
    %118 = tpu.matmul %106, %117, %cst_110 {dimension_numbers = #tpu.dot_dimension_numbers<[1], [0], [0], [1], [0, 0, 1, 1], [], []>} : vector<8x16xf32>, vector<16x16xf32>, vector<8x16xf32> -> vector<8x16xf32>
    %c4_111 = arith.constant 4 : index
    %c0_112 = arith.constant 0 : index
    %c0_113 = arith.constant 0 : index
    %119 = vector.load %arg2[%c4_111, %c0_112, %c0_113] : memref<9x16x16xf32, #tpu.memory_space<vmem>>, vector<1x16x16xf32>
    %120 = vector.shape_cast %119 : vector<1x16x16xf32> to vector<16x16xf32>
    %cst_114 = arith.constant dense<0.000000e+00> : vector<8x16xf32>
    %121 = tpu.matmul %106, %120, %cst_114 {dimension_numbers = #tpu.dot_dimension_numbers<[1], [0], [0], [1], [0, 0, 1, 1], [], []>} : vector<8x16xf32>, vector<16x16xf32>, vector<8x16xf32> -> vector<8x16xf32>
    %c5_115 = arith.constant 5 : index
    %c0_116 = arith.constant 0 : index
    %c0_117 = arith.constant 0 : index
    %122 = vector.load %arg2[%c5_115, %c0_116, %c0_117] : memref<9x16x16xf32, #tpu.memory_space<vmem>>, vector<1x16x16xf32>
    %123 = vector.shape_cast %122 : vector<1x16x16xf32> to vector<16x16xf32>
    %cst_118 = arith.constant dense<0.000000e+00> : vector<8x16xf32>
    %124 = tpu.matmul %106, %123, %cst_118 {dimension_numbers = #tpu.dot_dimension_numbers<[1], [0], [0], [1], [0, 0, 1, 1], [], []>} : vector<8x16xf32>, vector<16x16xf32>, vector<8x16xf32> -> vector<8x16xf32>
    %c6_119 = arith.constant 6 : index
    %c0_120 = arith.constant 0 : index
    %c0_121 = arith.constant 0 : index
    %125 = vector.load %arg2[%c6_119, %c0_120, %c0_121] : memref<9x16x16xf32, #tpu.memory_space<vmem>>, vector<1x16x16xf32>
    %126 = vector.shape_cast %125 : vector<1x16x16xf32> to vector<16x16xf32>
    %cst_122 = arith.constant dense<0.000000e+00> : vector<8x16xf32>
    %127 = tpu.matmul %106, %126, %cst_122 {dimension_numbers = #tpu.dot_dimension_numbers<[1], [0], [0], [1], [0, 0, 1, 1], [], []>} : vector<8x16xf32>, vector<16x16xf32>, vector<8x16xf32> -> vector<8x16xf32>
    %c7_123 = arith.constant 7 : index
    %c0_124 = arith.constant 0 : index
    %c0_125 = arith.constant 0 : index
    %128 = vector.load %arg2[%c7_123, %c0_124, %c0_125] : memref<9x16x16xf32, #tpu.memory_space<vmem>>, vector<1x16x16xf32>
    %129 = vector.shape_cast %128 : vector<1x16x16xf32> to vector<16x16xf32>
    %cst_126 = arith.constant dense<0.000000e+00> : vector<8x16xf32>
    %130 = tpu.matmul %106, %129, %cst_126 {dimension_numbers = #tpu.dot_dimension_numbers<[1], [0], [0], [1], [0, 0, 1, 1], [], []>} : vector<8x16xf32>, vector<16x16xf32>, vector<8x16xf32> -> vector<8x16xf32>
    %c8_127 = arith.constant 8 : index
    %c0_128 = arith.constant 0 : index
    %c0_129 = arith.constant 0 : index
    %131 = vector.load %arg2[%c8_127, %c0_128, %c0_129] : memref<9x16x16xf32, #tpu.memory_space<vmem>>, vector<1x16x16xf32>
    %132 = vector.shape_cast %131 : vector<1x16x16xf32> to vector<16x16xf32>
    %cst_130 = arith.constant dense<0.000000e+00> : vector<8x16xf32>
    %133 = tpu.matmul %106, %132, %cst_130 {dimension_numbers = #tpu.dot_dimension_numbers<[1], [0], [0], [1], [0, 0, 1, 1], [], []>} : vector<8x16xf32>, vector<16x16xf32>, vector<8x16xf32> -> vector<8x16xf32>
    %c0_131 = arith.constant 0 : index
    %c0_132 = arith.constant 0 : index
    %134 = vector.load %arg15[%c0_131, %c0_132] : memref<8x1xf32, #tpu.memory_space<vmem>>, vector<8x1xf32>
    %c0_133 = arith.constant 0 : index
    %c0_134 = arith.constant 0 : index
    %c0_135 = arith.constant 0 : index
    %135 = vector.load %arg14[%c0_133, %c0_134, %c0_135] : memref<9x8x8xf32, #tpu.memory_space<vmem>>, vector<1x8x8xf32>
    %136 = vector.shape_cast %135 : vector<1x8x8xf32> to vector<8x8xf32>
    %cst_136 = arith.constant dense<0.000000e+00> : vector<8x16xf32>
    %137 = tpu.matmul %136, %109, %cst_136 {dimension_numbers = #tpu.dot_dimension_numbers<[1], [0], [0], [1], [0, 0, 1, 1], [], []>} : vector<8x8xf32>, vector<8x16xf32>, vector<8x16xf32> -> vector<8x16xf32>
    %138 = vector.broadcast %134 : vector<8x1xf32> to vector<8x16xf32>
    %139 = arith.addf %138, %137 : vector<8x16xf32>
    %c1_137 = arith.constant 1 : index
    %c0_138 = arith.constant 0 : index
    %c0_139 = arith.constant 0 : index
    %140 = vector.load %arg14[%c1_137, %c0_138, %c0_139] : memref<9x8x8xf32, #tpu.memory_space<vmem>>, vector<1x8x8xf32>
    %141 = vector.shape_cast %140 : vector<1x8x8xf32> to vector<8x8xf32>
    %cst_140 = arith.constant dense<0.000000e+00> : vector<8x16xf32>
    %142 = tpu.matmul %141, %112, %cst_140 {dimension_numbers = #tpu.dot_dimension_numbers<[1], [0], [0], [1], [0, 0, 1, 1], [], []>} : vector<8x8xf32>, vector<8x16xf32>, vector<8x16xf32> -> vector<8x16xf32>
    %143 = arith.addf %139, %142 : vector<8x16xf32>
    %c2_141 = arith.constant 2 : index
    %c0_142 = arith.constant 0 : index
    %c0_143 = arith.constant 0 : index
    %144 = vector.load %arg14[%c2_141, %c0_142, %c0_143] : memref<9x8x8xf32, #tpu.memory_space<vmem>>, vector<1x8x8xf32>
    %145 = vector.shape_cast %144 : vector<1x8x8xf32> to vector<8x8xf32>
    %cst_144 = arith.constant dense<0.000000e+00> : vector<8x16xf32>
    %146 = tpu.matmul %145, %115, %cst_144 {dimension_numbers = #tpu.dot_dimension_numbers<[1], [0], [0], [1], [0, 0, 1, 1], [], []>} : vector<8x8xf32>, vector<8x16xf32>, vector<8x16xf32> -> vector<8x16xf32>
    %147 = arith.addf %143, %146 : vector<8x16xf32>
    %c3_145 = arith.constant 3 : index
    %c0_146 = arith.constant 0 : index
    %c0_147 = arith.constant 0 : index
    %148 = vector.load %arg14[%c3_145, %c0_146, %c0_147] : memref<9x8x8xf32, #tpu.memory_space<vmem>>, vector<1x8x8xf32>
    %149 = vector.shape_cast %148 : vector<1x8x8xf32> to vector<8x8xf32>
    %cst_148 = arith.constant dense<0.000000e+00> : vector<8x16xf32>
    %150 = tpu.matmul %149, %118, %cst_148 {dimension_numbers = #tpu.dot_dimension_numbers<[1], [0], [0], [1], [0, 0, 1, 1], [], []>} : vector<8x8xf32>, vector<8x16xf32>, vector<8x16xf32> -> vector<8x16xf32>
    %151 = arith.addf %147, %150 : vector<8x16xf32>
    %c4_149 = arith.constant 4 : index
    %c0_150 = arith.constant 0 : index
    %c0_151 = arith.constant 0 : index
    %152 = vector.load %arg14[%c4_149, %c0_150, %c0_151] : memref<9x8x8xf32, #tpu.memory_space<vmem>>, vector<1x8x8xf32>
    %153 = vector.shape_cast %152 : vector<1x8x8xf32> to vector<8x8xf32>
    %cst_152 = arith.constant dense<0.000000e+00> : vector<8x16xf32>
    %154 = tpu.matmul %153, %121, %cst_152 {dimension_numbers = #tpu.dot_dimension_numbers<[1], [0], [0], [1], [0, 0, 1, 1], [], []>} : vector<8x8xf32>, vector<8x16xf32>, vector<8x16xf32> -> vector<8x16xf32>
    %155 = arith.addf %151, %154 : vector<8x16xf32>
    %c5_153 = arith.constant 5 : index
    %c0_154 = arith.constant 0 : index
    %c0_155 = arith.constant 0 : index
    %156 = vector.load %arg14[%c5_153, %c0_154, %c0_155] : memref<9x8x8xf32, #tpu.memory_space<vmem>>, vector<1x8x8xf32>
    %157 = vector.shape_cast %156 : vector<1x8x8xf32> to vector<8x8xf32>
    %cst_156 = arith.constant dense<0.000000e+00> : vector<8x16xf32>
    %158 = tpu.matmul %157, %124, %cst_156 {dimension_numbers = #tpu.dot_dimension_numbers<[1], [0], [0], [1], [0, 0, 1, 1], [], []>} : vector<8x8xf32>, vector<8x16xf32>, vector<8x16xf32> -> vector<8x16xf32>
    %159 = arith.addf %155, %158 : vector<8x16xf32>
    %c6_157 = arith.constant 6 : index
    %c0_158 = arith.constant 0 : index
    %c0_159 = arith.constant 0 : index
    %160 = vector.load %arg14[%c6_157, %c0_158, %c0_159] : memref<9x8x8xf32, #tpu.memory_space<vmem>>, vector<1x8x8xf32>
    %161 = vector.shape_cast %160 : vector<1x8x8xf32> to vector<8x8xf32>
    %cst_160 = arith.constant dense<0.000000e+00> : vector<8x16xf32>
    %162 = tpu.matmul %161, %127, %cst_160 {dimension_numbers = #tpu.dot_dimension_numbers<[1], [0], [0], [1], [0, 0, 1, 1], [], []>} : vector<8x8xf32>, vector<8x16xf32>, vector<8x16xf32> -> vector<8x16xf32>
    %163 = arith.addf %159, %162 : vector<8x16xf32>
    %c7_161 = arith.constant 7 : index
    %c0_162 = arith.constant 0 : index
    %c0_163 = arith.constant 0 : index
    %164 = vector.load %arg14[%c7_161, %c0_162, %c0_163] : memref<9x8x8xf32, #tpu.memory_space<vmem>>, vector<1x8x8xf32>
    %165 = vector.shape_cast %164 : vector<1x8x8xf32> to vector<8x8xf32>
    %cst_164 = arith.constant dense<0.000000e+00> : vector<8x16xf32>
    %166 = tpu.matmul %165, %130, %cst_164 {dimension_numbers = #tpu.dot_dimension_numbers<[1], [0], [0], [1], [0, 0, 1, 1], [], []>} : vector<8x8xf32>, vector<8x16xf32>, vector<8x16xf32> -> vector<8x16xf32>
    %167 = arith.addf %163, %166 : vector<8x16xf32>
    %c8_165 = arith.constant 8 : index
    %c0_166 = arith.constant 0 : index
    %c0_167 = arith.constant 0 : index
    %168 = vector.load %arg14[%c8_165, %c0_166, %c0_167] : memref<9x8x8xf32, #tpu.memory_space<vmem>>, vector<1x8x8xf32>
    %169 = vector.shape_cast %168 : vector<1x8x8xf32> to vector<8x8xf32>
    %cst_168 = arith.constant dense<0.000000e+00> : vector<8x16xf32>
    %170 = tpu.matmul %169, %133, %cst_168 {dimension_numbers = #tpu.dot_dimension_numbers<[1], [0], [0], [1], [0, 0, 1, 1], [], []>} : vector<8x8xf32>, vector<8x16xf32>, vector<8x16xf32> -> vector<8x16xf32>
    %171 = arith.addf %167, %170 : vector<8x16xf32>
    %cst_169 = arith.constant 0.000000e+00 : f32
    %172 = vector.broadcast %cst_169 : f32 to vector<8x16xf32>
    %173 = arith.maximumf %171, %172 : vector<8x16xf32>
    %c0_170 = arith.constant 0 : index
    %c0_171 = arith.constant 0 : index
    %174 = vector.load %arg16[%c0_170, %c0_171] : memref<2x8xf32, #tpu.memory_space<vmem>>, vector<2x8xf32>
    %cst_172 = arith.constant dense<0.000000e+00> : vector<2x16xf32>
    %175 = tpu.matmul %174, %173, %cst_172 {dimension_numbers = #tpu.dot_dimension_numbers<[1], [0], [0], [1], [0, 0, 1, 1], [], []>} : vector<2x8xf32>, vector<8x16xf32>, vector<2x16xf32> -> vector<2x16xf32>
    %c0_173 = arith.constant 0 : index
    %c0_174 = arith.constant 0 : index
    %176 = vector.load %arg17[%c0_173, %c0_174] : memref<2x1xf32, #tpu.memory_space<vmem>>, vector<2x1xf32>
    %177 = vector.broadcast %176 : vector<2x1xf32> to vector<2x16xf32>
    %178 = arith.addf %175, %177 : vector<2x16xf32>
    %c0_175 = arith.constant 0 : index
    %c0_176 = arith.constant 0 : index
    %c0_177 = arith.constant 0 : index
    %179 = vector.load %arg18[%c0_175, %c0_176, %c0_177] : memref<1x2x16xf32, #tpu.memory_space<vmem>>, vector<1x2x16xf32>
    %180 = vector.shape_cast %179 : vector<1x2x16xf32> to vector<2x16xf32>
    %181 = vector.shape_cast %178 : vector<2x16xf32> to vector<1x2x16xf32>
    tpu.vector_store %arg18[%c0_175, %c0_176, %c0_177], %181 {strides = array<i32>} : memref<1x2x16xf32, #tpu.memory_space<vmem>>, vector<1x2x16xf32>,
    return
  }
  func.func @transform_0(%arg0: i32) -> (i32, i32, i32) {
    %c0_i32 = arith.constant 0 : i32
    %c0_i32_0 = arith.constant 0 : i32
    %c0_i32_1 = arith.constant 0 : i32
    return %arg0, %c0_i32, %c0_i32_0 : i32, i32, i32
  }
  func.func @transform_1(%arg0: i32) -> (i32, i32, i32) {
    %c0_i32 = arith.constant 0 : i32
    %c0_i32_0 = arith.constant 0 : i32
    %c0_i32_1 = arith.constant 0 : i32
    %c0_i32_2 = arith.constant 0 : i32
    return %c0_i32, %c0_i32_0, %c0_i32_1 : i32, i32, i32
  }
  func.func @transform_2(%arg0: i32) -> (i32, i32) {
    %c0_i32 = arith.constant 0 : i32
    %c0_i32_0 = arith.constant 0 : i32
    %c0_i32_1 = arith.constant 0 : i32
    return %c0_i32, %c0_i32_0 : i32, i32
  }
  func.func @transform_3(%arg0: i32) -> (i32, i32) {
    %c0_i32 = arith.constant 0 : i32
    %c0_i32_0 = arith.constant 0 : i32
    %c0_i32_1 = arith.constant 0 : i32
    return %c0_i32, %c0_i32_0 : i32, i32
  }
  func.func @transform_4(%arg0: i32) -> (i32, i32) {
    %c0_i32 = arith.constant 0 : i32
    %c0_i32_0 = arith.constant 0 : i32
    %c0_i32_1 = arith.constant 0 : i32
    return %c0_i32, %c0_i32_0 : i32, i32
  }
  func.func @transform_5(%arg0: i32) -> (i32, i32) {
    %c0_i32 = arith.constant 0 : i32
    %c0_i32_0 = arith.constant 0 : i32
    %c0_i32_1 = arith.constant 0 : i32
    return %c0_i32, %c0_i32_0 : i32, i32
  }
  func.func @transform_6(%arg0: i32) -> (i32, i32) {
    %c0_i32 = arith.constant 0 : i32
    %c0_i32_0 = arith.constant 0 : i32
    %c0_i32_1 = arith.constant 0 : i32
    return %c0_i32, %c0_i32_0 : i32, i32
  }
  func.func @transform_7(%arg0: i32) -> (i32, i32) {
    %c0_i32 = arith.constant 0 : i32
    %c0_i32_0 = arith.constant 0 : i32
    %c0_i32_1 = arith.constant 0 : i32
    return %c0_i32, %c0_i32_0 : i32, i32
  }
  func.func @transform_8(%arg0: i32) -> (i32, i32) {
    %c0_i32 = arith.constant 0 : i32
    %c0_i32_0 = arith.constant 0 : i32
    %c0_i32_1 = arith.constant 0 : i32
    return %c0_i32, %c0_i32_0 : i32, i32
  }
  func.func @transform_9(%arg0: i32) -> (i32, i32) {
    %c0_i32 = arith.constant 0 : i32
    %c0_i32_0 = arith.constant 0 : i32
    %c0_i32_1 = arith.constant 0 : i32
    return %c0_i32, %c0_i32_0 : i32, i32
  }
  func.func @transform_10(%arg0: i32) -> (i32, i32) {
    %c0_i32 = arith.constant 0 : i32
    %c0_i32_0 = arith.constant 0 : i32
    %c0_i32_1 = arith.constant 0 : i32
    return %c0_i32, %c0_i32_0 : i32, i32
  }
  func.func @transform_11(%arg0: i32) -> (i32, i32, i32) {
    %c0_i32 = arith.constant 0 : i32
    %c0_i32_0 = arith.constant 0 : i32
    %c0_i32_1 = arith.constant 0 : i32
    %c0_i32_2 = arith.constant 0 : i32
    return %c0_i32, %c0_i32_0, %c0_i32_1 : i32, i32, i32
  }
  func.func @transform_12(%arg0: i32) -> (i32, i32) {
    %c0_i32 = arith.constant 0 : i32
    %c0_i32_0 = arith.constant 0 : i32
    %c0_i32_1 = arith.constant 0 : i32
    return %c0_i32, %c0_i32_0 : i32, i32
  }
  func.func @transform_13(%arg0: i32) -> (i32, i32, i32) {
    %c0_i32 = arith.constant 0 : i32
    %c0_i32_0 = arith.constant 0 : i32
    %c0_i32_1 = arith.constant 0 : i32
    %c0_i32_2 = arith.constant 0 : i32
    return %c0_i32, %c0_i32_0, %c0_i32_1 : i32, i32, i32
  }
  func.func @transform_14(%arg0: i32) -> (i32, i32) {
    %c0_i32 = arith.constant 0 : i32
    %c0_i32_0 = arith.constant 0 : i32
    %c0_i32_1 = arith.constant 0 : i32
    return %c0_i32, %c0_i32_0 : i32, i32
  }
  func.func @transform_15(%arg0: i32) -> (i32, i32) {
    %c0_i32 = arith.constant 0 : i32
    %c0_i32_0 = arith.constant 0 : i32
    %c0_i32_1 = arith.constant 0 : i32
    return %c0_i32, %c0_i32_0 : i32, i32
  }
  func.func @transform_16(%arg0: i32) -> (i32, i32) {
    %c0_i32 = arith.constant 0 : i32
    %c0_i32_0 = arith.constant 0 : i32
    %c0_i32_1 = arith.constant 0 : i32
    return %c0_i32, %c0_i32_0 : i32, i32
  }
  func.func @transform_17(%arg0: i32) -> (i32, i32, i32) {
    %c0_i32 = arith.constant 0 : i32
    %c0_i32_0 = arith.constant 0 : i32
    %c0_i32_1 = arith.constant 0 : i32
    return %arg0, %c0_i32, %c0_i32_0 : i32, i32, i32
  }
}

module attributes {stable_mosaic.version = 11 : i64} {
  func.func @_bilinear_kernel(%arg0: i32, %arg1: i32, %arg2: memref<1x2x4x4xf32, #tpu.memory_space<vmem>>, %arg3: memref<8x4xf32, #tpu.memory_space<vmem>>, %arg4: memref<4x16xf32, #tpu.memory_space<vmem>>, %arg5: memref<1x2x8x16xf32, #tpu.memory_space<vmem>>) attributes {dimension_semantics = [#tpu.dimension_semantics<parallel>, #tpu.dimension_semantics<parallel>], iteration_bounds = array<i64: 2, 2>, scalar_prefetch = 0 : i64, scratch_operands = 0 : i64, tpu.core_type = #tpu.core_type<tc>, window_params = [{transform_indices = @transform_0, window_bounds = array<i64: 1, 2, 4, 4>}, {transform_indices = @transform_1, window_bounds = array<i64: 8, 4>}, {pipeline_mode = #tpu.pipeline_mode<synchronous>, transform_indices = @transform_2, window_bounds = array<i64: 4, 16>}, {transform_indices = @transform_3, window_bounds = array<i64: 1, 2, 8, 16>}]} {
    %c0 = arith.constant 0 : index
    %c0_0 = arith.constant 0 : index
    %0 = vector.load %arg3[%c0, %c0_0] : memref<8x4xf32, #tpu.memory_space<vmem>>, vector<8x4xf32>
    %c0_1 = arith.constant 0 : index
    %c0_2 = arith.constant 0 : index
    %1 = vector.load %arg4[%c0_1, %c0_2] : memref<4x16xf32, #tpu.memory_space<vmem>>, vector<4x16xf32>
    %c0_3 = arith.constant 0 : index
    %c0_4 = arith.constant 0 : index
    %c0_5 = arith.constant 0 : index
    %c0_6 = arith.constant 0 : index
    %2 = vector.load %arg2[%c0_3, %c0_4, %c0_5, %c0_6] : memref<1x2x4x4xf32, #tpu.memory_space<vmem>>, vector<1x1x4x4xf32>
    %3 = vector.shape_cast %2 : vector<1x1x4x4xf32> to vector<4x4xf32>
    %cst = arith.constant dense<0.000000e+00> : vector<8x4xf32>
    %4 = tpu.matmul %0, %3, %cst {dimension_numbers = #tpu.dot_dimension_numbers<[1], [0], [0], [1], [0, 0, 1, 1], [], []>} : vector<8x4xf32>, vector<4x4xf32>, vector<8x4xf32> -> vector<8x4xf32>
    %cst_7 = arith.constant dense<0.000000e+00> : vector<8x16xf32>
    %5 = tpu.matmul %4, %1, %cst_7 {dimension_numbers = #tpu.dot_dimension_numbers<[1], [0], [0], [1], [0, 0, 1, 1], [], []>} : vector<8x4xf32>, vector<4x16xf32>, vector<8x16xf32> -> vector<8x16xf32>
    %c0_8 = arith.constant 0 : index
    %c0_9 = arith.constant 0 : index
    %c0_10 = arith.constant 0 : index
    %c0_11 = arith.constant 0 : index
    %6 = vector.load %arg5[%c0_8, %c0_9, %c0_10, %c0_11] : memref<1x2x8x16xf32, #tpu.memory_space<vmem>>, vector<1x1x8x16xf32>
    %7 = vector.shape_cast %6 : vector<1x1x8x16xf32> to vector<8x16xf32>
    %8 = vector.shape_cast %5 : vector<8x16xf32> to vector<1x1x8x16xf32>
    tpu.vector_store %arg5[%c0_8, %c0_9, %c0_10, %c0_11], %8 {strides = array<i32>} : memref<1x2x8x16xf32, #tpu.memory_space<vmem>>, vector<1x1x8x16xf32>,
    %c0_12 = arith.constant 0 : index
    %c1 = arith.constant 1 : index
    %c0_13 = arith.constant 0 : index
    %c0_14 = arith.constant 0 : index
    %9 = vector.load %arg2[%c0_12, %c1, %c0_13, %c0_14] : memref<1x2x4x4xf32, #tpu.memory_space<vmem>>, vector<1x1x4x4xf32>
    %10 = vector.shape_cast %9 : vector<1x1x4x4xf32> to vector<4x4xf32>
    %cst_15 = arith.constant dense<0.000000e+00> : vector<8x4xf32>
    %11 = tpu.matmul %0, %10, %cst_15 {dimension_numbers = #tpu.dot_dimension_numbers<[1], [0], [0], [1], [0, 0, 1, 1], [], []>} : vector<8x4xf32>, vector<4x4xf32>, vector<8x4xf32> -> vector<8x4xf32>
    %cst_16 = arith.constant dense<0.000000e+00> : vector<8x16xf32>
    %12 = tpu.matmul %11, %1, %cst_16 {dimension_numbers = #tpu.dot_dimension_numbers<[1], [0], [0], [1], [0, 0, 1, 1], [], []>} : vector<8x4xf32>, vector<4x16xf32>, vector<8x16xf32> -> vector<8x16xf32>
    %c0_17 = arith.constant 0 : index
    %c1_18 = arith.constant 1 : index
    %c0_19 = arith.constant 0 : index
    %c0_20 = arith.constant 0 : index
    %13 = vector.load %arg5[%c0_17, %c1_18, %c0_19, %c0_20] : memref<1x2x8x16xf32, #tpu.memory_space<vmem>>, vector<1x1x8x16xf32>
    %14 = vector.shape_cast %13 : vector<1x1x8x16xf32> to vector<8x16xf32>
    %15 = vector.shape_cast %12 : vector<8x16xf32> to vector<1x1x8x16xf32>
    tpu.vector_store %arg5[%c0_17, %c1_18, %c0_19, %c0_20], %15 {strides = array<i32>} : memref<1x2x8x16xf32, #tpu.memory_space<vmem>>, vector<1x1x8x16xf32>,
    return
  }
  func.func @transform_0(%arg0: i32, %arg1: i32) -> (i32, i32, i32, i32) {
    %c0_i32 = arith.constant 0 : i32
    %c0_i32_0 = arith.constant 0 : i32
    %c0_i32_1 = arith.constant 0 : i32
    %c0_i32_2 = arith.constant 0 : i32
    return %arg0, %c0_i32, %c0_i32_0, %c0_i32_1 : i32, i32, i32, i32
  }
  func.func @transform_1(%arg0: i32, %arg1: i32) -> (i32, i32) {
    %c0_i32 = arith.constant 0 : i32
    %c0_i32_0 = arith.constant 0 : i32
    return %arg1, %c0_i32 : i32, i32
  }
  func.func @transform_2(%arg0: i32, %arg1: i32) -> (i32, i32) {
    %c0_i32 = arith.constant 0 : i32
    %c0_i32_0 = arith.constant 0 : i32
    %c0_i32_1 = arith.constant 0 : i32
    return %c0_i32, %c0_i32_0 : i32, i32
  }
  func.func @transform_3(%arg0: i32, %arg1: i32) -> (i32, i32, i32, i32) {
    %c0_i32 = arith.constant 0 : i32
    %c0_i32_0 = arith.constant 0 : i32
    %c0_i32_1 = arith.constant 0 : i32
    return %arg0, %c0_i32, %arg1, %c0_i32_0 : i32, i32, i32, i32
  }
}

</mosaic_0001>

<llo_original>
// kernel: deeplabv3plus_gru_v5_forward.3
$region0: #{deeplabv3plus_gru_v5_forward.3}
  #allocation0 [shape = 'u32[]', space=smem, size = 0x4, offset = 0x4, fixed_abs, tag = 'smem constant byte address 0x4 - core index']
  #allocation1 [shape = 'u32[144,128]{1,0:T(1,128)}', space=vmem, size = 0x12000, scoped, tag = 'internal scratch']
  %s0 = inlined_call_operand.vmem [shape: f32[2,2,4,4], index: 0, kind: input, shape index: {}]
  %s1 = inlined_call_operand.vmem [shape: f32[16,4], index: 1, kind: input, shape index: {}]
  %s2 = inlined_call_operand.vmem [shape: f32[4,16], index: 2, kind: input, shape index: {}]
  %s3 = inlined_call_operand.hbm [shape: f32[2,2,16,16], index: 3, kind: output, shape index: {}]
  %s4 = sld [smem:[#allocation0]]
  $region45: #{deeplabv3plus_gru_v5_forward.3} parent=0
    _
  %s6 = ssub.s32 1, %s4
  %s7 = scalar_select 0, %s6, %s4
  $region1: #{deeplabv3plus_gru_v5_forward.3} parent=0
    #allocation2 [shape = 'u8[16384]{0}', space=vmem, size = 0x4000, scoped, tag = 'output window, operand 0']
    #allocation3 [shape = 's32[2]{0}', space=sflag, size = 0x8, scoped, tag = 'scoped memory for deeplabv3plus_gru_v5_forward.3']
    %8 = vsyncpa [#allocation3], 0
    %s9 = scalar_lea.sflag [#allocation3], 1
    %10 = vsyncpa %s9, 0
    loop: start=0, step=1, limit=6
    $region2: #{deeplabv3plus_gru_v5_forward.3} parent=1 // loop_pre_header
      _
    $region3: #{deeplabv3plus_gru_v5_forward.3} parent=1 // loop_header
      %s12 = sphi 0, %s16
      %p13 = scmp.ge.s32.totalorder %s12, 6
      %s19 = sphi 0, %s31
      %s20 = sphi 0, %s27
      %s21 = sphi 0, %s19
      %s22 = sphi 0, %s20
      %s23 = sphi 0, %s21
      %s24 = sphi 0, %s22
      %s34 = sphi 0, %s36
      %s37 = sphi 0, %s34
      %s38 = sphi 0, %s37
      %s54 = sphi 0, %s38
      %s60 = sphi 0, %s62
      %s63 = sphi 0, %s60
      %s64 = sphi 0, %s63
      %s80 = sphi 0, %s64
      %s84 = sphi 0, %s84
      %s86 = sphi 0, %s84
      %s87 = sphi 0, %s86
      %s101 = sphi 0, %s87
      %s109 = sphi 0, %s111
      %s112 = sphi 0, %s109
      %s113 = sphi 0, %s112
      %s129 = sphi 0, %s113
    $region4: #{deeplabv3plus_gru_v5_forward.3} parent=1 // loop_header_branch
      %15 = sbr.rel (%p13) target = $region8
    $region5: #{deeplabv3plus_gru_v5_forward.3} parent=1 // loop_body
      %s17 = ssub.s32 %s12, 1
      %s18 = ssub.s32 %s12, 2
      %s25 = sadd.s32 1, %s20
      %p26 = scmp.ge.s32.totalorder %s25, 2
      %s27 = scalar_select %p26, 0, %s25
      %s28 = sadd.s32 1, %s19
      %s29 = scalar_select %p26, %s28, %s19
      %p30 = scmp.ge.s32.totalorder %s29, 2
      %s31 = scalar_select %p30, 0, %s29
      %s32 = ssub.s32 %s19, %s31
      %p33 = scmp.eq.s32.totalorder %s32, 0
      %s35 = sadd.s32 %s34, 1
      %s36 = scalar_select %p33, %s34, %s35
      %p39 = pneg %p33
      %p40 = scmp.eq.s32.totalorder %s12, 3
      %p41 = por %p39, %p40
      %p42 = scmp.ne.s32.totalorder %s34, %s37
      %p43 = scmp.eq.s32.totalorder %s12, 0
      %p44 = por %p42, %p43
      %p45 = scmp.ne.s32.totalorder %s34, %s37
      %p46 = scmp.eq.s32.totalorder %s17, 3
      %p47 = por %p45, %p46
      %p48 = scmp.ne.s32.totalorder %s37, %s38
      %p49 = scmp.eq.s32.totalorder %s17, 0
      %p50 = por %p48, %p49
      %p51 = scmp.ne.s32.totalorder %s37, %s38
      %p52 = scmp.eq.s32.totalorder %s18, 3
      %p53 = por %p51, %p52
      %p55 = scmp.ne.s32.totalorder %s38, %s54
      %p56 = scmp.eq.s32.totalorder %s18, 0
      %p57 = por %p55, %p56
      %s58 = ssub.s32 %s20, %s27
      %p59 = scmp.eq.s32.totalorder %s58, 0
      %s61 = sadd.s32 %s60, 1
      %s62 = scalar_select %p59, %s60, %s61
      %p65 = pneg %p59
      %p66 = scmp.eq.s32.totalorder %s12, 3
      %p67 = por %p65, %p66
      %p68 = scmp.ne.s32.totalorder %s60, %s63
      %p69 = scmp.eq.s32.totalorder %s12, 0
      %p70 = por %p68, %p69
      %p71 = scmp.ne.s32.totalorder %s60, %s63
      %p72 = scmp.eq.s32.totalorder %s17, 3
      %p73 = por %p71, %p72
      %p74 = scmp.ne.s32.totalorder %s63, %s64
      %p75 = scmp.eq.s32.totalorder %s17, 0
      %p76 = por %p74, %p75
      %p77 = scmp.ne.s32.totalorder %s63, %s64
      %p78 = scmp.eq.s32.totalorder %s18, 3
      %p79 = por %p77, %p78
      %p81 = scmp.ne.s32.totalorder %s64, %s80
      %p82 = scmp.eq.s32.totalorder %s18, 0
      %p83 = por %p81, %p82
      %s85 = sadd.s32 %s84, 1
      %p88 = scmp.eq.s32.totalorder %s12, 3
      %p89 = scmp.ne.s32.totalorder %s84, %s86
      %p90 = scmp.eq.s32.totalorder %s12, 0
      %p91 = por %p89, %p90
      %p92 = scmp.ne.s32.totalorder %s84, %s86
      %p93 = scmp.eq.s32.totalorder %s17, 3
      %p94 = por %p92, %p93
      %p95 = scmp.ne.s32.totalorder %s86, %s87
      %p96 = scmp.eq.s32.totalorder %s17, 0
      %p97 = por %p95, %p96
      %p98 = scmp.ne.s32.totalorder %s86, %s87
      %p99 = scmp.eq.s32.totalorder %s18, 3
      %p100 = por %p98, %p99
      %p102 = scmp.ne.s32.totalorder %s87, %s101
      %p103 = scmp.eq.s32.totalorder %s18, 0
      %p104 = por %p102, %p103
      %s105 = ssub.s32 %s19, %s31
      %s106 = ssub.s32 %s20, %s27
      %s107 = sor.u32 %s105, %s106
      %p108 = scmp.eq.s32.totalorder %s107, 0
      %s110 = sadd.s32 %s109, 1
      %s111 = scalar_select %p108, %s109, %s110
      %p114 = pneg %p108
      %p115 = scmp.eq.s32.totalorder %s12, 3
      %p116 = por %p114, %p115
      %p117 = scmp.ne.s32.totalorder %s109, %s112
      %p118 = scmp.eq.s32.totalorder %s12, 0
      %p119 = por %p117, %p118
      %p120 = scmp.ne.s32.totalorder %s109, %s112
      %p121 = scmp.eq.s32.totalorder %s17, 3
      %p122 = por %p120, %p121
      %p123 = scmp.ne.s32.totalorder %s112, %s113
      %p124 = scmp.eq.s32.totalorder %s17, 0
      %p125 = por %p123, %p124
      %p126 = scmp.ne.s32.totalorder %s112, %s113
      %p127 = scmp.eq.s32.totalorder %s18, 3
      %p128 = por %p126, %p127
      %p130 = scmp.ne.s32.totalorder %s113, %s129
      %p131 = scmp.eq.s32.totalorder %s18, 0
      %p132 = por %p130, %p131
      %p133 = scmp.le.s32.totalorder 1, %s12
      %p134 = scmp.lt.s32.totalorder %s12, 5
      %p135 = pnand %p133, %p134
      %p136 = pneg %p135
      // Predicated region
      $region9: #{deeplabv3plus_gru_v5_forward.3} parent=5 // pred_check
        _
      $region10: #{deeplabv3plus_gru_v5_forward.3} parent=5 // pred_check_branch
        %138 = sbr.rel (%p135) target = $region12
      $region11: #{deeplabv3plus_gru_v5_forward.3} parent=5 // pred_region
        %s139 = ssub.s32 %s12, 1
        // Predicated region
        $region13: #{deeplabv3plus_gru_v5_forward.3} parent=11 // pred_check
          %p140 = pneg %p97
        $region14: #{deeplabv3plus_gru_v5_forward.3} parent=11 // pred_check_branch
          %142 = sbr.rel (%p140) target = $region16
        $region15: #{deeplabv3plus_gru_v5_forward.3} parent=11 // pred_region
          _
        $region16: #{deeplabv3plus_gru_v5_forward.3} parent=11 // pred_fallthru
          _
      $region12: #{deeplabv3plus_gru_v5_forward.3} parent=5 // pred_fallthru
        _
      %p143 = scmp.lt.s32.totalorder %s12, 4
      // Predicated region
      $region17: #{deeplabv3plus_gru_v5_forward.3} parent=5 // pred_check
        %p144 = pneg %p143
      $region18: #{deeplabv3plus_gru_v5_forward.3} parent=5 // pred_check_branch
        %146 = sbr.rel (%p144) target = $region20
      $region19: #{deeplabv3plus_gru_v5_forward.3} parent=5 // pred_region
        // Predicated region
        $region21: #{deeplabv3plus_gru_v5_forward.3} parent=19 // pred_check
          %p147 = pneg %p44
        $region22: #{deeplabv3plus_gru_v5_forward.3} parent=19 // pred_check_branch
          %149 = sbr.rel (%p147) target = $region24
        $region23: #{deeplabv3plus_gru_v5_forward.3} parent=19 // pred_region
          %p150 = scmp.lt.s32.totalorder %s19, 1
          %s151 = scalar_select %p150, %s19, 1
          %s152 = smul.addr %s151, 2
          %s153 = smul.addr %s152, 4
          %s154 = scalar_lea.vmem %s0, %s153
        $region24: #{deeplabv3plus_gru_v5_forward.3} parent=19 // pred_fallthru
          _
        // Predicated region
        $region25: #{deeplabv3plus_gru_v5_forward.3} parent=19 // pred_check
          %p155 = pneg %p70
        $region26: #{deeplabv3plus_gru_v5_forward.3} parent=19 // pred_check_branch
          %157 = sbr.rel (%p155) target = $region28
        $region27: #{deeplabv3plus_gru_v5_forward.3} parent=19 // pred_region
          %p158 = scmp.lt.s32.totalorder %s20, 1
          %s159 = scalar_select %p158, %s20, 1
          %s160 = smul.addr %s159, 8
          %s161 = scalar_lea.vmem %s1, %s160
        $region28: #{deeplabv3plus_gru_v5_forward.3} parent=19 // pred_fallthru
          _
      $region20: #{deeplabv3plus_gru_v5_forward.3} parent=5 // pred_fallthru
        _
      %p162 = scmp.le.s32.totalorder 1, %s12
      %p163 = scmp.lt.s32.totalorder %s12, 5
      %p164 = pnand %p162, %p163
      %p165 = pneg %p164
      // Predicated region
      $region29: #{deeplabv3plus_gru_v5_forward.3} parent=5 // pred_check
        _
      $region30: #{deeplabv3plus_gru_v5_forward.3} parent=5 // pred_check_branch
        %167 = sbr.rel (%p164) target = $region32
      $region31: #{deeplabv3plus_gru_v5_forward.3} parent=5 // pred_region
        %s168 = ssub.s32 %s12, 1
        %p169 = scmp.lt.s32.totalorder %s21, 1
        %s170 = scalar_select %p169, %s21, 1
        %s171 = smul.addr %s170, 2
        %s172 = smul.addr %s171, 4
        %s173 = scalar_lea.vmem %s0, %s172
        %p174 = pneg %p50
        %p175 = pneg %p47
        %p176 = scmp.lt.s32.totalorder %s22, 1
        %s177 = scalar_select %p176, %s22, 1
        %s178 = smul.addr %s177, 8
        %s179 = scalar_lea.vmem %s1, %s178
        %p180 = pneg %p76
        %p181 = pneg %p73
        %p182 = pneg %p97
        %p183 = pneg %p94
        %p184 = pneg %p125
        %p185 = pneg %p122
        %s186 = sand.u32 %s112, 1
        %s187 = scalar_lea.sflag [#allocation3], %s186
        %s188 = sand.u32 %s112, 1
        %s189 = smul.addr %s188, 16
        %s190 = scalar_lea.vmem [#allocation2], %s189
        %p191 = scmp.lt.s32.totalorder %s21, 1
        %s192 = scalar_select %p191, %s21, 1
        %s193 = smul.addr %s192, 2
        %s194 = smul.addr %s193, 4
        %s195 = scalar_lea.vmem %s0, %s194
        %p196 = scmp.lt.s32.totalorder %s22, 1
        %s197 = scalar_select %p196, %s22, 1
        %s198 = smul.addr %s197, 8
        %s199 = scalar_lea.vmem %s1, %s198
        %v200 = vld [vmem:[%s199] sm:$0xff]
        %v201 = vld [vmem:[%s2] sm:$0xf]
        %v202 = vld [vmem:[%s195] sm:$0xf]
        %vm203 = vcmask 31744
        %v205 = vsel %vm203, %v200, 0
        %vm207 = vcmask 1043456
        %v209 = vsel %vm207, %v202, 0
        %211 = vmatprep.subr.mxu0 0.0
        %212 = vmatpush1.msra.mxu0 %v209
        %213 = vmatprep.subr.mxu0 0.0
        %214 = vmatpush1.msra.mxu0 0.0
        %215 = vmatprep.subr.mxu0 0.0
        %216 = vmatpush1.msra.mxu0 0.0
        %217 = vmatprep.subr.mxu0 0.0
        %218 = vmatpush1.msra.mxu0 0.0
        %219 = vmatprep.subr.mxu0 0.0
        %220 = vmatpush1.msra.mxu0 0.0
        %221 = vmatprep.subr.mxu0 0.0
        %222 = vmatpush1.msra.mxu0 0.0
        %223 = vmatprep.subr.mxu0 0.0
        %224 = vmatpush1.msra.mxu0 0.0
        %225 = vmatprep.subr.mxu0 0.0
        %226 = vmatpush1.msra.mxu0 0.0
        %227 = vmatprep.subr.mxu0 0.0
        %228 = vmatpush1.msra.mxu0 0.0
        %229 = vmatprep.subr.mxu0 0.0
        %230 = vmatpush1.msra.mxu0 0.0
        %231 = vmatprep.subr.mxu0 0.0
        %232 = vmatpush1.msra.mxu0 0.0
        %233 = vmatprep.subr.mxu0 0.0
        %234 = vmatpush1.msra.mxu0 0.0
        %235 = vmatprep.subr.mxu0 0.0
        %236 = vmatpush1.msra.mxu0 0.0
        %237 = vmatprep.subr.mxu0 0.0
        %238 = vmatpush1.msra.mxu0 0.0
        %239 = vmatprep.subr.mxu0 0.0
        %240 = vmatpush1.msra.mxu0 0.0
        %241 = vmatprep.subr.mxu0 0.0
        %242 = vmatpush1.msra.mxu0 0.0
        %243 = vmatprep.subr.mxu0 0.0
        %244 = vmatpush1.msra.mxu0 0.0
        %245 = vmatprep.subr.mxu0 0.0
        %246 = vmatpush1.msra.mxu0 0.0
        %247 = vmatprep.subr.mxu0 0.0
        %248 = vmatpush1.msra.mxu0 0.0
        %249 = vmatprep.subr.mxu0 0.0
        %250 = vmatpush1.msra.mxu0 0.0
        %251 = vmatprep.subr.mxu0 0.0
        %252 = vmatpush1.msra.mxu0 0.0
        %253 = vmatprep.subr.mxu0 0.0
        %254 = vmatpush1.msra.mxu0 0.0
        %255 = vmatprep.subr.mxu0 0.0
        %256 = vmatpush1.msra.mxu0 0.0
        %257 = vmatprep.subr.mxu0 0.0
        %258 = vmatpush1.msra.mxu0 0.0
        %259 = vmatprep.subr.mxu0 0.0
        %260 = vmatpush1.msra.mxu0 0.0
        %261 = vmatprep.subr.mxu0 0.0
        %262 = vmatpush1.msra.mxu0 0.0
        %263 = vmatprep.subr.mxu0 0.0
        %264 = vmatpush1.msra.mxu0 0.0
        %265 = vmatprep.subr.mxu0 0.0
        %266 = vmatpush1.msra.mxu0 0.0
        %267 = vmatprep.subr.mxu0 0.0
        %268 = vmatpush1.msra.mxu0 0.0
        %269 = vmatprep.subr.mxu0 0.0
        %270 = vmatpush1.msra.mxu0 0.0
        %271 = vmatprep.subr.mxu0 0.0
        %272 = vmatpush1.msra.mxu0 0.0
        %273 = vmatprep.subr.mxu0 0.0
        %274 = vmatpush1.msra.mxu0 0.0
        %275 = vmatprep.mubr.f32.mxu0 0.0
        %276 = vmatmul.mubr.f32.gmra.mrb[0].mxu0 %v205
        %v277 = vpop.f32.mrb[0].mxu0
        %v278 = vadd.f32 0.0, %v277
        %v279 = vpop.f32.mrb[0].mxu0
        %280 = vdwg.mxu0
        %v282 = vsel %vm203, %v278, 0
        %v285 = vsel %vm207, %v201, 0
        %287 = vmatprep.subr.mxu0 0.0
        %288 = vmatpush1.msra.mxu0 %v285
        %289 = vmatprep.subr.mxu0 0.0
        %290 = vmatpush1.msra.mxu0 0.0
        %291 = vmatprep.subr.mxu0 0.0
        %292 = vmatpush1.msra.mxu0 0.0
        %293 = vmatprep.subr.mxu0 0.0
        %294 = vmatpush1.msra.mxu0 0.0
        %295 = vmatprep.subr.mxu0 0.0
        %296 = vmatpush1.msra.mxu0 0.0
        %297 = vmatprep.subr.mxu0 0.0
        %298 = vmatpush1.msra.mxu0 0.0
        %299 = vmatprep.subr.mxu0 0.0
        %300 = vmatpush1.msra.mxu0 0.0
        %301 = vmatprep.subr.mxu0 0.0
        %302 = vmatpush1.msra.mxu0 0.0
        %303 = vmatprep.subr.mxu0 0.0
        %304 = vmatpush1.msra.mxu0 0.0
        %305 = vmatprep.subr.mxu0 0.0
        %306 = vmatpush1.msra.mxu0 0.0
        %307 = vmatprep.subr.mxu0 0.0
        %308 = vmatpush1.msra.mxu0 0.0
        %309 = vmatprep.subr.mxu0 0.0
        %310 = vmatpush1.msra.mxu0 0.0
        %311 = vmatprep.subr.mxu0 0.0
        %312 = vmatpush1.msra.mxu0 0.0
        %313 = vmatprep.subr.mxu0 0.0
        %314 = vmatpush1.msra.mxu0 0.0
        %315 = vmatprep.subr.mxu0 0.0
        %316 = vmatpush1.msra.mxu0 0.0
        %317 = vmatprep.subr.mxu0 0.0
        %318 = vmatpush1.msra.mxu0 0.0
        %319 = vmatprep.subr.mxu0 0.0
        %320 = vmatpush1.msra.mxu0 0.0
        %321 = vmatprep.subr.mxu0 0.0
        %322 = vmatpush1.msra.mxu0 0.0
        %323 = vmatprep.subr.mxu0 0.0
        %324 = vmatpush1.msra.mxu0 0.0
        %325 = vmatprep.subr.mxu0 0.0
        %326 = vmatpush1.msra.mxu0 0.0
        %327 = vmatprep.subr.mxu0 0.0
        %328 = vmatpush1.msra.mxu0 0.0
        %329 = vmatprep.subr.mxu0 0.0
        %330 = vmatpush1.msra.mxu0 0.0
        %331 = vmatprep.subr.mxu0 0.0
        %332 = vmatpush1.msra.mxu0 0.0
        %333 = vmatprep.subr.mxu0 0.0
        %334 = vmatpush1.msra.mxu0 0.0
        %335 = vmatprep.subr.mxu0 0.0
        %336 = vmatpush1.msra.mxu0 0.0
        %337 = vmatprep.subr.mxu0 0.0
        %338 = vmatpush1.msra.mxu0 0.0
        %339 = vmatprep.subr.mxu0 0.0
        %340 = vmatpush1.msra.mxu0 0.0
        %341 = vmatprep.subr.mxu0 0.0
        %342 = vmatpush1.msra.mxu0 0.0
        %343 = vmatprep.subr.mxu0 0.0
        %344 = vmatpush1.msra.mxu0 0.0
        %345 = vmatprep.subr.mxu0 0.0
        %346 = vmatpush1.msra.mxu0 0.0
        %347 = vmatprep.subr.mxu0 0.0
        %348 = vmatpush1.msra.mxu0 0.0
        %349 = vmatprep.subr.mxu0 0.0
        %350 = vmatpush1.msra.mxu0 0.0
        %351 = vmatprep.mubr.f32.mxu0 0.0
        %352 = vmatmul.mubr.f32.gmra.mrb[0].mxu0 %v282
        %v353 = vpop.f32.mrb[0].mxu0
        %v354 = vadd.f32 0.0, %v353
        %v355 = vpop.f32.mrb[0].mxu0
        %356 = vdwg.mxu0
        %vm357 = vcmask 130048
        %358 = vst.msk [vmem:[%s190] sm:$0xff] %vm357, %v354
        %s359 = scalar_lea.vmem %s195, 4
        %v360 = vld [vmem:[%s359] sm:$0xf]
        %v362 = vsel %vm207, %v360, 0
        %364 = vmatprep.subr.mxu0 0.0
        %365 = vmatpush1.msra.mxu0 %v362
        %366 = vmatprep.subr.mxu0 0.0
        %367 = vmatpush1.msra.mxu0 0.0
        %368 = vmatprep.subr.mxu0 0.0
        %369 = vmatpush1.msra.mxu0 0.0
        %370 = vmatprep.subr.mxu0 0.0
        %371 = vmatpush1.msra.mxu0 0.0
        %372 = vmatprep.subr.mxu0 0.0
        %373 = vmatpush1.msra.mxu0 0.0
        %374 = vmatprep.subr.mxu0 0.0
        %375 = vmatpush1.msra.mxu0 0.0
        %376 = vmatprep.subr.mxu0 0.0
        %377 = vmatpush1.msra.mxu0 0.0
        %378 = vmatprep.subr.mxu0 0.0
        %379 = vmatpush1.msra.mxu0 0.0
        %380 = vmatprep.subr.mxu0 0.0
        %381 = vmatpush1.msra.mxu0 0.0
        %382 = vmatprep.subr.mxu0 0.0
        %383 = vmatpush1.msra.mxu0 0.0
        %384 = vmatprep.subr.mxu0 0.0
        %385 = vmatpush1.msra.mxu0 0.0
        %386 = vmatprep.subr.mxu0 0.0
        %387 = vmatpush1.msra.mxu0 0.0
        %388 = vmatprep.subr.mxu0 0.0
        %389 = vmatpush1.msra.mxu0 0.0
        %390 = vmatprep.subr.mxu0 0.0
        %391 = vmatpush1.msra.mxu0 0.0
        %392 = vmatprep.subr.mxu0 0.0
        %393 = vmatpush1.msra.mxu0 0.0
        %394 = vmatprep.subr.mxu0 0.0
        %395 = vmatpush1.msra.mxu0 0.0
        %396 = vmatprep.subr.mxu0 0.0
        %397 = vmatpush1.msra.mxu0 0.0
        %398 = vmatprep.subr.mxu0 0.0
        %399 = vmatpush1.msra.mxu0 0.0
        %400 = vmatprep.subr.mxu0 0.0
        %401 = vmatpush1.msra.mxu0 0.0
        %402 = vmatprep.subr.mxu0 0.0
        %403 = vmatpush1.msra.mxu0 0.0
        %404 = vmatprep.subr.mxu0 0.0
        %405 = vmatpush1.msra.mxu0 0.0
        %406 = vmatprep.subr.mxu0 0.0
        %407 = vmatpush1.msra.mxu0 0.0
        %408 = vmatprep.subr.mxu0 0.0
        %409 = vmatpush1.msra.mxu0 0.0
        %410 = vmatprep.subr.mxu0 0.0
        %411 = vmatpush1.msra.mxu0 0.0
        %412 = vmatprep.subr.mxu0 0.0
        %413 = vmatpush1.msra.mxu0 0.0
        %414 = vmatprep.subr.mxu0 0.0
        %415 = vmatpush1.msra.mxu0 0.0
        %416 = vmatprep.subr.mxu0 0.0
        %417 = vmatpush1.msra.mxu0 0.0
        %418 = vmatprep.subr.mxu0 0.0
        %419 = vmatpush1.msra.mxu0 0.0
        %420 = vmatprep.subr.mxu0 0.0
        %421 = vmatpush1.msra.mxu0 0.0
        %422 = vmatprep.subr.mxu0 0.0
        %423 = vmatpush1.msra.mxu0 0.0
        %424 = vmatprep.subr.mxu0 0.0
        %425 = vmatpush1.msra.mxu0 0.0
        %426 = vmatprep.subr.mxu0 0.0
        %427 = vmatpush1.msra.mxu0 0.0
        %428 = vmatprep.mubr.f32.mxu0 0.0
        %429 = vmatmul.mubr.f32.gmra.mrb[0].mxu0 %v205
        %v430 = vpop.f32.mrb[0].mxu0
        %v431 = vadd.f32 0.0, %v430
        %v432 = vpop.f32.mrb[0].mxu0
        %433 = vdwg.mxu0
        %v435 = vsel %vm203, %v431, 0
        %437 = vmatprep.subr.mxu0 0.0
        %438 = vmatpush1.msra.mxu0 %v285
        %439 = vmatprep.subr.mxu0 0.0
        %440 = vmatpush1.msra.mxu0 0.0
        %441 = vmatprep.subr.mxu0 0.0
        %442 = vmatpush1.msra.mxu0 0.0
        %443 = vmatprep.subr.mxu0 0.0
        %444 = vmatpush1.msra.mxu0 0.0
        %445 = vmatprep.subr.mxu0 0.0
        %446 = vmatpush1.msra.mxu0 0.0
        %447 = vmatprep.subr.mxu0 0.0
        %448 = vmatpush1.msra.mxu0 0.0
        %449 = vmatprep.subr.mxu0 0.0
        %450 = vmatpush1.msra.mxu0 0.0
        %451 = vmatprep.subr.mxu0 0.0
        %452 = vmatpush1.msra.mxu0 0.0
        %453 = vmatprep.subr.mxu0 0.0
        %454 = vmatpush1.msra.mxu0 0.0
        %455 = vmatprep.subr.mxu0 0.0
        %456 = vmatpush1.msra.mxu0 0.0
        %457 = vmatprep.subr.mxu0 0.0
        %458 = vmatpush1.msra.mxu0 0.0
        %459 = vmatprep.subr.mxu0 0.0
        %460 = vmatpush1.msra.mxu0 0.0
        %461 = vmatprep.subr.mxu0 0.0
        %462 = vmatpush1.msra.mxu0 0.0
        %463 = vmatprep.subr.mxu0 0.0
        %464 = vmatpush1.msra.mxu0 0.0
        %465 = vmatprep.subr.mxu0 0.0
        %466 = vmatpush1.msra.mxu0 0.0
        %467 = vmatprep.subr.mxu0 0.0
        %468 = vmatpush1.msra.mxu0 0.0
        %469 = vmatprep.subr.mxu0 0.0
        %470 = vmatpush1.msra.mxu0 0.0
        %471 = vmatprep.subr.mxu0 0.0
        %472 = vmatpush1.msra.mxu0 0.0
        %473 = vmatprep.subr.mxu0 0.0
        %474 = vmatpush1.msra.mxu0 0.0
        %475 = vmatprep.subr.mxu0 0.0
        %476 = vmatpush1.msra.mxu0 0.0
        %477 = vmatprep.subr.mxu0 0.0
        %478 = vmatpush1.msra.mxu0 0.0
        %479 = vmatprep.subr.mxu0 0.0
        %480 = vmatpush1.msra.mxu0 0.0
        %481 = vmatprep.subr.mxu0 0.0
        %482 = vmatpush1.msra.mxu0 0.0
        %483 = vmatprep.subr.mxu0 0.0
        %484 = vmatpush1.msra.mxu0 0.0
        %485 = vmatprep.subr.mxu0 0.0
        %486 = vmatpush1.msra.mxu0 0.0
        %487 = vmatprep.subr.mxu0 0.0
        %488 = vmatpush1.msra.mxu0 0.0
        %489 = vmatprep.subr.mxu0 0.0
        %490 = vmatpush1.msra.mxu0 0.0
        %491 = vmatprep.subr.mxu0 0.0
        %492 = vmatpush1.msra.mxu0 0.0
        %493 = vmatprep.subr.mxu0 0.0
        %494 = vmatpush1.msra.mxu0 0.0
        %495 = vmatprep.subr.mxu0 0.0
        %496 = vmatpush1.msra.mxu0 0.0
        %497 = vmatprep.subr.mxu0 0.0
        %498 = vmatpush1.msra.mxu0 0.0
        %499 = vmatprep.subr.mxu0 0.0
        %500 = vmatpush1.msra.mxu0 0.0
        %501 = vmatprep.mubr.f32.mxu0 0.0
        %502 = vmatmul.mubr.f32.gmra.mrb[0].mxu0 %v435
        %v503 = vpop.f32.mrb[0].mxu0
        %v504 = vadd.f32 0.0, %v503
        %v505 = vpop.f32.mrb[0].mxu0
        %506 = vdwg.mxu0
        %s507 = scalar_lea.vmem %s190, 8 [#allocation2]
        %508 = vst.msk [vmem:[%s507] sm:$0xff] %vm357, %v504
        %s509 = sand.u32 %s112, 1
        %s510 = scalar_lea.sflag [#allocation3], %s509
        %s511 = sand.u32 %s112, 1
        %s512 = smul.addr %s511, 16
        %s513 = scalar_lea.vmem [#allocation2], %s512
        // Predicated region
        $region33: #{deeplabv3plus_gru_v5_forward.3} parent=31 // pred_check
          %p514 = pneg %p122
        $region34: #{deeplabv3plus_gru_v5_forward.3} parent=31 // pred_check_branch
          %516 = sbr.rel (%p514) target = $region36
        $region35: #{deeplabv3plus_gru_v5_forward.3} parent=31 // pred_region
          %s518 = ssub.s32 256, 256
          %519 = vsyncadd %s510, %s518
          %s520 = smul.addr %s21, 4
          %s521 = sadd.s32 %s22, %s520
          %s522 = smul.addr %s521, 128
          %s523 = scalar_lea.hbm %s3, %s522
          %s524 = sshll.u32 %s513, 4
          %s525 = int_to_ptr.vmem [resolvable:$true] %s524
          %530 = dma.vmem_to_hbm [thread:$0]  %s525, 256, %s523, %s510, 128, 256, 8
        $region36: #{deeplabv3plus_gru_v5_forward.3} parent=31 // pred_fallthru
          _
      $region32: #{deeplabv3plus_gru_v5_forward.3} parent=5 // pred_fallthru
        _
      %p531 = scmp.le.s32.totalorder 2, %s12
      // Predicated region
      $region37: #{deeplabv3plus_gru_v5_forward.3} parent=5 // pred_check
        %p532 = pneg %p531
      $region38: #{deeplabv3plus_gru_v5_forward.3} parent=5 // pred_check_branch
        %534 = sbr.rel (%p532) target = $region40
      $region39: #{deeplabv3plus_gru_v5_forward.3} parent=5 // pred_region
        %s535 = ssub.s32 %s12, 2
        // Predicated region
        $region41: #{deeplabv3plus_gru_v5_forward.3} parent=39 // pred_check
          %p536 = pneg %p128
        $region42: #{deeplabv3plus_gru_v5_forward.3} parent=39 // pred_check_branch
          %538 = sbr.rel (%p536) target = $region44
        $region43: #{deeplabv3plus_gru_v5_forward.3} parent=39 // pred_region
          %s539 = sand.u32 %s113, 1
          %s540 = scalar_lea.sflag [#allocation3], %s539
          %s541 = sand.u32 %s113, 1
          %s542 = smul.addr %s541, 16
          %s543 = scalar_lea.vmem [#allocation2], %s542
          %544 = dma.done %s540, 256
        $region44: #{deeplabv3plus_gru_v5_forward.3} parent=39 // pred_fallthru
          _
      $region40: #{deeplabv3plus_gru_v5_forward.3} parent=5 // pred_fallthru
        _
    $region6: #{deeplabv3plus_gru_v5_forward.3} parent=1 // loop_footer
      %s16 = sadd.s32 1, %s12
    $region7: #{deeplabv3plus_gru_v5_forward.3} parent=1 // loop_footer_branch
      %11 = sbr.rel target = $region3
    $region8: #{deeplabv3plus_gru_v5_forward.3} parent=1 // loop_exit
      _
    %545 = vsyncpa [#allocation3], 1
    %s546 = scalar_lea.sflag [#allocation3], 1
    %547 = vsyncpa %s546, 1

// kernel: deeplabv3plus_gru_v5_forward.2
$region0: #{deeplabv3plus_gru_v5_forward.2}
  #allocation0 [shape = 'u32[]', space=smem, size = 0x4, offset = 0x4, fixed_abs, tag = 'smem constant byte address 0x4 - core index']
  #allocation1 [shape = 'u32[144,128]{1,0:T(1,128)}', space=vmem, size = 0x12000, scoped, tag = 'internal scratch']
  %s0 = inlined_call_operand.vmem [shape: f32[2,48,16], index: 0, kind: input, shape index: {}]
  %s1 = inlined_call_operand.vmem [shape: f32[9,16,16], index: 1, kind: input, shape index: {}]
  %s2 = inlined_call_operand.vmem [shape: f32[16,48], index: 2, kind: input, shape index: {}]
  %s3 = inlined_call_operand.vmem [shape: f32[16,1], index: 3, kind: input, shape index: {}]
  %s4 = inlined_call_operand.vmem [shape: f32[8,48], index: 4, kind: input, shape index: {}]
  %s5 = inlined_call_operand.vmem [shape: f32[8,1], index: 5, kind: input, shape index: {}]
  %s6 = inlined_call_operand.vmem [shape: f32[16,16], index: 6, kind: input, shape index: {}]
  %s7 = inlined_call_operand.vmem [shape: f32[16,1], index: 7, kind: input, shape index: {}]
  %s8 = inlined_call_operand.vmem [shape: f32[8,16], index: 8, kind: input, shape index: {}]
  %s9 = inlined_call_operand.vmem [shape: f32[8,8], index: 9, kind: input, shape index: {}]
  %s10 = inlined_call_operand.vmem [shape: f32[8,1], index: 10, kind: input, shape index: {}]
  %s11 = inlined_call_operand.vmem [shape: f32[9,16,8], index: 11, kind: input, shape index: {}]
  %s12 = inlined_call_operand.vmem [shape: f32[16,1], index: 12, kind: input, shape index: {}]
  %s13 = inlined_call_operand.vmem [shape: f32[9,8,8], index: 13, kind: input, shape index: {}]
  %s14 = inlined_call_operand.vmem [shape: f32[8,1], index: 14, kind: input, shape index: {}]
  %s15 = inlined_call_operand.vmem [shape: f32[2,8], index: 15, kind: input, shape index: {}]
  %s16 = inlined_call_operand.vmem [shape: f32[2,1], index: 16, kind: input, shape index: {}]
  %s17 = inlined_call_operand.vmem [shape: f32[2,2,16], index: 17, kind: output, shape index: {}]
  %s18 = sld [smem:[#allocation0]]
  $region101: #{deeplabv3plus_gru_v5_forward.2} parent=0
    _
  %s20 = ssub.s32 1, %s18
  %s21 = scalar_select 0, %s20, %s18
  loop: start=0, step=1, limit=4
  $region2: #{deeplabv3plus_gru_v5_forward.2} parent=0 // loop_pre_header
    _
  $region3: #{deeplabv3plus_gru_v5_forward.2} parent=0 // loop_header
    %s23 = sphi 0, %s27
    %p24 = scmp.ge.s32.totalorder %s23, 4
    %s33 = sphi 0, %s35
    %s36 = sphi 0, %s33
    %s37 = sphi 0, %s36
    %s53 = sphi 0, %s37
    %s57 = sphi 0, %s57
    %s59 = sphi 0, %s57
    %s60 = sphi 0, %s59
    %s74 = sphi 0, %s60
    %s78 = sphi 0, %s78
    %s80 = sphi 0, %s78
    %s81 = sphi 0, %s80
    %s95 = sphi 0, %s81
    %s99 = sphi 0, %s99
    %s101 = sphi 0, %s99
    %s102 = sphi 0, %s101
    %s116 = sphi 0, %s102
    %s120 = sphi 0, %s120
    %s122 = sphi 0, %s120
    %s123 = sphi 0, %s122
    %s137 = sphi 0, %s123
    %s141 = sphi 0, %s141
    %s143 = sphi 0, %s141
    %s144 = sphi 0, %s143
    %s158 = sphi 0, %s144
    %s162 = sphi 0, %s162
    %s164 = sphi 0, %s162
    %s165 = sphi 0, %s164
    %s179 = sphi 0, %s165
    %s183 = sphi 0, %s183
    %s185 = sphi 0, %s183
    %s186 = sphi 0, %s185
    %s200 = sphi 0, %s186
    %s204 = sphi 0, %s204
    %s206 = sphi 0, %s204
    %s207 = sphi 0, %s206
    %s221 = sphi 0, %s207
    %s225 = sphi 0, %s225
    %s227 = sphi 0, %s225
    %s228 = sphi 0, %s227
    %s242 = sphi 0, %s228
    %s246 = sphi 0, %s246
    %s248 = sphi 0, %s246
    %s249 = sphi 0, %s248
    %s263 = sphi 0, %s249
    %s267 = sphi 0, %s267
    %s269 = sphi 0, %s267
    %s270 = sphi 0, %s269
    %s284 = sphi 0, %s270
    %s288 = sphi 0, %s288
    %s290 = sphi 0, %s288
    %s291 = sphi 0, %s290
    %s305 = sphi 0, %s291
    %s309 = sphi 0, %s309
    %s311 = sphi 0, %s309
    %s312 = sphi 0, %s311
    %s326 = sphi 0, %s312
    %s330 = sphi 0, %s330
    %s332 = sphi 0, %s330
    %s333 = sphi 0, %s332
    %s347 = sphi 0, %s333
    %s351 = sphi 0, %s351
    %s353 = sphi 0, %s351
    %s354 = sphi 0, %s353
    %s368 = sphi 0, %s354
    %s372 = sphi 0, %s372
    %s374 = sphi 0, %s372
    %s375 = sphi 0, %s374
    %s389 = sphi 0, %s375
    %s395 = sphi 0, %s397
    %s398 = sphi 0, %s395
    %s399 = sphi 0, %s398
    %s415 = sphi 0, %s399
  $region4: #{deeplabv3plus_gru_v5_forward.2} parent=0 // loop_header_branch
    %26 = sbr.rel (%p24) target = $region8
  $region5: #{deeplabv3plus_gru_v5_forward.2} parent=0 // loop_body
    %s28 = ssub.s32 %s23, 1
    %s29 = ssub.s32 %s23, 2
    %s30 = sadd.s32 %s23, 1
    %s31 = ssub.s32 %s23, %s30
    %p32 = scmp.eq.s32.totalorder %s31, 0
    %s34 = sadd.s32 %s33, 1
    %s35 = scalar_select %p32, %s33, %s34
    %p38 = pneg %p32
    %p39 = scmp.eq.s32.totalorder %s23, 1
    %p40 = por %p38, %p39
    %p41 = scmp.ne.s32.totalorder %s33, %s36
    %p42 = scmp.eq.s32.totalorder %s23, 0
    %p43 = por %p41, %p42
    %p44 = scmp.ne.s32.totalorder %s33, %s36
    %p45 = scmp.eq.s32.totalorder %s28, 1
    %p46 = por %p44, %p45
    %p47 = scmp.ne.s32.totalorder %s36, %s37
    %p48 = scmp.eq.s32.totalorder %s28, 0
    %p49 = por %p47, %p48
    %p50 = scmp.ne.s32.totalorder %s36, %s37
    %p51 = scmp.eq.s32.totalorder %s29, 1
    %p52 = por %p50, %p51
    %p54 = scmp.ne.s32.totalorder %s37, %s53
    %p55 = scmp.eq.s32.totalorder %s29, 0
    %p56 = por %p54, %p55
    %s58 = sadd.s32 %s57, 1
    %p61 = scmp.eq.s32.totalorder %s23, 1
    %p62 = scmp.ne.s32.totalorder %s57, %s59
    %p63 = scmp.eq.s32.totalorder %s23, 0
    %p64 = por %p62, %p63
    %p65 = scmp.ne.s32.totalorder %s57, %s59
    %p66 = scmp.eq.s32.totalorder %s28, 1
    %p67 = por %p65, %p66
    %p68 = scmp.ne.s32.totalorder %s59, %s60
    %p69 = scmp.eq.s32.totalorder %s28, 0
    %p70 = por %p68, %p69
    %p71 = scmp.ne.s32.totalorder %s59, %s60
    %p72 = scmp.eq.s32.totalorder %s29, 1
    %p73 = por %p71, %p72
    %p75 = scmp.ne.s32.totalorder %s60, %s74
    %p76 = scmp.eq.s32.totalorder %s29, 0
    %p77 = por %p75, %p76
    %s79 = sadd.s32 %s78, 1
    %p82 = scmp.eq.s32.totalorder %s23, 1
    %p83 = scmp.ne.s32.totalorder %s78, %s80
    %p84 = scmp.eq.s32.totalorder %s23, 0
    %p85 = por %p83, %p84
    %p86 = scmp.ne.s32.totalorder %s78, %s80
    %p87 = scmp.eq.s32.totalorder %s28, 1
    %p88 = por %p86, %p87
    %p89 = scmp.ne.s32.totalorder %s80, %s81
    %p90 = scmp.eq.s32.totalorder %s28, 0
    %p91 = por %p89, %p90
    %p92 = scmp.ne.s32.totalorder %s80, %s81
    %p93 = scmp.eq.s32.totalorder %s29, 1
    %p94 = por %p92, %p93
    %p96 = scmp.ne.s32.totalorder %s81, %s95
    %p97 = scmp.eq.s32.totalorder %s29, 0
    %p98 = por %p96, %p97
    %s100 = sadd.s32 %s99, 1
    %p103 = scmp.eq.s32.totalorder %s23, 1
    %p104 = scmp.ne.s32.totalorder %s99, %s101
    %p105 = scmp.eq.s32.totalorder %s23, 0
    %p106 = por %p104, %p105
    %p107 = scmp.ne.s32.totalorder %s99, %s101
    %p108 = scmp.eq.s32.totalorder %s28, 1
    %p109 = por %p107, %p108
    %p110 = scmp.ne.s32.totalorder %s101, %s102
    %p111 = scmp.eq.s32.totalorder %s28, 0
    %p112 = por %p110, %p111
    %p113 = scmp.ne.s32.totalorder %s101, %s102
    %p114 = scmp.eq.s32.totalorder %s29, 1
    %p115 = por %p113, %p114
    %p117 = scmp.ne.s32.totalorder %s102, %s116
    %p118 = scmp.eq.s32.totalorder %s29, 0
    %p119 = por %p117, %p118
    %s121 = sadd.s32 %s120, 1
    %p124 = scmp.eq.s32.totalorder %s23, 1
    %p125 = scmp.ne.s32.totalorder %s120, %s122
    %p126 = scmp.eq.s32.totalorder %s23, 0
    %p127 = por %p125, %p126
    %p128 = scmp.ne.s32.totalorder %s120, %s122
    %p129 = scmp.eq.s32.totalorder %s28, 1
    %p130 = por %p128, %p129
    %p131 = scmp.ne.s32.totalorder %s122, %s123
    %p132 = scmp.eq.s32.totalorder %s28, 0
    %p133 = por %p131, %p132
    %p134 = scmp.ne.s32.totalorder %s122, %s123
    %p135 = scmp.eq.s32.totalorder %s29, 1
    %p136 = por %p134, %p135
    %p138 = scmp.ne.s32.totalorder %s123, %s137
    %p139 = scmp.eq.s32.totalorder %s29, 0
    %p140 = por %p138, %p139
    %s142 = sadd.s32 %s141, 1
    %p145 = scmp.eq.s32.totalorder %s23, 1
    %p146 = scmp.ne.s32.totalorder %s141, %s143
    %p147 = scmp.eq.s32.totalorder %s23, 0
    %p148 = por %p146, %p147
    %p149 = scmp.ne.s32.totalorder %s141, %s143
    %p150 = scmp.eq.s32.totalorder %s28, 1
    %p151 = por %p149, %p150
    %p152 = scmp.ne.s32.totalorder %s143, %s144
    %p153 = scmp.eq.s32.totalorder %s28, 0
    %p154 = por %p152, %p153
    %p155 = scmp.ne.s32.totalorder %s143, %s144
    %p156 = scmp.eq.s32.totalorder %s29, 1
    %p157 = por %p155, %p156
    %p159 = scmp.ne.s32.totalorder %s144, %s158
    %p160 = scmp.eq.s32.totalorder %s29, 0
    %p161 = por %p159, %p160
    %s163 = sadd.s32 %s162, 1
    %p166 = scmp.eq.s32.totalorder %s23, 1
    %p167 = scmp.ne.s32.totalorder %s162, %s164
    %p168 = scmp.eq.s32.totalorder %s23, 0
    %p169 = por %p167, %p168
    %p170 = scmp.ne.s32.totalorder %s162, %s164
    %p171 = scmp.eq.s32.totalorder %s28, 1
    %p172 = por %p170, %p171
    %p173 = scmp.ne.s32.totalorder %s164, %s165
    %p174 = scmp.eq.s32.totalorder %s28, 0
    %p175 = por %p173, %p174
    %p176 = scmp.ne.s32.totalorder %s164, %s165
    %p177 = scmp.eq.s32.totalorder %s29, 1
    %p178 = por %p176, %p177
    %p180 = scmp.ne.s32.totalorder %s165, %s179
    %p181 = scmp.eq.s32.totalorder %s29, 0
    %p182 = por %p180, %p181
    %s184 = sadd.s32 %s183, 1
    %p187 = scmp.eq.s32.totalorder %s23, 1
    %p188 = scmp.ne.s32.totalorder %s183, %s185
    %p189 = scmp.eq.s32.totalorder %s23, 0
    %p190 = por %p188, %p189
    %p191 = scmp.ne.s32.totalorder %s183, %s185
    %p192 = scmp.eq.s32.totalorder %s28, 1
    %p193 = por %p191, %p192
    %p194 = scmp.ne.s32.totalorder %s185, %s186
    %p195 = scmp.eq.s32.totalorder %s28, 0
    %p196 = por %p194, %p195
    %p197 = scmp.ne.s32.totalorder %s185, %s186
    %p198 = scmp.eq.s32.totalorder %s29, 1
    %p199 = por %p197, %p198
    %p201 = scmp.ne.s32.totalorder %s186, %s200
    %p202 = scmp.eq.s32.totalorder %s29, 0
    %p203 = por %p201, %p202
    %s205 = sadd.s32 %s204, 1
    %p208 = scmp.eq.s32.totalorder %s23, 1
    %p209 = scmp.ne.s32.totalorder %s204, %s206
    %p210 = scmp.eq.s32.totalorder %s23, 0
    %p211 = por %p209, %p210
    %p212 = scmp.ne.s32.totalorder %s204, %s206
    %p213 = scmp.eq.s32.totalorder %s28, 1
    %p214 = por %p212, %p213
    %p215 = scmp.ne.s32.totalorder %s206, %s207
    %p216 = scmp.eq.s32.totalorder %s28, 0
    %p217 = por %p215, %p216
    %p218 = scmp.ne.s32.totalorder %s206, %s207
    %p219 = scmp.eq.s32.totalorder %s29, 1
    %p220 = por %p218, %p219
    %p222 = scmp.ne.s32.totalorder %s207, %s221
    %p223 = scmp.eq.s32.totalorder %s29, 0
    %p224 = por %p222, %p223
    %s226 = sadd.s32 %s225, 1
    %p229 = scmp.eq.s32.totalorder %s23, 1
    %p230 = scmp.ne.s32.totalorder %s225, %s227
    %p231 = scmp.eq.s32.totalorder %s23, 0
    %p232 = por %p230, %p231
    %p233 = scmp.ne.s32.totalorder %s225, %s227
    %p234 = scmp.eq.s32.totalorder %s28, 1
    %p235 = por %p233, %p234
    %p236 = scmp.ne.s32.totalorder %s227, %s228
    %p237 = scmp.eq.s32.totalorder %s28, 0
    %p238 = por %p236, %p237
    %p239 = scmp.ne.s32.totalorder %s227, %s228
    %p240 = scmp.eq.s32.totalorder %s29, 1
    %p241 = por %p239, %p240
    %p243 = scmp.ne.s32.totalorder %s228, %s242
    %p244 = scmp.eq.s32.totalorder %s29, 0
    %p245 = por %p243, %p244
    %s247 = sadd.s32 %s246, 1
    %p250 = scmp.eq.s32.totalorder %s23, 1
    %p251 = scmp.ne.s32.totalorder %s246, %s248
    %p252 = scmp.eq.s32.totalorder %s23, 0
    %p253 = por %p251, %p252
    %p254 = scmp.ne.s32.totalorder %s246, %s248
    %p255 = scmp.eq.s32.totalorder %s28, 1
    %p256 = por %p254, %p255
    %p257 = scmp.ne.s32.totalorder %s248, %s249
    %p258 = scmp.eq.s32.totalorder %s28, 0
    %p259 = por %p257, %p258
    %p260 = scmp.ne.s32.totalorder %s248, %s249
    %p261 = scmp.eq.s32.totalorder %s29, 1
    %p262 = por %p260, %p261
    %p264 = scmp.ne.s32.totalorder %s249, %s263
    %p265 = scmp.eq.s32.totalorder %s29, 0
    %p266 = por %p264, %p265
    %s268 = sadd.s32 %s267, 1
    %p271 = scmp.eq.s32.totalorder %s23, 1
    %p272 = scmp.ne.s32.totalorder %s267, %s269
    %p273 = scmp.eq.s32.totalorder %s23, 0
    %p274 = por %p272, %p273
    %p275 = scmp.ne.s32.totalorder %s267, %s269
    %p276 = scmp.eq.s32.totalorder %s28, 1
    %p277 = por %p275, %p276
    %p278 = scmp.ne.s32.totalorder %s269, %s270
    %p279 = scmp.eq.s32.totalorder %s28, 0
    %p280 = por %p278, %p279
    %p281 = scmp.ne.s32.totalorder %s269, %s270
    %p282 = scmp.eq.s32.totalorder %s29, 1
    %p283 = por %p281, %p282
    %p285 = scmp.ne.s32.totalorder %s270, %s284
    %p286 = scmp.eq.s32.totalorder %s29, 0
    %p287 = por %p285, %p286
    %s289 = sadd.s32 %s288, 1
    %p292 = scmp.eq.s32.totalorder %s23, 1
    %p293 = scmp.ne.s32.totalorder %s288, %s290
    %p294 = scmp.eq.s32.totalorder %s23, 0
    %p295 = por %p293, %p294
    %p296 = scmp.ne.s32.totalorder %s288, %s290
    %p297 = scmp.eq.s32.totalorder %s28, 1
    %p298 = por %p296, %p297
    %p299 = scmp.ne.s32.totalorder %s290, %s291
    %p300 = scmp.eq.s32.totalorder %s28, 0
    %p301 = por %p299, %p300
    %p302 = scmp.ne.s32.totalorder %s290, %s291
    %p303 = scmp.eq.s32.totalorder %s29, 1
    %p304 = por %p302, %p303
    %p306 = scmp.ne.s32.totalorder %s291, %s305
    %p307 = scmp.eq.s32.totalorder %s29, 0
    %p308 = por %p306, %p307
    %s310 = sadd.s32 %s309, 1
    %p313 = scmp.eq.s32.totalorder %s23, 1
    %p314 = scmp.ne.s32.totalorder %s309, %s311
    %p315 = scmp.eq.s32.totalorder %s23, 0
    %p316 = por %p314, %p315
    %p317 = scmp.ne.s32.totalorder %s309, %s311
    %p318 = scmp.eq.s32.totalorder %s28, 1
    %p319 = por %p317, %p318
    %p320 = scmp.ne.s32.totalorder %s311, %s312
    %p321 = scmp.eq.s32.totalorder %s28, 0
    %p322 = por %p320, %p321
    %p323 = scmp.ne.s32.totalorder %s311, %s312
    %p324 = scmp.eq.s32.totalorder %s29, 1
    %p325 = por %p323, %p324
    %p327 = scmp.ne.s32.totalorder %s312, %s326
    %p328 = scmp.eq.s32.totalorder %s29, 0
    %p329 = por %p327, %p328
    %s331 = sadd.s32 %s330, 1
    %p334 = scmp.eq.s32.totalorder %s23, 1
    %p335 = scmp.ne.s32.totalorder %s330, %s332
    %p336 = scmp.eq.s32.totalorder %s23, 0
    %p337 = por %p335, %p336
    %p338 = scmp.ne.s32.totalorder %s330, %s332
    %p339 = scmp.eq.s32.totalorder %s28, 1
    %p340 = por %p338, %p339
    %p341 = scmp.ne.s32.totalorder %s332, %s333
    %p342 = scmp.eq.s32.totalorder %s28, 0
    %p343 = por %p341, %p342
    %p344 = scmp.ne.s32.totalorder %s332, %s333
    %p345 = scmp.eq.s32.totalorder %s29, 1
    %p346 = por %p344, %p345
    %p348 = scmp.ne.s32.totalorder %s333, %s347
    %p349 = scmp.eq.s32.totalorder %s29, 0
    %p350 = por %p348, %p349
    %s352 = sadd.s32 %s351, 1
    %p355 = scmp.eq.s32.totalorder %s23, 1
    %p356 = scmp.ne.s32.totalorder %s351, %s353
    %p357 = scmp.eq.s32.totalorder %s23, 0
    %p358 = por %p356, %p357
    %p359 = scmp.ne.s32.totalorder %s351, %s353
    %p360 = scmp.eq.s32.totalorder %s28, 1
    %p361 = por %p359, %p360
    %p362 = scmp.ne.s32.totalorder %s353, %s354
    %p363 = scmp.eq.s32.totalorder %s28, 0
    %p364 = por %p362, %p363
    %p365 = scmp.ne.s32.totalorder %s353, %s354
    %p366 = scmp.eq.s32.totalorder %s29, 1
    %p367 = por %p365, %p366
    %p369 = scmp.ne.s32.totalorder %s354, %s368
    %p370 = scmp.eq.s32.totalorder %s29, 0
    %p371 = por %p369, %p370
    %s373 = sadd.s32 %s372, 1
    %p376 = scmp.eq.s32.totalorder %s23, 1
    %p377 = scmp.ne.s32.totalorder %s372, %s374
    %p378 = scmp.eq.s32.totalorder %s23, 0
    %p379 = por %p377, %p378
    %p380 = scmp.ne.s32.totalorder %s372, %s374
    %p381 = scmp.eq.s32.totalorder %s28, 1
    %p382 = por %p380, %p381
    %p383 = scmp.ne.s32.totalorder %s374, %s375
    %p384 = scmp.eq.s32.totalorder %s28, 0
    %p385 = por %p383, %p384
    %p386 = scmp.ne.s32.totalorder %s374, %s375
    %p387 = scmp.eq.s32.totalorder %s29, 1
    %p388 = por %p386, %p387
    %p390 = scmp.ne.s32.totalorder %s375, %s389
    %p391 = scmp.eq.s32.totalorder %s29, 0
    %p392 = por %p390, %p391
    %s393 = ssub.s32 %s23, %s30
    %p394 = scmp.eq.s32.totalorder %s393, 0
    %s396 = sadd.s32 %s395, 1
    %s397 = scalar_select %p394, %s395, %s396
    %p400 = pneg %p394
    %p401 = scmp.eq.s32.totalorder %s23, 1
    %p402 = por %p400, %p401
    %p403 = scmp.ne.s32.totalorder %s395, %s398
    %p404 = scmp.eq.s32.totalorder %s23, 0
    %p405 = por %p403, %p404
    %p406 = scmp.ne.s32.totalorder %s395, %s398
    %p407 = scmp.eq.s32.totalorder %s28, 1
    %p408 = por %p406, %p407
    %p409 = scmp.ne.s32.totalorder %s398, %s399
    %p410 = scmp.eq.s32.totalorder %s28, 0
    %p411 = por %p409, %p410
    %p412 = scmp.ne.s32.totalorder %s398, %s399
    %p413 = scmp.eq.s32.totalorder %s29, 1
    %p414 = por %p412, %p413
    %p416 = scmp.ne.s32.totalorder %s399, %s415
    %p417 = scmp.eq.s32.totalorder %s29, 0
    %p418 = por %p416, %p417
    %p419 = scmp.le.s32.totalorder 1, %s23
    %p420 = scmp.lt.s32.totalorder %s23, 3
    %p421 = pnand %p419, %p420
    %p422 = pneg %p421
    // Predicated region
    $region9: #{deeplabv3plus_gru_v5_forward.2} parent=5 // pred_check
      _
    $region10: #{deeplabv3plus_gru_v5_forward.2} parent=5 // pred_check_branch
      %424 = sbr.rel (%p421) target = $region12
    $region11: #{deeplabv3plus_gru_v5_forward.2} parent=5 // pred_region
      %s425 = ssub.s32 %s23, 1
      // Predicated region
      $region13: #{deeplabv3plus_gru_v5_forward.2} parent=11 // pred_check
        %p426 = pneg %p70
      $region14: #{deeplabv3plus_gru_v5_forward.2} parent=11 // pred_check_branch
        %428 = sbr.rel (%p426) target = $region16
      $region15: #{deeplabv3plus_gru_v5_forward.2} parent=11 // pred_region
        _
      $region16: #{deeplabv3plus_gru_v5_forward.2} parent=11 // pred_fallthru
        _
      // Predicated region
      $region17: #{deeplabv3plus_gru_v5_forward.2} parent=11 // pred_check
        %p429 = pneg %p91
      $region18: #{deeplabv3plus_gru_v5_forward.2} parent=11 // pred_check_branch
        %431 = sbr.rel (%p429) target = $region20
      $region19: #{deeplabv3plus_gru_v5_forward.2} parent=11 // pred_region
        _
      $region20: #{deeplabv3plus_gru_v5_forward.2} parent=11 // pred_fallthru
        _
      // Predicated region
      $region21: #{deeplabv3plus_gru_v5_forward.2} parent=11 // pred_check
        %p432 = pneg %p112
      $region22: #{deeplabv3plus_gru_v5_forward.2} parent=11 // pred_check_branch
        %434 = sbr.rel (%p432) target = $region24
      $region23: #{deeplabv3plus_gru_v5_forward.2} parent=11 // pred_region
        _
      $region24: #{deeplabv3plus_gru_v5_forward.2} parent=11 // pred_fallthru
        _
      // Predicated region
      $region25: #{deeplabv3plus_gru_v5_forward.2} parent=11 // pred_check
        %p435 = pneg %p133
      $region26: #{deeplabv3plus_gru_v5_forward.2} parent=11 // pred_check_branch
        %437 = sbr.rel (%p435) target = $region28
      $region27: #{deeplabv3plus_gru_v5_forward.2} parent=11 // pred_region
        _
      $region28: #{deeplabv3plus_gru_v5_forward.2} parent=11 // pred_fallthru
        _
      // Predicated region
      $region29: #{deeplabv3plus_gru_v5_forward.2} parent=11 // pred_check
        %p438 = pneg %p154
      $region30: #{deeplabv3plus_gru_v5_forward.2} parent=11 // pred_check_branch
        %440 = sbr.rel (%p438) target = $region32
      $region31: #{deeplabv3plus_gru_v5_forward.2} parent=11 // pred_region
        _
      $region32: #{deeplabv3plus_gru_v5_forward.2} parent=11 // pred_fallthru
        _
      // Predicated region
      $region33: #{deeplabv3plus_gru_v5_forward.2} parent=11 // pred_check
        %p441 = pneg %p175
      $region34: #{deeplabv3plus_gru_v5_forward.2} parent=11 // pred_check_branch
        %443 = sbr.rel (%p441) target = $region36
      $region35: #{deeplabv3plus_gru_v5_forward.2} parent=11 // pred_region
        _
      $region36: #{deeplabv3plus_gru_v5_forward.2} parent=11 // pred_fallthru
        _
      // Predicated region
      $region37: #{deeplabv3plus_gru_v5_forward.2} parent=11 // pred_check
        %p444 = pneg %p196
      $region38: #{deeplabv3plus_gru_v5_forward.2} parent=11 // pred_check_branch
        %446 = sbr.rel (%p444) target = $region40
      $region39: #{deeplabv3plus_gru_v5_forward.2} parent=11 // pred_region
        _
      $region40: #{deeplabv3plus_gru_v5_forward.2} parent=11 // pred_fallthru
        _
      // Predicated region
      $region41: #{deeplabv3plus_gru_v5_forward.2} parent=11 // pred_check
        %p447 = pneg %p217
      $region42: #{deeplabv3plus_gru_v5_forward.2} parent=11 // pred_check_branch
        %449 = sbr.rel (%p447) target = $region44
      $region43: #{deeplabv3plus_gru_v5_forward.2} parent=11 // pred_region
        _
      $region44: #{deeplabv3plus_gru_v5_forward.2} parent=11 // pred_fallthru
        _
      // Predicated region
      $region45: #{deeplabv3plus_gru_v5_forward.2} parent=11 // pred_check
        %p450 = pneg %p238
      $region46: #{deeplabv3plus_gru_v5_forward.2} parent=11 // pred_check_branch
        %452 = sbr.rel (%p450) target = $region48
      $region47: #{deeplabv3plus_gru_v5_forward.2} parent=11 // pred_region
        _
      $region48: #{deeplabv3plus_gru_v5_forward.2} parent=11 // pred_fallthru
        _
      // Predicated region
      $region49: #{deeplabv3plus_gru_v5_forward.2} parent=11 // pred_check
        %p453 = pneg %p259
      $region50: #{deeplabv3plus_gru_v5_forward.2} parent=11 // pred_check_branch
        %455 = sbr.rel (%p453) target = $region52
      $region51: #{deeplabv3plus_gru_v5_forward.2} parent=11 // pred_region
        _
      $region52: #{deeplabv3plus_gru_v5_forward.2} parent=11 // pred_fallthru
        _
      // Predicated region
      $region53: #{deeplabv3plus_gru_v5_forward.2} parent=11 // pred_check
        %p456 = pneg %p280
      $region54: #{deeplabv3plus_gru_v5_forward.2} parent=11 // pred_check_branch
        %458 = sbr.rel (%p456) target = $region56
      $region55: #{deeplabv3plus_gru_v5_forward.2} parent=11 // pred_region
        _
      $region56: #{deeplabv3plus_gru_v5_forward.2} parent=11 // pred_fallthru
        _
      // Predicated region
      $region57: #{deeplabv3plus_gru_v5_forward.2} parent=11 // pred_check
        %p459 = pneg %p301
      $region58: #{deeplabv3plus_gru_v5_forward.2} parent=11 // pred_check_branch
        %461 = sbr.rel (%p459) target = $region60
      $region59: #{deeplabv3plus_gru_v5_forward.2} parent=11 // pred_region
        _
      $region60: #{deeplabv3plus_gru_v5_forward.2} parent=11 // pred_fallthru
        _
      // Predicated region
      $region61: #{deeplabv3plus_gru_v5_forward.2} parent=11 // pred_check
        %p462 = pneg %p322
      $region62: #{deeplabv3plus_gru_v5_forward.2} parent=11 // pred_check_branch
        %464 = sbr.rel (%p462) target = $region64
      $region63: #{deeplabv3plus_gru_v5_forward.2} parent=11 // pred_region
        _
      $region64: #{deeplabv3plus_gru_v5_forward.2} parent=11 // pred_fallthru
        _
      // Predicated region
      $region65: #{deeplabv3plus_gru_v5_forward.2} parent=11 // pred_check
        %p465 = pneg %p343
      $region66: #{deeplabv3plus_gru_v5_forward.2} parent=11 // pred_check_branch
        %467 = sbr.rel (%p465) target = $region68
      $region67: #{deeplabv3plus_gru_v5_forward.2} parent=11 // pred_region
        _
      $region68: #{deeplabv3plus_gru_v5_forward.2} parent=11 // pred_fallthru
        _
      // Predicated region
      $region69: #{deeplabv3plus_gru_v5_forward.2} parent=11 // pred_check
        %p468 = pneg %p364
      $region70: #{deeplabv3plus_gru_v5_forward.2} parent=11 // pred_check_branch
        %470 = sbr.rel (%p468) target = $region72
      $region71: #{deeplabv3plus_gru_v5_forward.2} parent=11 // pred_region
        _
      $region72: #{deeplabv3plus_gru_v5_forward.2} parent=11 // pred_fallthru
        _
      // Predicated region
      $region73: #{deeplabv3plus_gru_v5_forward.2} parent=11 // pred_check
        %p471 = pneg %p385
      $region74: #{deeplabv3plus_gru_v5_forward.2} parent=11 // pred_check_branch
        %473 = sbr.rel (%p471) target = $region76
      $region75: #{deeplabv3plus_gru_v5_forward.2} parent=11 // pred_region
        _
      $region76: #{deeplabv3plus_gru_v5_forward.2} parent=11 // pred_fallthru
        _
    $region12: #{deeplabv3plus_gru_v5_forward.2} parent=5 // pred_fallthru
      _
    %p474 = scmp.lt.s32.totalorder %s23, 2
    // Predicated region
    $region77: #{deeplabv3plus_gru_v5_forward.2} parent=5 // pred_check
      %p475 = pneg %p474
    $region78: #{deeplabv3plus_gru_v5_forward.2} parent=5 // pred_check_branch
      %477 = sbr.rel (%p475) target = $region80
    $region79: #{deeplabv3plus_gru_v5_forward.2} parent=5 // pred_region
      // Predicated region
      $region81: #{deeplabv3plus_gru_v5_forward.2} parent=79 // pred_check
        %p478 = pneg %p43
      $region82: #{deeplabv3plus_gru_v5_forward.2} parent=79 // pred_check_branch
        %480 = sbr.rel (%p478) target = $region84
      $region83: #{deeplabv3plus_gru_v5_forward.2} parent=79 // pred_region
        %p481 = scmp.lt.s32.totalorder %s23, 1
        %s482 = scalar_select %p481, %s23, 1
        %s483 = smul.addr %s482, 6
        %s484 = smul.addr %s483, 8
        %s485 = scalar_lea.vmem %s0, %s484
      $region84: #{deeplabv3plus_gru_v5_forward.2} parent=79 // pred_fallthru
        _
    $region80: #{deeplabv3plus_gru_v5_forward.2} parent=5 // pred_fallthru
      _
    %p486 = scmp.le.s32.totalorder 1, %s23
    %p487 = scmp.lt.s32.totalorder %s23, 3
    %p488 = pnand %p486, %p487
    %p489 = pneg %p488
    // Predicated region
    $region85: #{deeplabv3plus_gru_v5_forward.2} parent=5 // pred_check
      _
    $region86: #{deeplabv3plus_gru_v5_forward.2} parent=5 // pred_check_branch
      %491 = sbr.rel (%p488) target = $region88
    $region87: #{deeplabv3plus_gru_v5_forward.2} parent=5 // pred_region
      %s492 = ssub.s32 %s23, 1
      %p493 = scmp.lt.s32.totalorder %s28, 1
      %s494 = scalar_select %p493, %s28, 1
      %s495 = smul.addr %s494, 6
      %s496 = smul.addr %s495, 8
      %s497 = scalar_lea.vmem %s0, %s496
      %p498 = pneg %p49
      %p499 = pneg %p46
      %p500 = pneg %p70
      %p501 = pneg %p67
      %p502 = pneg %p91
      %p503 = pneg %p88
      %p504 = pneg %p112
      %p505 = pneg %p109
      %p506 = pneg %p133
      %p507 = pneg %p130
      %p508 = pneg %p154
      %p509 = pneg %p151
      %p510 = pneg %p175
      %p511 = pneg %p172
      %p512 = pneg %p196
      %p513 = pneg %p193
      %p514 = pneg %p217
      %p515 = pneg %p214
      %p516 = pneg %p238
      %p517 = pneg %p235
      %p518 = pneg %p259
      %p519 = pneg %p256
      %p520 = pneg %p280
      %p521 = pneg %p277
      %p522 = pneg %p301
      %p523 = pneg %p298
      %p524 = pneg %p322
      %p525 = pneg %p319
      %p526 = pneg %p343
      %p527 = pneg %p340
      %p528 = pneg %p364
      %p529 = pneg %p361
      %p530 = pneg %p385
      %p531 = pneg %p382
      %p532 = pneg %p411
      %p533 = pneg %p408
      %p534 = scmp.lt.s32.totalorder %s28, 1
      %s535 = scalar_select %p534, %s28, 1
      %s536 = smul.addr %s535, 2
      %s537 = scalar_lea.vmem %s17, %s536
      %p538 = scmp.lt.s32.totalorder %s28, 1
      %s539 = scalar_select %p538, %s28, 1
      %s540 = smul.addr %s539, 6
      %s541 = smul.addr %s540, 8
      %s542 = scalar_lea.vmem %s0, %s541
      %p543 = scmp.lt.s32.totalorder %s28, 1
      %s544 = scalar_select %p543, %s28, 1
      %s545 = smul.addr %s544, 2
      %s546 = scalar_lea.vmem %s17, %s545
      %v547 = vld [vmem:[%s542] sm:$0xff]
      %v548 = vld [vmem:[%s542 + $0x8] sm:$0xff]
      %v549 = vld [vmem:[%s542 + $0x10] sm:$0xff]
      %v550 = vld [vmem:[%s542 + $0x18] sm:$0xff]
      %v551 = vld [vmem:[%s542 + $0x20] sm:$0xff]
      %v552 = vld [vmem:[%s542 + $0x28] sm:$0xff]
      %v553 = vld [vmem:[%s2] sm:$0xff]
      %v554 = vld [vmem:[%s2 + $0x8] sm:$0xff]
      %v555 = vld [vmem:[%s3] sm:$0xff]
      %v556 = vld [vmem:[%s3 + $0x8] sm:$0xff]
      %558 = vset.pattern.permute.xlu0 0
      %559 = vperm.xlu0 %558, %v555
      %v560 = vpop.permute.xlu0 %559
      %563 = vset.pattern.permute.xlu0 0
      %564 = vperm.xlu0 %563, %v556
      %v565 = vpop.permute.xlu0 %564
      %vm567 = vcmask 392192
      %v569 = vsel %vm567, %v553, 0
      %v572 = vsel %vm567, %v554, 0
      %574 = vmatprep.subr.mxu0 0.0
      %575 = vmatpush1.msra.mxu0 %v547
      %576 = vmatprep.subr.mxu0 0.0
      %577 = vmatpush1.msra.mxu0 %v548
      %578 = vmatprep.subr.mxu0 0.0
      %579 = vmatpush1.msra.mxu0 %v549
      %580 = vmatprep.subr.mxu0 0.0
      %581 = vmatpush1.msra.mxu0 %v550
      %582 = vmatprep.subr.mxu0 0.0
      %583 = vmatpush1.msra.mxu0 %v551
      %584 = vmatprep.subr.mxu0 0.0
      %585 = vmatpush1.msra.mxu0 %v552
      %586 = vmatprep.subr.mxu0 0.0
      %587 = vmatpush1.msra.mxu0 0.0
      %588 = vmatprep.subr.mxu0 0.0
      %589 = vmatpush1.msra.mxu0 0.0
      %590 = vmatprep.subr.mxu0 0.0
      %591 = vmatpush1.msra.mxu0 0.0
      %592 = vmatprep.subr.mxu0 0.0
      %593 = vmatpush1.msra.mxu0 0.0
      %594 = vmatprep.subr.mxu0 0.0
      %595 = vmatpush1.msra.mxu0 0.0
      %596 = vmatprep.subr.mxu0 0.0
      %597 = vmatpush1.msra.mxu0 0.0
      %598 = vmatprep.subr.mxu0 0.0
      %599 = vmatpush1.msra.mxu0 0.0
      %600 = vmatprep.subr.mxu0 0.0
      %601 = vmatpush1.msra.mxu0 0.0
      %602 = vmatprep.subr.mxu0 0.0
      %603 = vmatpush1.msra.mxu0 0.0
      %604 = vmatprep.subr.mxu0 0.0
      %605 = vmatpush1.msra.mxu0 0.0
      %606 = vmatprep.subr.mxu0 0.0
      %607 = vmatpush1.msra.mxu0 0.0
      %608 = vmatprep.subr.mxu0 0.0
      %609 = vmatpush1.msra.mxu0 0.0
      %610 = vmatprep.subr.mxu0 0.0
      %611 = vmatpush1.msra.mxu0 0.0
      %612 = vmatprep.subr.mxu0 0.0
      %613 = vmatpush1.msra.mxu0 0.0
      %614 = vmatprep.subr.mxu0 0.0
      %615 = vmatpush1.msra.mxu0 0.0
      %616 = vmatprep.subr.mxu0 0.0
      %617 = vmatpush1.msra.mxu0 0.0
      %618 = vmatprep.subr.mxu0 0.0
      %619 = vmatpush1.msra.mxu0 0.0
      %620 = vmatprep.subr.mxu0 0.0
      %621 = vmatpush1.msra.mxu0 0.0
      %622 = vmatprep.subr.mxu0 0.0
      %623 = vmatpush1.msra.mxu0 0.0
      %624 = vmatprep.subr.mxu0 0.0
      %625 = vmatpush1.msra.mxu0 0.0
      %626 = vmatprep.subr.mxu0 0.0
      %627 = vmatpush1.msra.mxu0 0.0
      %628 = vmatprep.subr.mxu0 0.0
      %629 = vmatpush1.msra.mxu0 0.0
      %630 = vmatprep.subr.mxu0 0.0
      %631 = vmatpush1.msra.mxu0 0.0
      %632 = vmatprep.subr.mxu0 0.0
      %633 = vmatpush1.msra.mxu0 0.0
      %634 = vmatprep.subr.mxu0 0.0
      %635 = vmatpush1.msra.mxu0 0.0
      %636 = vmatprep.subr.mxu0 0.0
      %637 = vmatpush1.msra.mxu0 0.0
      %638 = vmatprep.mubr.f32.mxu0 0.0
      %639 = vmatmul.mubr.f32.gmra.mrb[0].mxu0 %v569
      %v640 = vpop.f32.mrb[0].mxu0
      %v641 = vadd.f32 %v560, %v640
      %v642 = vpop.f32.mrb[0].mxu0
      %643 = vmatprep.mubr.f32.mxu0 0.0
      %644 = vmatmul.mubr.f32.gmra.mrb[0].mxu0 %v572
      %v645 = vpop.f32.mrb[0].mxu0
      %v646 = vadd.f32 %v565, %v645
      %v647 = vpop.f32.mrb[0].mxu0
      %648 = vdwg.mxu0
      %v649 = vmax.f32 %v641, 0.0
      %v650 = vmax.f32 %v646, 0.0
      %v651 = vld [vmem:[%s4] sm:$0xff]
      %v652 = vld [vmem:[%s5] sm:$0xff]
      %654 = vset.pattern.permute.xlu0 0
      %655 = vperm.xlu0 %654, %v652
      %v656 = vpop.permute.xlu0 %655
      %v659 = vsel %vm567, %v651, 0
      %661 = vmatprep.subr.mxu0 0.0
      %662 = vmatpush1.msra.mxu0 %v547
      %663 = vmatprep.subr.mxu0 0.0
      %664 = vmatpush1.msra.mxu0 %v548
      %665 = vmatprep.subr.mxu0 0.0
      %666 = vmatpush1.msra.mxu0 %v549
      %667 = vmatprep.subr.mxu0 0.0
      %668 = vmatpush1.msra.mxu0 %v550
      %669 = vmatprep.subr.mxu0 0.0
      %670 = vmatpush1.msra.mxu0 %v551
      %671 = vmatprep.subr.mxu0 0.0
      %672 = vmatpush1.msra.mxu0 %v552
      %673 = vmatprep.subr.mxu0 0.0
      %674 = vmatpush1.msra.mxu0 0.0
      %675 = vmatprep.subr.mxu0 0.0
      %676 = vmatpush1.msra.mxu0 0.0
      %677 = vmatprep.subr.mxu0 0.0
      %678 = vmatpush1.msra.mxu0 0.0
      %679 = vmatprep.subr.mxu0 0.0
      %680 = vmatpush1.msra.mxu0 0.0
      %681 = vmatprep.subr.mxu0 0.0
      %682 = vmatpush1.msra.mxu0 0.0
      %683 = vmatprep.subr.mxu0 0.0
      %684 = vmatpush1.msra.mxu0 0.0
      %685 = vmatprep.subr.mxu0 0.0
      %686 = vmatpush1.msra.mxu0 0.0
      %687 = vmatprep.subr.mxu0 0.0
      %688 = vmatpush1.msra.mxu0 0.0
      %689 = vmatprep.subr.mxu0 0.0
      %690 = vmatpush1.msra.mxu0 0.0
      %691 = vmatprep.subr.mxu0 0.0
      %692 = vmatpush1.msra.mxu0 0.0
      %693 = vmatprep.subr.mxu0 0.0
      %694 = vmatpush1.msra.mxu0 0.0
      %695 = vmatprep.subr.mxu0 0.0
      %696 = vmatpush1.msra.mxu0 0.0
      %697 = vmatprep.subr.mxu0 0.0
      %698 = vmatpush1.msra.mxu0 0.0
      %699 = vmatprep.subr.mxu0 0.0
      %700 = vmatpush1.msra.mxu0 0.0
      %701 = vmatprep.subr.mxu0 0.0
      %702 = vmatpush1.msra.mxu0 0.0
      %703 = vmatprep.subr.mxu0 0.0
      %704 = vmatpush1.msra.mxu0 0.0
      %705 = vmatprep.subr.mxu0 0.0
      %706 = vmatpush1.msra.mxu0 0.0
      %707 = vmatprep.subr.mxu0 0.0
      %708 = vmatpush1.msra.mxu0 0.0
      %709 = vmatprep.subr.mxu0 0.0
      %710 = vmatpush1.msra.mxu0 0.0
      %711 = vmatprep.subr.mxu0 0.0
      %712 = vmatpush1.msra.mxu0 0.0
      %713 = vmatprep.subr.mxu0 0.0
      %714 = vmatpush1.msra.mxu0 0.0
      %715 = vmatprep.subr.mxu0 0.0
      %716 = vmatpush1.msra.mxu0 0.0
      %717 = vmatprep.subr.mxu0 0.0
      %718 = vmatpush1.msra.mxu0 0.0
      %719 = vmatprep.subr.mxu0 0.0
      %720 = vmatpush1.msra.mxu0 0.0
      %721 = vmatprep.subr.mxu0 0.0
      %722 = vmatpush1.msra.mxu0 0.0
      %723 = vmatprep.subr.mxu0 0.0
      %724 = vmatpush1.msra.mxu0 0.0
      %725 = vmatprep.mubr.f32.mxu0 0.0
      %726 = vmatmul.mubr.f32.gmra.mrb[0].mxu0 %v659
      %v727 = vpop.f32.mrb[0].mxu0
      %v728 = vadd.f32 %v656, %v727
      %v729 = vpop.f32.mrb[0].mxu0
      %730 = vdwg.mxu0
      %v731 = vmax.f32 %v728, 0.0
      %v732 = vld [vmem:[%s6] sm:$0xff]
      %v733 = vld [vmem:[%s6 + $0x8] sm:$0xff]
      %v734 = vld [vmem:[%s7] sm:$0xff]
      %v735 = vld [vmem:[%s7 + $0x8] sm:$0xff]
      %737 = vset.pattern.permute.xlu0 0
      %738 = vperm.xlu0 %737, %v734
      %v739 = vpop.permute.xlu0 %738
      %742 = vset.pattern.permute.xlu0 0
      %743 = vperm.xlu0 %742, %v735
      %v744 = vpop.permute.xlu0 %743
      %vm746 = vcmask 130048
      %v748 = vsel %vm746, %v732, 0
      %v751 = vsel %vm746, %v733, 0
      %753 = vmatprep.subr.mxu0 0.0
      %754 = vmatpush1.msra.mxu0 %v649
      %755 = vmatprep.subr.mxu0 0.0
      %756 = vmatpush1.msra.mxu0 %v650
      %757 = vmatprep.subr.mxu0 0.0
      %758 = vmatpush1.msra.mxu0 0.0
      %759 = vmatprep.subr.mxu0 0.0
      %760 = vmatpush1.msra.mxu0 0.0
      %761 = vmatprep.subr.mxu0 0.0
      %762 = vmatpush1.msra.mxu0 0.0
      %763 = vmatprep.subr.mxu0 0.0
      %764 = vmatpush1.msra.mxu0 0.0
      %765 = vmatprep.subr.mxu0 0.0
      %766 = vmatpush1.msra.mxu0 0.0
      %767 = vmatprep.subr.mxu0 0.0
      %768 = vmatpush1.msra.mxu0 0.0
      %769 = vmatprep.subr.mxu0 0.0
      %770 = vmatpush1.msra.mxu0 0.0
      %771 = vmatprep.subr.mxu0 0.0
      %772 = vmatpush1.msra.mxu0 0.0
      %773 = vmatprep.subr.mxu0 0.0
      %774 = vmatpush1.msra.mxu0 0.0
      %775 = vmatprep.subr.mxu0 0.0
      %776 = vmatpush1.msra.mxu0 0.0
      %777 = vmatprep.subr.mxu0 0.0
      %778 = vmatpush1.msra.mxu0 0.0
      %779 = vmatprep.subr.mxu0 0.0
      %780 = vmatpush1.msra.mxu0 0.0
      %781 = vmatprep.subr.mxu0 0.0
      %782 = vmatpush1.msra.mxu0 0.0
      %783 = vmatprep.subr.mxu0 0.0
      %784 = vmatpush1.msra.mxu0 0.0
      %785 = vmatprep.subr.mxu0 0.0
      %786 = vmatpush1.msra.mxu0 0.0
      %787 = vmatprep.subr.mxu0 0.0
      %788 = vmatpush1.msra.mxu0 0.0
      %789 = vmatprep.subr.mxu0 0.0
      %790 = vmatpush1.msra.mxu0 0.0
      %791 = vmatprep.subr.mxu0 0.0
      %792 = vmatpush1.msra.mxu0 0.0
      %793 = vmatprep.subr.mxu0 0.0
      %794 = vmatpush1.msra.mxu0 0.0
      %795 = vmatprep.subr.mxu0 0.0
      %796 = vmatpush1.msra.mxu0 0.0
      %797 = vmatprep.subr.mxu0 0.0
      %798 = vmatpush1.msra.mxu0 0.0
      %799 = vmatprep.subr.mxu0 0.0
      %800 = vmatpush1.msra.mxu0 0.0
      %801 = vmatprep.subr.mxu0 0.0
      %802 = vmatpush1.msra.mxu0 0.0
      %803 = vmatprep.subr.mxu0 0.0
      %804 = vmatpush1.msra.mxu0 0.0
      %805 = vmatprep.subr.mxu0 0.0
      %806 = vmatpush1.msra.mxu0 0.0
      %807 = vmatprep.subr.mxu0 0.0
      %808 = vmatpush1.msra.mxu0 0.0
      %809 = vmatprep.subr.mxu0 0.0
      %810 = vmatpush1.msra.mxu0 0.0
      %811 = vmatprep.subr.mxu0 0.0
      %812 = vmatpush1.msra.mxu0 0.0
      %813 = vmatprep.subr.mxu0 0.0
      %814 = vmatpush1.msra.mxu0 0.0
      %815 = vmatprep.subr.mxu0 0.0
      %816 = vmatpush1.msra.mxu0 0.0
      %817 = vmatprep.mubr.f32.mxu0 0.0
      %818 = vmatmul.mubr.f32.gmra.mrb[0].mxu0 %v748
      %v819 = vpop.f32.mrb[0].mxu0
      %v820 = vadd.f32 %v739, %v819
      %v821 = vpop.f32.mrb[0].mxu0
      %822 = vmatprep.mubr.f32.mxu0 0.0
      %823 = vmatmul.mubr.f32.gmra.mrb[0].mxu0 %v751
      %v824 = vpop.f32.mrb[0].mxu0
      %v825 = vadd.f32 %v744, %v824
      %v826 = vpop.f32.mrb[0].mxu0
      %827 = vdwg.mxu0
      %v828 = vmax.f32 %v820, 0.0
      %v829 = vmax.f32 %v825, 0.0
      %v830 = vld [vmem:[%s8] sm:$0xff]
      %v831 = vld [vmem:[%s9] sm:$0xff]
      %vm832 = vcmask 64512
      %v834 = vsel %vm832, %v831, 0
      %836 = vmatprep.subr.mxu0 0.0
      %837 = vmatpush1.msra.mxu0 %v731
      %838 = vmatprep.subr.mxu0 0.0
      %839 = vmatpush1.msra.mxu0 0.0
      %840 = vmatprep.subr.mxu0 0.0
      %841 = vmatpush1.msra.mxu0 0.0
      %842 = vmatprep.subr.mxu0 0.0
      %843 = vmatpush1.msra.mxu0 0.0
      %844 = vmatprep.subr.mxu0 0.0
      %845 = vmatpush1.msra.mxu0 0.0
      %846 = vmatprep.subr.mxu0 0.0
      %847 = vmatpush1.msra.mxu0 0.0
      %848 = vmatprep.subr.mxu0 0.0
      %849 = vmatpush1.msra.mxu0 0.0
      %850 = vmatprep.subr.mxu0 0.0
      %851 = vmatpush1.msra.mxu0 0.0
      %852 = vmatprep.subr.mxu0 0.0
      %853 = vmatpush1.msra.mxu0 0.0
      %854 = vmatprep.subr.mxu0 0.0
      %855 = vmatpush1.msra.mxu0 0.0
      %856 = vmatprep.subr.mxu0 0.0
      %857 = vmatpush1.msra.mxu0 0.0
      %858 = vmatprep.subr.mxu0 0.0
      %859 = vmatpush1.msra.mxu0 0.0
      %860 = vmatprep.subr.mxu0 0.0
      %861 = vmatpush1.msra.mxu0 0.0
      %862 = vmatprep.subr.mxu0 0.0
      %863 = vmatpush1.msra.mxu0 0.0
      %864 = vmatprep.subr.mxu0 0.0
      %865 = vmatpush1.msra.mxu0 0.0
      %866 = vmatprep.subr.mxu0 0.0
      %867 = vmatpush1.msra.mxu0 0.0
      %868 = vmatprep.subr.mxu0 0.0
      %869 = vmatpush1.msra.mxu0 0.0
      %870 = vmatprep.subr.mxu0 0.0
      %871 = vmatpush1.msra.mxu0 0.0
      %872 = vmatprep.subr.mxu0 0.0
      %873 = vmatpush1.msra.mxu0 0.0
      %874 = vmatprep.subr.mxu0 0.0
      %875 = vmatpush1.msra.mxu0 0.0
      %876 = vmatprep.subr.mxu0 0.0
      %877 = vmatpush1.msra.mxu0 0.0
      %878 = vmatprep.subr.mxu0 0.0
      %879 = vmatpush1.msra.mxu0 0.0
      %880 = vmatprep.subr.mxu0 0.0
      %881 = vmatpush1.msra.mxu0 0.0
      %882 = vmatprep.subr.mxu0 0.0
      %883 = vmatpush1.msra.mxu0 0.0
      %884 = vmatprep.subr.mxu0 0.0
      %885 = vmatpush1.msra.mxu0 0.0
      %886 = vmatprep.subr.mxu0 0.0
      %887 = vmatpush1.msra.mxu0 0.0
      %888 = vmatprep.subr.mxu0 0.0
      %889 = vmatpush1.msra.mxu0 0.0
      %890 = vmatprep.subr.mxu0 0.0
      %891 = vmatpush1.msra.mxu0 0.0
      %892 = vmatprep.subr.mxu0 0.0
      %893 = vmatpush1.msra.mxu0 0.0
      %894 = vmatprep.subr.mxu0 0.0
      %895 = vmatpush1.msra.mxu0 0.0
      %896 = vmatprep.subr.mxu0 0.0
      %897 = vmatpush1.msra.mxu0 0.0
      %898 = vmatprep.subr.mxu0 0.0
      %899 = vmatpush1.msra.mxu0 0.0
      %900 = vmatprep.mubr.f32.mxu0 0.0
      %901 = vmatmul.mubr.f32.gmra.mrb[0].mxu0 %v834
      %v902 = vpop.f32.mrb[0].mxu0
      %v903 = vadd.f32 0.0, %v902
      %v904 = vpop.f32.mrb[0].mxu0
      %905 = vdwg.mxu0
      %v907 = vsel %vm746, %v830, 0
      %909 = vmatprep.subr.mxu0 0.0
      %910 = vmatpush1.msra.mxu0 %v828
      %911 = vmatprep.subr.mxu0 0.0
      %912 = vmatpush1.msra.mxu0 %v829
      %913 = vmatprep.subr.mxu0 0.0
      %914 = vmatpush1.msra.mxu0 0.0
      %915 = vmatprep.subr.mxu0 0.0
      %916 = vmatpush1.msra.mxu0 0.0
      %917 = vmatprep.subr.mxu0 0.0
      %918 = vmatpush1.msra.mxu0 0.0
      %919 = vmatprep.subr.mxu0 0.0
      %920 = vmatpush1.msra.mxu0 0.0
      %921 = vmatprep.subr.mxu0 0.0
      %922 = vmatpush1.msra.mxu0 0.0
      %923 = vmatprep.subr.mxu0 0.0
      %924 = vmatpush1.msra.mxu0 0.0
      %925 = vmatprep.subr.mxu0 0.0
      %926 = vmatpush1.msra.mxu0 0.0
      %927 = vmatprep.subr.mxu0 0.0
      %928 = vmatpush1.msra.mxu0 0.0
      %929 = vmatprep.subr.mxu0 0.0
      %930 = vmatpush1.msra.mxu0 0.0
      %931 = vmatprep.subr.mxu0 0.0
      %932 = vmatpush1.msra.mxu0 0.0
      %933 = vmatprep.subr.mxu0 0.0
      %934 = vmatpush1.msra.mxu0 0.0
      %935 = vmatprep.subr.mxu0 0.0
      %936 = vmatpush1.msra.mxu0 0.0
      %937 = vmatprep.subr.mxu0 0.0
      %938 = vmatpush1.msra.mxu0 0.0
      %939 = vmatprep.subr.mxu0 0.0
      %940 = vmatpush1.msra.mxu0 0.0
      %941 = vmatprep.subr.mxu0 0.0
      %942 = vmatpush1.msra.mxu0 0.0
      %943 = vmatprep.subr.mxu0 0.0
      %944 = vmatpush1.msra.mxu0 0.0
      %945 = vmatprep.subr.mxu0 0.0
      %946 = vmatpush1.msra.mxu0 0.0
      %947 = vmatprep.subr.mxu0 0.0
      %948 = vmatpush1.msra.mxu0 0.0
      %949 = vmatprep.subr.mxu0 0.0
      %950 = vmatpush1.msra.mxu0 0.0
      %951 = vmatprep.subr.mxu0 0.0
      %952 = vmatpush1.msra.mxu0 0.0
      %953 = vmatprep.subr.mxu0 0.0
      %954 = vmatpush1.msra.mxu0 0.0
      %955 = vmatprep.subr.mxu0 0.0
      %956 = vmatpush1.msra.mxu0 0.0
      %957 = vmatprep.subr.mxu0 0.0
      %958 = vmatpush1.msra.mxu0 0.0
      %959 = vmatprep.subr.mxu0 0.0
      %960 = vmatpush1.msra.mxu0 0.0
      %961 = vmatprep.subr.mxu0 0.0
      %962 = vmatpush1.msra.mxu0 0.0
      %963 = vmatprep.subr.mxu0 0.0
      %964 = vmatpush1.msra.mxu0 0.0
      %965 = vmatprep.subr.mxu0 0.0
      %966 = vmatpush1.msra.mxu0 0.0
      %967 = vmatprep.subr.mxu0 0.0
      %968 = vmatpush1.msra.mxu0 0.0
      %969 = vmatprep.subr.mxu0 0.0
      %970 = vmatpush1.msra.mxu0 0.0
      %971 = vmatprep.subr.mxu0 0.0
      %972 = vmatpush1.msra.mxu0 0.0
      %973 = vmatprep.mubr.f32.mxu0 0.0
      %974 = vmatmul.mubr.f32.gmra.mrb[0].mxu0 %v907
      %v975 = vpop.f32.mrb[0].mxu0
      %v976 = vadd.f32 %v903, %v975
      %v977 = vpop.f32.mrb[0].mxu0
      %978 = vdwg.mxu0
      %v979 = vld [vmem:[%s10] sm:$0xff]
      %981 = vset.pattern.permute.xlu0 0
      %982 = vperm.xlu0 %981, %v979
      %v983 = vpop.permute.xlu0 %982
      %v985 = vadd.f32 %v976, %v983
      %v986 = vmax.f32 %v985, 0.0
      %v987 = vld [vmem:[%s1] sm:$0xff]
      %v988 = vld [vmem:[%s1 + $0x8] sm:$0xff]
      %v990 = vsel %vm746, %v986, 0
      %992 = vmatprep.subr.mxu0 0.0
      %993 = vmatpush1.msra.mxu0 %v987
      %994 = vmatprep.subr.mxu0 0.0
      %995 = vmatpush1.msra.mxu0 %v988
      %996 = vmatprep.subr.mxu0 0.0
      %997 = vmatpush1.msra.mxu0 0.0
      %998 = vmatprep.subr.mxu0 0.0
      %999 = vmatpush1.msra.mxu0 0.0
      %1000 = vmatprep.subr.mxu0 0.0
      %1001 = vmatpush1.msra.mxu0 0.0
      %1002 = vmatprep.subr.mxu0 0.0
      %1003 = vmatpush1.msra.mxu0 0.0
      %1004 = vmatprep.subr.mxu0 0.0
      %1005 = vmatpush1.msra.mxu0 0.0
      %1006 = vmatprep.subr.mxu0 0.0
      %1007 = vmatpush1.msra.mxu0 0.0
      %1008 = vmatprep.subr.mxu0 0.0
      %1009 = vmatpush1.msra.mxu0 0.0
      %1010 = vmatprep.subr.mxu0 0.0
      %1011 = vmatpush1.msra.mxu0 0.0
      %1012 = vmatprep.subr.mxu0 0.0
      %1013 = vmatpush1.msra.mxu0 0.0
      %1014 = vmatprep.subr.mxu0 0.0
      %1015 = vmatpush1.msra.mxu0 0.0
      %1016 = vmatprep.subr.mxu0 0.0
      %1017 = vmatpush1.msra.mxu0 0.0
      %1018 = vmatprep.subr.mxu0 0.0
      %1019 = vmatpush1.msra.mxu0 0.0
      %1020 = vmatprep.subr.mxu0 0.0
      %1021 = vmatpush1.msra.mxu0 0.0
      %1022 = vmatprep.subr.mxu0 0.0
      %1023 = vmatpush1.msra.mxu0 0.0
      %1024 = vmatprep.subr.mxu0 0.0
      %1025 = vmatpush1.msra.mxu0 0.0
      %1026 = vmatprep.subr.mxu0 0.0
      %1027 = vmatpush1.msra.mxu0 0.0
      %1028 = vmatprep.subr.mxu0 0.0
      %1029 = vmatpush1.msra.mxu0 0.0
      %1030 = vmatprep.subr.mxu0 0.0
      %1031 = vmatpush1.msra.mxu0 0.0
      %1032 = vmatprep.subr.mxu0 0.0
      %1033 = vmatpush1.msra.mxu0 0.0
      %1034 = vmatprep.subr.mxu0 0.0
      %1035 = vmatpush1.msra.mxu0 0.0
      %1036 = vmatprep.subr.mxu0 0.0
      %1037 = vmatpush1.msra.mxu0 0.0
      %1038 = vmatprep.subr.mxu0 0.0
      %1039 = vmatpush1.msra.mxu0 0.0
      %1040 = vmatprep.subr.mxu0 0.0
      %1041 = vmatpush1.msra.mxu0 0.0
      %1042 = vmatprep.subr.mxu0 0.0
      %1043 = vmatpush1.msra.mxu0 0.0
      %1044 = vmatprep.subr.mxu0 0.0
      %1045 = vmatpush1.msra.mxu0 0.0
      %1046 = vmatprep.subr.mxu0 0.0
      %1047 = vmatpush1.msra.mxu0 0.0
      %1048 = vmatprep.subr.mxu0 0.0
      %1049 = vmatpush1.msra.mxu0 0.0
      %1050 = vmatprep.subr.mxu0 0.0
      %1051 = vmatpush1.msra.mxu0 0.0
      %1052 = vmatprep.subr.mxu0 0.0
      %1053 = vmatpush1.msra.mxu0 0.0
      %1054 = vmatprep.subr.mxu0 0.0
      %1055 = vmatpush1.msra.mxu0 0.0
      %1056 = vmatprep.mubr.f32.mxu0 0.0
      %1057 = vmatmul.mubr.f32.gmra.mrb[0].mxu0 %v990
      %v1058 = vpop.f32.mrb[0].mxu0
      %v1059 = vadd.f32 0.0, %v1058
      %v1060 = vpop.f32.mrb[0].mxu0
      %1061 = vdwg.mxu0
      %s1062 = scalar_lea.vmem %s1, 16
      %v1063 = vld [vmem:[%s1062] sm:$0xff]
      %v1064 = vld [vmem:[%s1062 + $0x8] sm:$0xff]
      %1065 = vmatprep.subr.mxu0 0.0
      %1066 = vmatpush1.msra.mxu0 %v1063
      %1067 = vmatprep.subr.mxu0 0.0
      %1068 = vmatpush1.msra.mxu0 %v1064
      %1069 = vmatprep.subr.mxu0 0.0
      %1070 = vmatpush1.msra.mxu0 0.0
      %1071 = vmatprep.subr.mxu0 0.0
      %1072 = vmatpush1.msra.mxu0 0.0
      %1073 = vmatprep.subr.mxu0 0.0
      %1074 = vmatpush1.msra.mxu0 0.0
      %1075 = vmatprep.subr.mxu0 0.0
      %1076 = vmatpush1.msra.mxu0 0.0
      %1077 = vmatprep.subr.mxu0 0.0
      %1078 = vmatpush1.msra.mxu0 0.0
      %1079 = vmatprep.subr.mxu0 0.0
      %1080 = vmatpush1.msra.mxu0 0.0
      %1081 = vmatprep.subr.mxu0 0.0
      %1082 = vmatpush1.msra.mxu0 0.0
      %1083 = vmatprep.subr.mxu0 0.0
      %1084 = vmatpush1.msra.mxu0 0.0
      %1085 = vmatprep.subr.mxu0 0.0
      %1086 = vmatpush1.msra.mxu0 0.0
      %1087 = vmatprep.subr.mxu0 0.0
      %1088 = vmatpush1.msra.mxu0 0.0
      %1089 = vmatprep.subr.mxu0 0.0
      %1090 = vmatpush1.msra.mxu0 0.0
      %1091 = vmatprep.subr.mxu0 0.0
      %1092 = vmatpush1.msra.mxu0 0.0
      %1093 = vmatprep.subr.mxu0 0.0
      %1094 = vmatpush1.msra.mxu0 0.0
      %1095 = vmatprep.subr.mxu0 0.0
      %1096 = vmatpush1.msra.mxu0 0.0
      %1097 = vmatprep.subr.mxu0 0.0
      %1098 = vmatpush1.msra.mxu0 0.0
      %1099 = vmatprep.subr.mxu0 0.0
      %1100 = vmatpush1.msra.mxu0 0.0
      %1101 = vmatprep.subr.mxu0 0.0
      %1102 = vmatpush1.msra.mxu0 0.0
      %1103 = vmatprep.subr.mxu0 0.0
      %1104 = vmatpush1.msra.mxu0 0.0
      %1105 = vmatprep.subr.mxu0 0.0
      %1106 = vmatpush1.msra.mxu0 0.0
      %1107 = vmatprep.subr.mxu0 0.0
      %1108 = vmatpush1.msra.mxu0 0.0
      %1109 = vmatprep.subr.mxu0 0.0
      %1110 = vmatpush1.msra.mxu0 0.0
      %1111 = vmatprep.subr.mxu0 0.0
      %1112 = vmatpush1.msra.mxu0 0.0
      %1113 = vmatprep.subr.mxu0 0.0
      %1114 = vmatpush1.msra.mxu0 0.0
      %1115 = vmatprep.subr.mxu0 0.0
      %1116 = vmatpush1.msra.mxu0 0.0
      %1117 = vmatprep.subr.mxu0 0.0
      %1118 = vmatpush1.msra.mxu0 0.0
      %1119 = vmatprep.subr.mxu0 0.0
      %1120 = vmatpush1.msra.mxu0 0.0
      %1121 = vmatprep.subr.mxu0 0.0
      %1122 = vmatpush1.msra.mxu0 0.0
      %1123 = vmatprep.subr.mxu0 0.0
      %1124 = vmatpush1.msra.mxu0 0.0
      %1125 = vmatprep.subr.mxu0 0.0
      %1126 = vmatpush1.msra.mxu0 0.0
      %1127 = vmatprep.subr.mxu0 0.0
      %1128 = vmatpush1.msra.mxu0 0.0
      %1129 = vmatprep.mubr.f32.mxu0 0.0
      %1130 = vmatmul.mubr.f32.gmra.mrb[0].mxu0 %v990
      %v1131 = vpop.f32.mrb[0].mxu0
      %v1132 = vadd.f32 0.0, %v1131
      %v1133 = vpop.f32.mrb[0].mxu0
      %1134 = vdwg.mxu0
      %s1135 = scalar_lea.vmem %s1, 32
      %v1136 = vld [vmem:[%s1135] sm:$0xff]
      %v1137 = vld [vmem:[%s1135 + $0x8] sm:$0xff]
      %1138 = vmatprep.subr.mxu0 0.0
      %1139 = vmatpush1.msra.mxu0 %v1136
      %1140 = vmatprep.subr.mxu0 0.0
      %1141 = vmatpush1.msra.mxu0 %v1137
      %1142 = vmatprep.subr.mxu0 0.0
      %1143 = vmatpush1.msra.mxu0 0.0
      %1144 = vmatprep.subr.mxu0 0.0
      %1145 = vmatpush1.msra.mxu0 0.0
      %1146 = vmatprep.subr.mxu0 0.0
      %1147 = vmatpush1.msra.mxu0 0.0
      %1148 = vmatprep.subr.mxu0 0.0
      %1149 = vmatpush1.msra.mxu0 0.0
      %1150 = vmatprep.subr.mxu0 0.0
      %1151 = vmatpush1.msra.mxu0 0.0
      %1152 = vmatprep.subr.mxu0 0.0
      %1153 = vmatpush1.msra.mxu0 0.0
      %1154 = vmatprep.subr.mxu0 0.0
      %1155 = vmatpush1.msra.mxu0 0.0
      %1156 = vmatprep.subr.mxu0 0.0
      %1157 = vmatpush1.msra.mxu0 0.0
      %1158 = vmatprep.subr.mxu0 0.0
      %1159 = vmatpush1.msra.mxu0 0.0
      %1160 = vmatprep.subr.mxu0 0.0
      %1161 = vmatpush1.msra.mxu0 0.0
      %1162 = vmatprep.subr.mxu0 0.0
      %1163 = vmatpush1.msra.mxu0 0.0
      %1164 = vmatprep.subr.mxu0 0.0
      %1165 = vmatpush1.msra.mxu0 0.0
      %1166 = vmatprep.subr.mxu0 0.0
      %1167 = vmatpush1.msra.mxu0 0.0
      %1168 = vmatprep.subr.mxu0 0.0
      %1169 = vmatpush1.msra.mxu0 0.0
      %1170 = vmatprep.subr.mxu0 0.0
      %1171 = vmatpush1.msra.mxu0 0.0
      %1172 = vmatprep.subr.mxu0 0.0
      %1173 = vmatpush1.msra.mxu0 0.0
      %1174 = vmatprep.subr.mxu0 0.0
      %1175 = vmatpush1.msra.mxu0 0.0
      %1176 = vmatprep.subr.mxu0 0.0
      %1177 = vmatpush1.msra.mxu0 0.0
      %1178 = vmatprep.subr.mxu0 0.0
      %1179 = vmatpush1.msra.mxu0 0.0
      %1180 = vmatprep.subr.mxu0 0.0
      %1181 = vmatpush1.msra.mxu0 0.0
      %1182 = vmatprep.subr.mxu0 0.0
      %1183 = vmatpush1.msra.mxu0 0.0
      %1184 = vmatprep.subr.mxu0 0.0
      %1185 = vmatpush1.msra.mxu0 0.0
      %1186 = vmatprep.subr.mxu0 0.0
      %1187 = vmatpush1.msra.mxu0 0.0
      %1188 = vmatprep.subr.mxu0 0.0
      %1189 = vmatpush1.msra.mxu0 0.0
      %1190 = vmatprep.subr.mxu0 0.0
      %1191 = vmatpush1.msra.mxu0 0.0
      %1192 = vmatprep.subr.mxu0 0.0
      %1193 = vmatpush1.msra.mxu0 0.0
      %1194 = vmatprep.subr.mxu0 0.0
      %1195 = vmatpush1.msra.mxu0 0.0
      %1196 = vmatprep.subr.mxu0 0.0
      %1197 = vmatpush1.msra.mxu0 0.0
      %1198 = vmatprep.subr.mxu0 0.0
      %1199 = vmatpush1.msra.mxu0 0.0
      %1200 = vmatprep.subr.mxu0 0.0
      %1201 = vmatpush1.msra.mxu0 0.0
      %1202 = vmatprep.mubr.f32.mxu0 0.0
      %1203 = vmatmul.mubr.f32.gmra.mrb[0].mxu0 %v990
      %v1204 = vpop.f32.mrb[0].mxu0
      %v1205 = vadd.f32 0.0, %v1204
      %v1206 = vpop.f32.mrb[0].mxu0
      %1207 = vdwg.mxu0
      %s1208 = scalar_lea.vmem %s1, 48
      %v1209 = vld [vmem:[%s1208] sm:$0xff]
      %v1210 = vld [vmem:[%s1208 + $0x8] sm:$0xff]
      %1211 = vmatprep.subr.mxu0 0.0
      %1212 = vmatpush1.msra.mxu0 %v1209
      %1213 = vmatprep.subr.mxu0 0.0
      %1214 = vmatpush1.msra.mxu0 %v1210
      %1215 = vmatprep.subr.mxu0 0.0
      %1216 = vmatpush1.msra.mxu0 0.0
      %1217 = vmatprep.subr.mxu0 0.0
      %1218 = vmatpush1.msra.mxu0 0.0
      %1219 = vmatprep.subr.mxu0 0.0
      %1220 = vmatpush1.msra.mxu0 0.0
      %1221 = vmatprep.subr.mxu0 0.0
      %1222 = vmatpush1.msra.mxu0 0.0
      %1223 = vmatprep.subr.mxu0 0.0
      %1224 = vmatpush1.msra.mxu0 0.0
      %1225 = vmatprep.subr.mxu0 0.0
      %1226 = vmatpush1.msra.mxu0 0.0
      %1227 = vmatprep.subr.mxu0 0.0
      %1228 = vmatpush1.msra.mxu0 0.0
      %1229 = vmatprep.subr.mxu0 0.0
      %1230 = vmatpush1.msra.mxu0 0.0
      %1231 = vmatprep.subr.mxu0 0.0
      %1232 = vmatpush1.msra.mxu0 0.0
      %1233 = vmatprep.subr.mxu0 0.0
      %1234 = vmatpush1.msra.mxu0 0.0
      %1235 = vmatprep.subr.mxu0 0.0
      %1236 = vmatpush1.msra.mxu0 0.0
      %1237 = vmatprep.subr.mxu0 0.0
      %1238 = vmatpush1.msra.mxu0 0.0
      %1239 = vmatprep.subr.mxu0 0.0
      %1240 = vmatpush1.msra.mxu0 0.0
      %1241 = vmatprep.subr.mxu0 0.0
      %1242 = vmatpush1.msra.mxu0 0.0
      %1243 = vmatprep.subr.mxu0 0.0
      %1244 = vmatpush1.msra.mxu0 0.0
      %1245 = vmatprep.subr.mxu0 0.0
      %1246 = vmatpush1.msra.mxu0 0.0
      %1247 = vmatprep.subr.mxu0 0.0
      %1248 = vmatpush1.msra.mxu0 0.0
      %1249 = vmatprep.subr.mxu0 0.0
      %1250 = vmatpush1.msra.mxu0 0.0
      %1251 = vmatprep.subr.mxu0 0.0
      %1252 = vmatpush1.msra.mxu0 0.0
      %1253 = vmatprep.subr.mxu0 0.0
      %1254 = vmatpush1.msra.mxu0 0.0
      %1255 = vmatprep.subr.mxu0 0.0
      %1256 = vmatpush1.msra.mxu0 0.0
      %1257 = vmatprep.subr.mxu0 0.0
      %1258 = vmatpush1.msra.mxu0 0.0
      %1259 = vmatprep.subr.mxu0 0.0
      %1260 = vmatpush1.msra.mxu0 0.0
      %1261 = vmatprep.subr.mxu0 0.0
      %1262 = vmatpush1.msra.mxu0 0.0
      %1263 = vmatprep.subr.mxu0 0.0
      %1264 = vmatpush1.msra.mxu0 0.0
      %1265 = vmatprep.subr.mxu0 0.0
      %1266 = vmatpush1.msra.mxu0 0.0
      %1267 = vmatprep.subr.mxu0 0.0
      %1268 = vmatpush1.msra.mxu0 0.0
      %1269 = vmatprep.subr.mxu0 0.0
      %1270 = vmatpush1.msra.mxu0 0.0
      %1271 = vmatprep.subr.mxu0 0.0
      %1272 = vmatpush1.msra.mxu0 0.0
      %1273 = vmatprep.subr.mxu0 0.0
      %1274 = vmatpush1.msra.mxu0 0.0
      %1275 = vmatprep.mubr.f32.mxu0 0.0
      %1276 = vmatmul.mubr.f32.gmra.mrb[0].mxu0 %v990
      %v1277 = vpop.f32.mrb[0].mxu0
      %v1278 = vadd.f32 0.0, %v1277
      %v1279 = vpop.f32.mrb[0].mxu0
      %1280 = vdwg.mxu0
      %s1281 = scalar_lea.vmem %s1, 64
      %v1282 = vld [vmem:[%s1281] sm:$0xff]
      %v1283 = vld [vmem:[%s1281 + $0x8] sm:$0xff]
      %1284 = vmatprep.subr.mxu0 0.0
      %1285 = vmatpush1.msra.mxu0 %v1282
      %1286 = vmatprep.subr.mxu0 0.0
      %1287 = vmatpush1.msra.mxu0 %v1283
      %1288 = vmatprep.subr.mxu0 0.0
      %1289 = vmatpush1.msra.mxu0 0.0
      %1290 = vmatprep.subr.mxu0 0.0
      %1291 = vmatpush1.msra.mxu0 0.0
      %1292 = vmatprep.subr.mxu0 0.0
      %1293 = vmatpush1.msra.mxu0 0.0
      %1294 = vmatprep.subr.mxu0 0.0
      %1295 = vmatpush1.msra.mxu0 0.0
      %1296 = vmatprep.subr.mxu0 0.0
      %1297 = vmatpush1.msra.mxu0 0.0
      %1298 = vmatprep.subr.mxu0 0.0
      %1299 = vmatpush1.msra.mxu0 0.0
      %1300 = vmatprep.subr.mxu0 0.0
      %1301 = vmatpush1.msra.mxu0 0.0
      %1302 = vmatprep.subr.mxu0 0.0
      %1303 = vmatpush1.msra.mxu0 0.0
      %1304 = vmatprep.subr.mxu0 0.0
      %1305 = vmatpush1.msra.mxu0 0.0
      %1306 = vmatprep.subr.mxu0 0.0
      %1307 = vmatpush1.msra.mxu0 0.0
      %1308 = vmatprep.subr.mxu0 0.0
      %1309 = vmatpush1.msra.mxu0 0.0
      %1310 = vmatprep.subr.mxu0 0.0
      %1311 = vmatpush1.msra.mxu0 0.0
      %1312 = vmatprep.subr.mxu0 0.0
      %1313 = vmatpush1.msra.mxu0 0.0
      %1314 = vmatprep.subr.mxu0 0.0
      %1315 = vmatpush1.msra.mxu0 0.0
      %1316 = vmatprep.subr.mxu0 0.0
      %1317 = vmatpush1.msra.mxu0 0.0
      %1318 = vmatprep.subr.mxu0 0.0
      %1319 = vmatpush1.msra.mxu0 0.0
      %1320 = vmatprep.subr.mxu0 0.0
      %1321 = vmatpush1.msra.mxu0 0.0
      %1322 = vmatprep.subr.mxu0 0.0
      %1323 = vmatpush1.msra.mxu0 0.0
      %1324 = vmatprep.subr.mxu0 0.0
      %1325 = vmatpush1.msra.mxu0 0.0
      %1326 = vmatprep.subr.mxu0 0.0
      %1327 = vmatpush1.msra.mxu0 0.0
      %1328 = vmatprep.subr.mxu0 0.0
      %1329 = vmatpush1.msra.mxu0 0.0
      %1330 = vmatprep.subr.mxu0 0.0
      %1331 = vmatpush1.msra.mxu0 0.0
      %1332 = vmatprep.subr.mxu0 0.0
      %1333 = vmatpush1.msra.mxu0 0.0
      %1334 = vmatprep.subr.mxu0 0.0
      %1335 = vmatpush1.msra.mxu0 0.0
      %1336 = vmatprep.subr.mxu0 0.0
      %1337 = vmatpush1.msra.mxu0 0.0
      %1338 = vmatprep.subr.mxu0 0.0
      %1339 = vmatpush1.msra.mxu0 0.0
      %1340 = vmatprep.subr.mxu0 0.0
      %1341 = vmatpush1.msra.mxu0 0.0
      %1342 = vmatprep.subr.mxu0 0.0
      %1343 = vmatpush1.msra.mxu0 0.0
      %1344 = vmatprep.subr.mxu0 0.0
      %1345 = vmatpush1.msra.mxu0 0.0
      %1346 = vmatprep.subr.mxu0 0.0
      %1347 = vmatpush1.msra.mxu0 0.0
      %1348 = vmatprep.mubr.f32.mxu0 0.0
      %1349 = vmatmul.mubr.f32.gmra.mrb[0].mxu0 %v990
      %v1350 = vpop.f32.mrb[0].mxu0
      %v1351 = vadd.f32 0.0, %v1350
      %v1352 = vpop.f32.mrb[0].mxu0
      %1353 = vdwg.mxu0
      %s1354 = scalar_lea.vmem %s1, 80
      %v1355 = vld [vmem:[%s1354] sm:$0xff]
      %v1356 = vld [vmem:[%s1354 + $0x8] sm:$0xff]
      %1357 = vmatprep.subr.mxu0 0.0
      %1358 = vmatpush1.msra.mxu0 %v1355
      %1359 = vmatprep.subr.mxu0 0.0
      %1360 = vmatpush1.msra.mxu0 %v1356
      %1361 = vmatprep.subr.mxu0 0.0
      %1362 = vmatpush1.msra.mxu0 0.0
      %1363 = vmatprep.subr.mxu0 0.0
      %1364 = vmatpush1.msra.mxu0 0.0
      %1365 = vmatprep.subr.mxu0 0.0
      %1366 = vmatpush1.msra.mxu0 0.0
      %1367 = vmatprep.subr.mxu0 0.0
      %1368 = vmatpush1.msra.mxu0 0.0
      %1369 = vmatprep.subr.mxu0 0.0
      %1370 = vmatpush1.msra.mxu0 0.0
      %1371 = vmatprep.subr.mxu0 0.0
      %1372 = vmatpush1.msra.mxu0 0.0
      %1373 = vmatprep.subr.mxu0 0.0
      %1374 = vmatpush1.msra.mxu0 0.0
      %1375 = vmatprep.subr.mxu0 0.0
      %1376 = vmatpush1.msra.mxu0 0.0
      %1377 = vmatprep.subr.mxu0 0.0
      %1378 = vmatpush1.msra.mxu0 0.0
      %1379 = vmatprep.subr.mxu0 0.0
      %1380 = vmatpush1.msra.mxu0 0.0
      %1381 = vmatprep.subr.mxu0 0.0
      %1382 = vmatpush1.msra.mxu0 0.0
      %1383 = vmatprep.subr.mxu0 0.0
      %1384 = vmatpush1.msra.mxu0 0.0
      %1385 = vmatprep.subr.mxu0 0.0
      %1386 = vmatpush1.msra.mxu0 0.0
      %1387 = vmatprep.subr.mxu0 0.0
      %1388 = vmatpush1.msra.mxu0 0.0
      %1389 = vmatprep.subr.mxu0 0.0
      %1390 = vmatpush1.msra.mxu0 0.0
      %1391 = vmatprep.subr.mxu0 0.0
      %1392 = vmatpush1.msra.mxu0 0.0
      %1393 = vmatprep.subr.mxu0 0.0
      %1394 = vmatpush1.msra.mxu0 0.0
      %1395 = vmatprep.subr.mxu0 0.0
      %1396 = vmatpush1.msra.mxu0 0.0
      %1397 = vmatprep.subr.mxu0 0.0
      %1398 = vmatpush1.msra.mxu0 0.0
      %1399 = vmatprep.subr.mxu0 0.0
      %1400 = vmatpush1.msra.mxu0 0.0
      %1401 = vmatprep.subr.mxu0 0.0
      %1402 = vmatpush1.msra.mxu0 0.0
      %1403 = vmatprep.subr.mxu0 0.0
      %1404 = vmatpush1.msra.mxu0 0.0
      %1405 = vmatprep.subr.mxu0 0.0
      %1406 = vmatpush1.msra.mxu0 0.0
      %1407 = vmatprep.subr.mxu0 0.0
      %1408 = vmatpush1.msra.mxu0 0.0
      %1409 = vmatprep.subr.mxu0 0.0
      %1410 = vmatpush1.msra.mxu0 0.0
      %1411 = vmatprep.subr.mxu0 0.0
      %1412 = vmatpush1.msra.mxu0 0.0
      %1413 = vmatprep.subr.mxu0 0.0
      %1414 = vmatpush1.msra.mxu0 0.0
      %1415 = vmatprep.subr.mxu0 0.0
      %1416 = vmatpush1.msra.mxu0 0.0
      %1417 = vmatprep.subr.mxu0 0.0
      %1418 = vmatpush1.msra.mxu0 0.0
      %1419 = vmatprep.subr.mxu0 0.0
      %1420 = vmatpush1.msra.mxu0 0.0
      %1421 = vmatprep.mubr.f32.mxu0 0.0
      %1422 = vmatmul.mubr.f32.gmra.mrb[0].mxu0 %v990
      %v1423 = vpop.f32.mrb[0].mxu0
      %v1424 = vadd.f32 0.0, %v1423
      %v1425 = vpop.f32.mrb[0].mxu0
      %1426 = vdwg.mxu0
      %s1427 = scalar_lea.vmem %s1, 96
      %v1428 = vld [vmem:[%s1427] sm:$0xff]
      %v1429 = vld [vmem:[%s1427 + $0x8] sm:$0xff]
      %1430 = vmatprep.subr.mxu0 0.0
      %1431 = vmatpush1.msra.mxu0 %v1428
      %1432 = vmatprep.subr.mxu0 0.0
      %1433 = vmatpush1.msra.mxu0 %v1429
      %1434 = vmatprep.subr.mxu0 0.0
      %1435 = vmatpush1.msra.mxu0 0.0
      %1436 = vmatprep.subr.mxu0 0.0
      %1437 = vmatpush1.msra.mxu0 0.0
      %1438 = vmatprep.subr.mxu0 0.0
      %1439 = vmatpush1.msra.mxu0 0.0
      %1440 = vmatprep.subr.mxu0 0.0
      %1441 = vmatpush1.msra.mxu0 0.0
      %1442 = vmatprep.subr.mxu0 0.0
      %1443 = vmatpush1.msra.mxu0 0.0
      %1444 = vmatprep.subr.mxu0 0.0
      %1445 = vmatpush1.msra.mxu0 0.0
      %1446 = vmatprep.subr.mxu0 0.0
      %1447 = vmatpush1.msra.mxu0 0.0
      %1448 = vmatprep.subr.mxu0 0.0
      %1449 = vmatpush1.msra.mxu0 0.0
      %1450 = vmatprep.subr.mxu0 0.0
      %1451 = vmatpush1.msra.mxu0 0.0
      %1452 = vmatprep.subr.mxu0 0.0
      %1453 = vmatpush1.msra.mxu0 0.0
      %1454 = vmatprep.subr.mxu0 0.0
      %1455 = vmatpush1.msra.mxu0 0.0
      %1456 = vmatprep.subr.mxu0 0.0
      %1457 = vmatpush1.msra.mxu0 0.0
      %1458 = vmatprep.subr.mxu0 0.0
      %1459 = vmatpush1.msra.mxu0 0.0
      %1460 = vmatprep.subr.mxu0 0.0
      %1461 = vmatpush1.msra.mxu0 0.0
      %1462 = vmatprep.subr.mxu0 0.0
      %1463 = vmatpush1.msra.mxu0 0.0
      %1464 = vmatprep.subr.mxu0 0.0
      %1465 = vmatpush1.msra.mxu0 0.0
      %1466 = vmatprep.subr.mxu0 0.0
      %1467 = vmatpush1.msra.mxu0 0.0
      %1468 = vmatprep.subr.mxu0 0.0
      %1469 = vmatpush1.msra.mxu0 0.0
      %1470 = vmatprep.subr.mxu0 0.0
      %1471 = vmatpush1.msra.mxu0 0.0
      %1472 = vmatprep.subr.mxu0 0.0
      %1473 = vmatpush1.msra.mxu0 0.0
      %1474 = vmatprep.subr.mxu0 0.0
      %1475 = vmatpush1.msra.mxu0 0.0
      %1476 = vmatprep.subr.mxu0 0.0
      %1477 = vmatpush1.msra.mxu0 0.0
      %1478 = vmatprep.subr.mxu0 0.0
      %1479 = vmatpush1.msra.mxu0 0.0
      %1480 = vmatprep.subr.mxu0 0.0
      %1481 = vmatpush1.msra.mxu0 0.0
      %1482 = vmatprep.subr.mxu0 0.0
      %1483 = vmatpush1.msra.mxu0 0.0
      %1484 = vmatprep.subr.mxu0 0.0
      %1485 = vmatpush1.msra.mxu0 0.0
      %1486 = vmatprep.subr.mxu0 0.0
      %1487 = vmatpush1.msra.mxu0 0.0
      %1488 = vmatprep.subr.mxu0 0.0
      %1489 = vmatpush1.msra.mxu0 0.0
      %1490 = vmatprep.subr.mxu0 0.0
      %1491 = vmatpush1.msra.mxu0 0.0
      %1492 = vmatprep.subr.mxu0 0.0
      %1493 = vmatpush1.msra.mxu0 0.0
      %1494 = vmatprep.mubr.f32.mxu0 0.0
      %1495 = vmatmul.mubr.f32.gmra.mrb[0].mxu0 %v990
      %v1496 = vpop.f32.mrb[0].mxu0
      %v1497 = vadd.f32 0.0, %v1496
      %v1498 = vpop.f32.mrb[0].mxu0
      %1499 = vdwg.mxu0
      %s1500 = scalar_lea.vmem %s1, 112
      %v1501 = vld [vmem:[%s1500] sm:$0xff]
      %v1502 = vld [vmem:[%s1500 + $0x8] sm:$0xff]
      %1503 = vmatprep.subr.mxu0 0.0
      %1504 = vmatpush1.msra.mxu0 %v1501
      %1505 = vmatprep.subr.mxu0 0.0
      %1506 = vmatpush1.msra.mxu0 %v1502
      %1507 = vmatprep.subr.mxu0 0.0
      %1508 = vmatpush1.msra.mxu0 0.0
      %1509 = vmatprep.subr.mxu0 0.0
      %1510 = vmatpush1.msra.mxu0 0.0
      %1511 = vmatprep.subr.mxu0 0.0
      %1512 = vmatpush1.msra.mxu0 0.0
      %1513 = vmatprep.subr.mxu0 0.0
      %1514 = vmatpush1.msra.mxu0 0.0
      %1515 = vmatprep.subr.mxu0 0.0
      %1516 = vmatpush1.msra.mxu0 0.0
      %1517 = vmatprep.subr.mxu0 0.0
      %1518 = vmatpush1.msra.mxu0 0.0
      %1519 = vmatprep.subr.mxu0 0.0
      %1520 = vmatpush1.msra.mxu0 0.0
      %1521 = vmatprep.subr.mxu0 0.0
      %1522 = vmatpush1.msra.mxu0 0.0
      %1523 = vmatprep.subr.mxu0 0.0
      %1524 = vmatpush1.msra.mxu0 0.0
      %1525 = vmatprep.subr.mxu0 0.0
      %1526 = vmatpush1.msra.mxu0 0.0
      %1527 = vmatprep.subr.mxu0 0.0
      %1528 = vmatpush1.msra.mxu0 0.0
      %1529 = vmatprep.subr.mxu0 0.0
      %1530 = vmatpush1.msra.mxu0 0.0
      %1531 = vmatprep.subr.mxu0 0.0
      %1532 = vmatpush1.msra.mxu0 0.0
      %1533 = vmatprep.subr.mxu0 0.0
      %1534 = vmatpush1.msra.mxu0 0.0
      %1535 = vmatprep.subr.mxu0 0.0
      %1536 = vmatpush1.msra.mxu0 0.0
      %1537 = vmatprep.subr.mxu0 0.0
      %1538 = vmatpush1.msra.mxu0 0.0
      %1539 = vmatprep.subr.mxu0 0.0
      %1540 = vmatpush1.msra.mxu0 0.0
      %1541 = vmatprep.subr.mxu0 0.0
      %1542 = vmatpush1.msra.mxu0 0.0
      %1543 = vmatprep.subr.mxu0 0.0
      %1544 = vmatpush1.msra.mxu0 0.0
      %1545 = vmatprep.subr.mxu0 0.0
      %1546 = vmatpush1.msra.mxu0 0.0
      %1547 = vmatprep.subr.mxu0 0.0
      %1548 = vmatpush1.msra.mxu0 0.0
      %1549 = vmatprep.subr.mxu0 0.0
      %1550 = vmatpush1.msra.mxu0 0.0
      %1551 = vmatprep.subr.mxu0 0.0
      %1552 = vmatpush1.msra.mxu0 0.0
      %1553 = vmatprep.subr.mxu0 0.0
      %1554 = vmatpush1.msra.mxu0 0.0
      %1555 = vmatprep.subr.mxu0 0.0
      %1556 = vmatpush1.msra.mxu0 0.0
      %1557 = vmatprep.subr.mxu0 0.0
      %1558 = vmatpush1.msra.mxu0 0.0
      %1559 = vmatprep.subr.mxu0 0.0
      %1560 = vmatpush1.msra.mxu0 0.0
      %1561 = vmatprep.subr.mxu0 0.0
      %1562 = vmatpush1.msra.mxu0 0.0
      %1563 = vmatprep.subr.mxu0 0.0
      %1564 = vmatpush1.msra.mxu0 0.0
      %1565 = vmatprep.subr.mxu0 0.0
      %1566 = vmatpush1.msra.mxu0 0.0
      %1567 = vmatprep.mubr.f32.mxu0 0.0
      %1568 = vmatmul.mubr.f32.gmra.mrb[0].mxu0 %v990
      %v1569 = vpop.f32.mrb[0].mxu0
      %v1570 = vadd.f32 0.0, %v1569
      %v1571 = vpop.f32.mrb[0].mxu0
      %1572 = vdwg.mxu0
      %s1573 = scalar_lea.vmem %s1, 128
      %v1574 = vld [vmem:[%s1573] sm:$0xff]
      %v1575 = vld [vmem:[%s1573 + $0x8] sm:$0xff]
      %1576 = vmatprep.subr.mxu0 0.0
      %1577 = vmatpush1.msra.mxu0 %v1574
      %1578 = vmatprep.subr.mxu0 0.0
      %1579 = vmatpush1.msra.mxu0 %v1575
      %1580 = vmatprep.subr.mxu0 0.0
      %1581 = vmatpush1.msra.mxu0 0.0
      %1582 = vmatprep.subr.mxu0 0.0
      %1583 = vmatpush1.msra.mxu0 0.0
      %1584 = vmatprep.subr.mxu0 0.0
      %1585 = vmatpush1.msra.mxu0 0.0
      %1586 = vmatprep.subr.mxu0 0.0
      %1587 = vmatpush1.msra.mxu0 0.0
      %1588 = vmatprep.subr.mxu0 0.0
      %1589 = vmatpush1.msra.mxu0 0.0
      %1590 = vmatprep.subr.mxu0 0.0
      %1591 = vmatpush1.msra.mxu0 0.0
      %1592 = vmatprep.subr.mxu0 0.0
      %1593 = vmatpush1.msra.mxu0 0.0
      %1594 = vmatprep.subr.mxu0 0.0
      %1595 = vmatpush1.msra.mxu0 0.0
      %1596 = vmatprep.subr.mxu0 0.0
      %1597 = vmatpush1.msra.mxu0 0.0
      %1598 = vmatprep.subr.mxu0 0.0
      %1599 = vmatpush1.msra.mxu0 0.0
      %1600 = vmatprep.subr.mxu0 0.0
      %1601 = vmatpush1.msra.mxu0 0.0
      %1602 = vmatprep.subr.mxu0 0.0
      %1603 = vmatpush1.msra.mxu0 0.0
      %1604 = vmatprep.subr.mxu0 0.0
      %1605 = vmatpush1.msra.mxu0 0.0
      %1606 = vmatprep.subr.mxu0 0.0
      %1607 = vmatpush1.msra.mxu0 0.0
      %1608 = vmatprep.subr.mxu0 0.0
      %1609 = vmatpush1.msra.mxu0 0.0
      %1610 = vmatprep.subr.mxu0 0.0
      %1611 = vmatpush1.msra.mxu0 0.0
      %1612 = vmatprep.subr.mxu0 0.0
      %1613 = vmatpush1.msra.mxu0 0.0
      %1614 = vmatprep.subr.mxu0 0.0
      %1615 = vmatpush1.msra.mxu0 0.0
      %1616 = vmatprep.subr.mxu0 0.0
      %1617 = vmatpush1.msra.mxu0 0.0
      %1618 = vmatprep.subr.mxu0 0.0
      %1619 = vmatpush1.msra.mxu0 0.0
      %1620 = vmatprep.subr.mxu0 0.0
      %1621 = vmatpush1.msra.mxu0 0.0
      %1622 = vmatprep.subr.mxu0 0.0
      %1623 = vmatpush1.msra.mxu0 0.0
      %1624 = vmatprep.subr.mxu0 0.0
      %1625 = vmatpush1.msra.mxu0 0.0
      %1626 = vmatprep.subr.mxu0 0.0
      %1627 = vmatpush1.msra.mxu0 0.0
      %1628 = vmatprep.subr.mxu0 0.0
      %1629 = vmatpush1.msra.mxu0 0.0
      %1630 = vmatprep.subr.mxu0 0.0
      %1631 = vmatpush1.msra.mxu0 0.0
      %1632 = vmatprep.subr.mxu0 0.0
      %1633 = vmatpush1.msra.mxu0 0.0
      %1634 = vmatprep.subr.mxu0 0.0
      %1635 = vmatpush1.msra.mxu0 0.0
      %1636 = vmatprep.subr.mxu0 0.0
      %1637 = vmatpush1.msra.mxu0 0.0
      %1638 = vmatprep.subr.mxu0 0.0
      %1639 = vmatpush1.msra.mxu0 0.0
      %1640 = vmatprep.mubr.f32.mxu0 0.0
      %1641 = vmatmul.mubr.f32.gmra.mrb[0].mxu0 %v990
      %v1642 = vpop.f32.mrb[0].mxu0
      %v1643 = vadd.f32 0.0, %v1642
      %v1644 = vpop.f32.mrb[0].mxu0
      %1645 = vdwg.mxu0
      %v1646 = vld [vmem:[%s12] sm:$0xff]
      %v1647 = vld [vmem:[%s12 + $0x8] sm:$0xff]
      %v1648 = vld [vmem:[%s11] sm:$0xff]
      %v1649 = vld [vmem:[%s11 + $0x8] sm:$0xff]
      %v1651 = vsel %vm832, %v1648, 0
      %v1654 = vsel %vm832, %v1649, 0
      %1656 = vmatprep.subr.mxu0 0.0
      %1657 = vmatpush1.msra.mxu0 %v1059
      %1658 = vmatprep.subr.mxu0 0.0
      %1659 = vmatpush1.msra.mxu0 0.0
      %1660 = vmatprep.subr.mxu0 0.0
      %1661 = vmatpush1.msra.mxu0 0.0
      %1662 = vmatprep.subr.mxu0 0.0
      %1663 = vmatpush1.msra.mxu0 0.0
      %1664 = vmatprep.subr.mxu0 0.0
      %1665 = vmatpush1.msra.mxu0 0.0
      %1666 = vmatprep.subr.mxu0 0.0
      %1667 = vmatpush1.msra.mxu0 0.0
      %1668 = vmatprep.subr.mxu0 0.0
      %1669 = vmatpush1.msra.mxu0 0.0
      %1670 = vmatprep.subr.mxu0 0.0
      %1671 = vmatpush1.msra.mxu0 0.0
      %1672 = vmatprep.subr.mxu0 0.0
      %1673 = vmatpush1.msra.mxu0 0.0
      %1674 = vmatprep.subr.mxu0 0.0
      %1675 = vmatpush1.msra.mxu0 0.0
      %1676 = vmatprep.subr.mxu0 0.0
      %1677 = vmatpush1.msra.mxu0 0.0
      %1678 = vmatprep.subr.mxu0 0.0
      %1679 = vmatpush1.msra.mxu0 0.0
      %1680 = vmatprep.subr.mxu0 0.0
      %1681 = vmatpush1.msra.mxu0 0.0
      %1682 = vmatprep.subr.mxu0 0.0
      %1683 = vmatpush1.msra.mxu0 0.0
      %1684 = vmatprep.subr.mxu0 0.0
      %1685 = vmatpush1.msra.mxu0 0.0
      %1686 = vmatprep.subr.mxu0 0.0
      %1687 = vmatpush1.msra.mxu0 0.0
      %1688 = vmatprep.subr.mxu0 0.0
      %1689 = vmatpush1.msra.mxu0 0.0
      %1690 = vmatprep.subr.mxu0 0.0
      %1691 = vmatpush1.msra.mxu0 0.0
      %1692 = vmatprep.subr.mxu0 0.0
      %1693 = vmatpush1.msra.mxu0 0.0
      %1694 = vmatprep.subr.mxu0 0.0
      %1695 = vmatpush1.msra.mxu0 0.0
      %1696 = vmatprep.subr.mxu0 0.0
      %1697 = vmatpush1.msra.mxu0 0.0
      %1698 = vmatprep.subr.mxu0 0.0
      %1699 = vmatpush1.msra.mxu0 0.0
      %1700 = vmatprep.subr.mxu0 0.0
      %1701 = vmatpush1.msra.mxu0 0.0
      %1702 = vmatprep.subr.mxu0 0.0
      %1703 = vmatpush1.msra.mxu0 0.0
      %1704 = vmatprep.subr.mxu0 0.0
      %1705 = vmatpush1.msra.mxu0 0.0
      %1706 = vmatprep.subr.mxu0 0.0
      %1707 = vmatpush1.msra.mxu0 0.0
      %1708 = vmatprep.subr.mxu0 0.0
      %1709 = vmatpush1.msra.mxu0 0.0
      %1710 = vmatprep.subr.mxu0 0.0
      %1711 = vmatpush1.msra.mxu0 0.0
      %1712 = vmatprep.subr.mxu0 0.0
      %1713 = vmatpush1.msra.mxu0 0.0
      %1714 = vmatprep.subr.mxu0 0.0
      %1715 = vmatpush1.msra.mxu0 0.0
      %1716 = vmatprep.subr.mxu0 0.0
      %1717 = vmatpush1.msra.mxu0 0.0
      %1718 = vmatprep.subr.mxu0 0.0
      %1719 = vmatpush1.msra.mxu0 0.0
      %1720 = vmatprep.mubr.f32.mxu0 0.0
      %1721 = vmatmul.mubr.f32.gmra.mrb[0].mxu0 %v1651
      %v1722 = vpop.f32.mrb[0].mxu0
      %v1723 = vadd.f32 0.0, %v1722
      %v1724 = vpop.f32.mrb[0].mxu0
      %1725 = vmatprep.mubr.f32.mxu0 0.0
      %1726 = vmatmul.mubr.f32.gmra.mrb[0].mxu0 %v1654
      %v1727 = vpop.f32.mrb[0].mxu0
      %v1728 = vadd.f32 0.0, %v1727
      %v1729 = vpop.f32.mrb[0].mxu0
      %1730 = vdwg.mxu0
      %1732 = vset.pattern.permute.xlu0 0
      %1733 = vperm.xlu0 %1732, %v1646
      %v1734 = vpop.permute.xlu0 %1733
      %1737 = vset.pattern.permute.xlu0 0
      %1738 = vperm.xlu0 %1737, %v1647
      %v1739 = vpop.permute.xlu0 %1738
      %v1741 = vadd.f32 %v1734, %v1723
      %v1742 = vadd.f32 %v1739, %v1728
      %s1743 = scalar_lea.vmem %s11, 16
      %v1744 = vld [vmem:[%s1743] sm:$0xff]
      %v1745 = vld [vmem:[%s1743 + $0x8] sm:$0xff]
      %v1747 = vsel %vm832, %v1744, 0
      %v1750 = vsel %vm832, %v1745, 0
      %1752 = vmatprep.subr.mxu0 0.0
      %1753 = vmatpush1.msra.mxu0 %v1132
      %1754 = vmatprep.subr.mxu0 0.0
      %1755 = vmatpush1.msra.mxu0 0.0
      %1756 = vmatprep.subr.mxu0 0.0
      %1757 = vmatpush1.msra.mxu0 0.0
      %1758 = vmatprep.subr.mxu0 0.0
      %1759 = vmatpush1.msra.mxu0 0.0
      %1760 = vmatprep.subr.mxu0 0.0
      %1761 = vmatpush1.msra.mxu0 0.0
      %1762 = vmatprep.subr.mxu0 0.0
      %1763 = vmatpush1.msra.mxu0 0.0
      %1764 = vmatprep.subr.mxu0 0.0
      %1765 = vmatpush1.msra.mxu0 0.0
      %1766 = vmatprep.subr.mxu0 0.0
      %1767 = vmatpush1.msra.mxu0 0.0
      %1768 = vmatprep.subr.mxu0 0.0
      %1769 = vmatpush1.msra.mxu0 0.0
      %1770 = vmatprep.subr.mxu0 0.0
      %1771 = vmatpush1.msra.mxu0 0.0
      %1772 = vmatprep.subr.mxu0 0.0
      %1773 = vmatpush1.msra.mxu0 0.0
      %1774 = vmatprep.subr.mxu0 0.0
      %1775 = vmatpush1.msra.mxu0 0.0
      %1776 = vmatprep.subr.mxu0 0.0
      %1777 = vmatpush1.msra.mxu0 0.0
      %1778 = vmatprep.subr.mxu0 0.0
      %1779 = vmatpush1.msra.mxu0 0.0
      %1780 = vmatprep.subr.mxu0 0.0
      %1781 = vmatpush1.msra.mxu0 0.0
      %1782 = vmatprep.subr.mxu0 0.0
      %1783 = vmatpush1.msra.mxu0 0.0
      %1784 = vmatprep.subr.mxu0 0.0
      %1785 = vmatpush1.msra.mxu0 0.0
      %1786 = vmatprep.subr.mxu0 0.0
      %1787 = vmatpush1.msra.mxu0 0.0
      %1788 = vmatprep.subr.mxu0 0.0
      %1789 = vmatpush1.msra.mxu0 0.0
      %1790 = vmatprep.subr.mxu0 0.0
      %1791 = vmatpush1.msra.mxu0 0.0
      %1792 = vmatprep.subr.mxu0 0.0
      %1793 = vmatpush1.msra.mxu0 0.0
      %1794 = vmatprep.subr.mxu0 0.0
      %1795 = vmatpush1.msra.mxu0 0.0
      %1796 = vmatprep.subr.mxu0 0.0
      %1797 = vmatpush1.msra.mxu0 0.0
      %1798 = vmatprep.subr.mxu0 0.0
      %1799 = vmatpush1.msra.mxu0 0.0
      %1800 = vmatprep.subr.mxu0 0.0
      %1801 = vmatpush1.msra.mxu0 0.0
      %1802 = vmatprep.subr.mxu0 0.0
      %1803 = vmatpush1.msra.mxu0 0.0
      %1804 = vmatprep.subr.mxu0 0.0
      %1805 = vmatpush1.msra.mxu0 0.0
      %1806 = vmatprep.subr.mxu0 0.0
      %1807 = vmatpush1.msra.mxu0 0.0
      %1808 = vmatprep.subr.mxu0 0.0
      %1809 = vmatpush1.msra.mxu0 0.0
      %1810 = vmatprep.subr.mxu0 0.0
      %1811 = vmatpush1.msra.mxu0 0.0
      %1812 = vmatprep.subr.mxu0 0.0
      %1813 = vmatpush1.msra.mxu0 0.0
      %1814 = vmatprep.subr.mxu0 0.0
      %1815 = vmatpush1.msra.mxu0 0.0
      %1816 = vmatprep.mubr.f32.mxu0 0.0
      %1817 = vmatmul.mubr.f32.gmra.mrb[0].mxu0 %v1747
      %v1818 = vpop.f32.mrb[0].mxu0
      %v1819 = vadd.f32 0.0, %v1818
      %v1820 = vpop.f32.mrb[0].mxu0
      %1821 = vmatprep.mubr.f32.mxu0 0.0
      %1822 = vmatmul.mubr.f32.gmra.mrb[0].mxu0 %v1750
      %v1823 = vpop.f32.mrb[0].mxu0
      %v1824 = vadd.f32 0.0, %v1823
      %v1825 = vpop.f32.mrb[0].mxu0
      %1826 = vdwg.mxu0
      %v1827 = vadd.f32 %v1741, %v1819
      %v1828 = vadd.f32 %v1742, %v1824
      %s1829 = scalar_lea.vmem %s11, 32
      %v1830 = vld [vmem:[%s1829] sm:$0xff]
      %v1831 = vld [vmem:[%s1829 + $0x8] sm:$0xff]
      %v1833 = vsel %vm832, %v1830, 0
      %v1836 = vsel %vm832, %v1831, 0
      %1838 = vmatprep.subr.mxu0 0.0
      %1839 = vmatpush1.msra.mxu0 %v1205
      %1840 = vmatprep.subr.mxu0 0.0
      %1841 = vmatpush1.msra.mxu0 0.0
      %1842 = vmatprep.subr.mxu0 0.0
      %1843 = vmatpush1.msra.mxu0 0.0
      %1844 = vmatprep.subr.mxu0 0.0
      %1845 = vmatpush1.msra.mxu0 0.0
      %1846 = vmatprep.subr.mxu0 0.0
      %1847 = vmatpush1.msra.mxu0 0.0
      %1848 = vmatprep.subr.mxu0 0.0
      %1849 = vmatpush1.msra.mxu0 0.0
      %1850 = vmatprep.subr.mxu0 0.0
      %1851 = vmatpush1.msra.mxu0 0.0
      %1852 = vmatprep.subr.mxu0 0.0
      %1853 = vmatpush1.msra.mxu0 0.0
      %1854 = vmatprep.subr.mxu0 0.0
      %1855 = vmatpush1.msra.mxu0 0.0
      %1856 = vmatprep.subr.mxu0 0.0
      %1857 = vmatpush1.msra.mxu0 0.0
      %1858 = vmatprep.subr.mxu0 0.0
      %1859 = vmatpush1.msra.mxu0 0.0
      %1860 = vmatprep.subr.mxu0 0.0
      %1861 = vmatpush1.msra.mxu0 0.0
      %1862 = vmatprep.subr.mxu0 0.0
      %1863 = vmatpush1.msra.mxu0 0.0
      %1864 = vmatprep.subr.mxu0 0.0
      %1865 = vmatpush1.msra.mxu0 0.0
      %1866 = vmatprep.subr.mxu0 0.0
      %1867 = vmatpush1.msra.mxu0 0.0
      %1868 = vmatprep.subr.mxu0 0.0
      %1869 = vmatpush1.msra.mxu0 0.0
      %1870 = vmatprep.subr.mxu0 0.0
      %1871 = vmatpush1.msra.mxu0 0.0
      %1872 = vmatprep.subr.mxu0 0.0
      %1873 = vmatpush1.msra.mxu0 0.0
      %1874 = vmatprep.subr.mxu0 0.0
      %1875 = vmatpush1.msra.mxu0 0.0
      %1876 = vmatprep.subr.mxu0 0.0
      %1877 = vmatpush1.msra.mxu0 0.0
      %1878 = vmatprep.subr.mxu0 0.0
      %1879 = vmatpush1.msra.mxu0 0.0
      %1880 = vmatprep.subr.mxu0 0.0
      %1881 = vmatpush1.msra.mxu0 0.0
      %1882 = vmatprep.subr.mxu0 0.0
      %1883 = vmatpush1.msra.mxu0 0.0
      %1884 = vmatprep.subr.mxu0 0.0
      %1885 = vmatpush1.msra.mxu0 0.0
      %1886 = vmatprep.subr.mxu0 0.0
      %1887 = vmatpush1.msra.mxu0 0.0
      %1888 = vmatprep.subr.mxu0 0.0
      %1889 = vmatpush1.msra.mxu0 0.0
      %1890 = vmatprep.subr.mxu0 0.0
      %1891 = vmatpush1.msra.mxu0 0.0
      %1892 = vmatprep.subr.mxu0 0.0
      %1893 = vmatpush1.msra.mxu0 0.0
      %1894 = vmatprep.subr.mxu0 0.0
      %1895 = vmatpush1.msra.mxu0 0.0
      %1896 = vmatprep.subr.mxu0 0.0
      %1897 = vmatpush1.msra.mxu0 0.0
      %1898 = vmatprep.subr.mxu0 0.0
      %1899 = vmatpush1.msra.mxu0 0.0
      %1900 = vmatprep.subr.mxu0 0.0
      %1901 = vmatpush1.msra.mxu0 0.0
      %1902 = vmatprep.mubr.f32.mxu0 0.0
      %1903 = vmatmul.mubr.f32.gmra.mrb[0].mxu0 %v1833
      %v1904 = vpop.f32.mrb[0].mxu0
      %v1905 = vadd.f32 0.0, %v1904
      %v1906 = vpop.f32.mrb[0].mxu0
      %1907 = vmatprep.mubr.f32.mxu0 0.0
      %1908 = vmatmul.mubr.f32.gmra.mrb[0].mxu0 %v1836
      %v1909 = vpop.f32.mrb[0].mxu0
      %v1910 = vadd.f32 0.0, %v1909
      %v1911 = vpop.f32.mrb[0].mxu0
      %1912 = vdwg.mxu0
      %v1913 = vadd.f32 %v1827, %v1905
      %v1914 = vadd.f32 %v1828, %v1910
      %s1915 = scalar_lea.vmem %s11, 48
      %v1916 = vld [vmem:[%s1915] sm:$0xff]
      %v1917 = vld [vmem:[%s1915 + $0x8] sm:$0xff]
      %v1919 = vsel %vm832, %v1916, 0
      %v1922 = vsel %vm832, %v1917, 0
      %1924 = vmatprep.subr.mxu0 0.0
      %1925 = vmatpush1.msra.mxu0 %v1278
      %1926 = vmatprep.subr.mxu0 0.0
      %1927 = vmatpush1.msra.mxu0 0.0
      %1928 = vmatprep.subr.mxu0 0.0
      %1929 = vmatpush1.msra.mxu0 0.0
      %1930 = vmatprep.subr.mxu0 0.0
      %1931 = vmatpush1.msra.mxu0 0.0
      %1932 = vmatprep.subr.mxu0 0.0
      %1933 = vmatpush1.msra.mxu0 0.0
      %1934 = vmatprep.subr.mxu0 0.0
      %1935 = vmatpush1.msra.mxu0 0.0
      %1936 = vmatprep.subr.mxu0 0.0
      %1937 = vmatpush1.msra.mxu0 0.0
      %1938 = vmatprep.subr.mxu0 0.0
      %1939 = vmatpush1.msra.mxu0 0.0
      %1940 = vmatprep.subr.mxu0 0.0
      %1941 = vmatpush1.msra.mxu0 0.0
      %1942 = vmatprep.subr.mxu0 0.0
      %1943 = vmatpush1.msra.mxu0 0.0
      %1944 = vmatprep.subr.mxu0 0.0
      %1945 = vmatpush1.msra.mxu0 0.0
      %1946 = vmatprep.subr.mxu0 0.0
      %1947 = vmatpush1.msra.mxu0 0.0
      %1948 = vmatprep.subr.mxu0 0.0
      %1949 = vmatpush1.msra.mxu0 0.0
      %1950 = vmatprep.subr.mxu0 0.0
      %1951 = vmatpush1.msra.mxu0 0.0
      %1952 = vmatprep.subr.mxu0 0.0
      %1953 = vmatpush1.msra.mxu0 0.0
      %1954 = vmatprep.subr.mxu0 0.0
      %1955 = vmatpush1.msra.mxu0 0.0
      %1956 = vmatprep.subr.mxu0 0.0
      %1957 = vmatpush1.msra.mxu0 0.0
      %1958 = vmatprep.subr.mxu0 0.0
      %1959 = vmatpush1.msra.mxu0 0.0
      %1960 = vmatprep.subr.mxu0 0.0
      %1961 = vmatpush1.msra.mxu0 0.0
      %1962 = vmatprep.subr.mxu0 0.0
      %1963 = vmatpush1.msra.mxu0 0.0
      %1964 = vmatprep.subr.mxu0 0.0
      %1965 = vmatpush1.msra.mxu0 0.0
      %1966 = vmatprep.subr.mxu0 0.0
      %1967 = vmatpush1.msra.mxu0 0.0
      %1968 = vmatprep.subr.mxu0 0.0
      %1969 = vmatpush1.msra.mxu0 0.0
      %1970 = vmatprep.subr.mxu0 0.0
      %1971 = vmatpush1.msra.mxu0 0.0
      %1972 = vmatprep.subr.mxu0 0.0
      %1973 = vmatpush1.msra.mxu0 0.0
      %1974 = vmatprep.subr.mxu0 0.0
      %1975 = vmatpush1.msra.mxu0 0.0
      %1976 = vmatprep.subr.mxu0 0.0
      %1977 = vmatpush1.msra.mxu0 0.0
      %1978 = vmatprep.subr.mxu0 0.0
      %1979 = vmatpush1.msra.mxu0 0.0
      %1980 = vmatprep.subr.mxu0 0.0
      %1981 = vmatpush1.msra.mxu0 0.0
      %1982 = vmatprep.subr.mxu0 0.0
      %1983 = vmatpush1.msra.mxu0 0.0
      %1984 = vmatprep.subr.mxu0 0.0
      %1985 = vmatpush1.msra.mxu0 0.0
      %1986 = vmatprep.subr.mxu0 0.0
      %1987 = vmatpush1.msra.mxu0 0.0
      %1988 = vmatprep.mubr.f32.mxu0 0.0
      %1989 = vmatmul.mubr.f32.gmra.mrb[0].mxu0 %v1919
      %v1990 = vpop.f32.mrb[0].mxu0
      %v1991 = vadd.f32 0.0, %v1990
      %v1992 = vpop.f32.mrb[0].mxu0
      %1993 = vmatprep.mubr.f32.mxu0 0.0
      %1994 = vmatmul.mubr.f32.gmra.mrb[0].mxu0 %v1922
      %v1995 = vpop.f32.mrb[0].mxu0
      %v1996 = vadd.f32 0.0, %v1995
      %v1997 = vpop.f32.mrb[0].mxu0
      %1998 = vdwg.mxu0
      %v1999 = vadd.f32 %v1913, %v1991
      %v2000 = vadd.f32 %v1914, %v1996
      %s2001 = scalar_lea.vmem %s11, 64
      %v2002 = vld [vmem:[%s2001] sm:$0xff]
      %v2003 = vld [vmem:[%s2001 + $0x8] sm:$0xff]
      %v2005 = vsel %vm832, %v2002, 0
      %v2008 = vsel %vm832, %v2003, 0
      %2010 = vmatprep.subr.mxu0 0.0
      %2011 = vmatpush1.msra.mxu0 %v1351
      %2012 = vmatprep.subr.mxu0 0.0
      %2013 = vmatpush1.msra.mxu0 0.0
      %2014 = vmatprep.subr.mxu0 0.0
      %2015 = vmatpush1.msra.mxu0 0.0
      %2016 = vmatprep.subr.mxu0 0.0
      %2017 = vmatpush1.msra.mxu0 0.0
      %2018 = vmatprep.subr.mxu0 0.0
      %2019 = vmatpush1.msra.mxu0 0.0
      %2020 = vmatprep.subr.mxu0 0.0
      %2021 = vmatpush1.msra.mxu0 0.0
      %2022 = vmatprep.subr.mxu0 0.0
      %2023 = vmatpush1.msra.mxu0 0.0
      %2024 = vmatprep.subr.mxu0 0.0
      %2025 = vmatpush1.msra.mxu0 0.0
      %2026 = vmatprep.subr.mxu0 0.0
      %2027 = vmatpush1.msra.mxu0 0.0
      %2028 = vmatprep.subr.mxu0 0.0
      %2029 = vmatpush1.msra.mxu0 0.0
      %2030 = vmatprep.subr.mxu0 0.0
      %2031 = vmatpush1.msra.mxu0 0.0
      %2032 = vmatprep.subr.mxu0 0.0
      %2033 = vmatpush1.msra.mxu0 0.0
      %2034 = vmatprep.subr.mxu0 0.0
      %2035 = vmatpush1.msra.mxu0 0.0
      %2036 = vmatprep.subr.mxu0 0.0
      %2037 = vmatpush1.msra.mxu0 0.0
      %2038 = vmatprep.subr.mxu0 0.0
      %2039 = vmatpush1.msra.mxu0 0.0
      %2040 = vmatprep.subr.mxu0 0.0
      %2041 = vmatpush1.msra.mxu0 0.0
      %2042 = vmatprep.subr.mxu0 0.0
      %2043 = vmatpush1.msra.mxu0 0.0
      %2044 = vmatprep.subr.mxu0 0.0
      %2045 = vmatpush1.msra.mxu0 0.0
      %2046 = vmatprep.subr.mxu0 0.0
      %2047 = vmatpush1.msra.mxu0 0.0
      %2048 = vmatprep.subr.mxu0 0.0
      %2049 = vmatpush1.msra.mxu0 0.0
      %2050 = vmatprep.subr.mxu0 0.0
      %2051 = vmatpush1.msra.mxu0 0.0
      %2052 = vmatprep.subr.mxu0 0.0
      %2053 = vmatpush1.msra.mxu0 0.0
      %2054 = vmatprep.subr.mxu0 0.0
      %2055 = vmatpush1.msra.mxu0 0.0
      %2056 = vmatprep.subr.mxu0 0.0
      %2057 = vmatpush1.msra.mxu0 0.0
      %2058 = vmatprep.subr.mxu0 0.0
      %2059 = vmatpush1.msra.mxu0 0.0
      %2060 = vmatprep.subr.mxu0 0.0
      %2061 = vmatpush1.msra.mxu0 0.0
      %2062 = vmatprep.subr.mxu0 0.0
      %2063 = vmatpush1.msra.mxu0 0.0
      %2064 = vmatprep.subr.mxu0 0.0
      %2065 = vmatpush1.msra.mxu0 0.0
      %2066 = vmatprep.subr.mxu0 0.0
      %2067 = vmatpush1.msra.mxu0 0.0
      %2068 = vmatprep.subr.mxu0 0.0
      %2069 = vmatpush1.msra.mxu0 0.0
      %2070 = vmatprep.subr.mxu0 0.0
      %2071 = vmatpush1.msra.mxu0 0.0
      %2072 = vmatprep.subr.mxu0 0.0
      %2073 = vmatpush1.msra.mxu0 0.0
      %2074 = vmatprep.mubr.f32.mxu0 0.0
      %2075 = vmatmul.mubr.f32.gmra.mrb[0].mxu0 %v2005
      %v2076 = vpop.f32.mrb[0].mxu0
      %v2077 = vadd.f32 0.0, %v2076
      %v2078 = vpop.f32.mrb[0].mxu0
      %2079 = vmatprep.mubr.f32.mxu0 0.0
      %2080 = vmatmul.mubr.f32.gmra.mrb[0].mxu0 %v2008
      %v2081 = vpop.f32.mrb[0].mxu0
      %v2082 = vadd.f32 0.0, %v2081
      %v2083 = vpop.f32.mrb[0].mxu0
      %2084 = vdwg.mxu0
      %v2085 = vadd.f32 %v1999, %v2077
      %v2086 = vadd.f32 %v2000, %v2082
      %s2087 = scalar_lea.vmem %s11, 80
      %v2088 = vld [vmem:[%s2087] sm:$0xff]
      %v2089 = vld [vmem:[%s2087 + $0x8] sm:$0xff]
      %v2091 = vsel %vm832, %v2088, 0
      %v2094 = vsel %vm832, %v2089, 0
      %2096 = vmatprep.subr.mxu0 0.0
      %2097 = vmatpush1.msra.mxu0 %v1424
      %2098 = vmatprep.subr.mxu0 0.0
      %2099 = vmatpush1.msra.mxu0 0.0
      %2100 = vmatprep.subr.mxu0 0.0
      %2101 = vmatpush1.msra.mxu0 0.0
      %2102 = vmatprep.subr.mxu0 0.0
      %2103 = vmatpush1.msra.mxu0 0.0
      %2104 = vmatprep.subr.mxu0 0.0
      %2105 = vmatpush1.msra.mxu0 0.0
      %2106 = vmatprep.subr.mxu0 0.0
      %2107 = vmatpush1.msra.mxu0 0.0
      %2108 = vmatprep.subr.mxu0 0.0
      %2109 = vmatpush1.msra.mxu0 0.0
      %2110 = vmatprep.subr.mxu0 0.0
      %2111 = vmatpush1.msra.mxu0 0.0
      %2112 = vmatprep.subr.mxu0 0.0
      %2113 = vmatpush1.msra.mxu0 0.0
      %2114 = vmatprep.subr.mxu0 0.0
      %2115 = vmatpush1.msra.mxu0 0.0
      %2116 = vmatprep.subr.mxu0 0.0
      %2117 = vmatpush1.msra.mxu0 0.0
      %2118 = vmatprep.subr.mxu0 0.0
      %2119 = vmatpush1.msra.mxu0 0.0
      %2120 = vmatprep.subr.mxu0 0.0
      %2121 = vmatpush1.msra.mxu0 0.0
      %2122 = vmatprep.subr.mxu0 0.0
      %2123 = vmatpush1.msra.mxu0 0.0
      %2124 = vmatprep.subr.mxu0 0.0
      %2125 = vmatpush1.msra.mxu0 0.0
      %2126 = vmatprep.subr.mxu0 0.0
      %2127 = vmatpush1.msra.mxu0 0.0
      %2128 = vmatprep.subr.mxu0 0.0
      %2129 = vmatpush1.msra.mxu0 0.0
      %2130 = vmatprep.subr.mxu0 0.0
      %2131 = vmatpush1.msra.mxu0 0.0
      %2132 = vmatprep.subr.mxu0 0.0
      %2133 = vmatpush1.msra.mxu0 0.0
      %2134 = vmatprep.subr.mxu0 0.0
      %2135 = vmatpush1.msra.mxu0 0.0
      %2136 = vmatprep.subr.mxu0 0.0
      %2137 = vmatpush1.msra.mxu0 0.0
      %2138 = vmatprep.subr.mxu0 0.0
      %2139 = vmatpush1.msra.mxu0 0.0
      %2140 = vmatprep.subr.mxu0 0.0
      %2141 = vmatpush1.msra.mxu0 0.0
      %2142 = vmatprep.subr.mxu0 0.0
      %2143 = vmatpush1.msra.mxu0 0.0
      %2144 = vmatprep.subr.mxu0 0.0
      %2145 = vmatpush1.msra.mxu0 0.0
      %2146 = vmatprep.subr.mxu0 0.0
      %2147 = vmatpush1.msra.mxu0 0.0
      %2148 = vmatprep.subr.mxu0 0.0
      %2149 = vmatpush1.msra.mxu0 0.0
      %2150 = vmatprep.subr.mxu0 0.0
      %2151 = vmatpush1.msra.mxu0 0.0
      %2152 = vmatprep.subr.mxu0 0.0
      %2153 = vmatpush1.msra.mxu0 0.0
      %2154 = vmatprep.subr.mxu0 0.0
      %2155 = vmatpush1.msra.mxu0 0.0
      %2156 = vmatprep.subr.mxu0 0.0
      %2157 = vmatpush1.msra.mxu0 0.0
      %2158 = vmatprep.subr.mxu0 0.0
      %2159 = vmatpush1.msra.mxu0 0.0
      %2160 = vmatprep.mubr.f32.mxu0 0.0
      %2161 = vmatmul.mubr.f32.gmra.mrb[0].mxu0 %v2091
      %v2162 = vpop.f32.mrb[0].mxu0
      %v2163 = vadd.f32 0.0, %v2162
      %v2164 = vpop.f32.mrb[0].mxu0
      %2165 = vmatprep.mubr.f32.mxu0 0.0
      %2166 = vmatmul.mubr.f32.gmra.mrb[0].mxu0 %v2094
      %v2167 = vpop.f32.mrb[0].mxu0
      %v2168 = vadd.f32 0.0, %v2167
      %v2169 = vpop.f32.mrb[0].mxu0
      %2170 = vdwg.mxu0
      %v2171 = vadd.f32 %v2085, %v2163
      %v2172 = vadd.f32 %v2086, %v2168
      %s2173 = scalar_lea.vmem %s11, 96
      %v2174 = vld [vmem:[%s2173] sm:$0xff]
      %v2175 = vld [vmem:[%s2173 + $0x8] sm:$0xff]
      %v2177 = vsel %vm832, %v2174, 0
      %v2180 = vsel %vm832, %v2175, 0
      %2182 = vmatprep.subr.mxu0 0.0
      %2183 = vmatpush1.msra.mxu0 %v1497
      %2184 = vmatprep.subr.mxu0 0.0
      %2185 = vmatpush1.msra.mxu0 0.0
      %2186 = vmatprep.subr.mxu0 0.0
      %2187 = vmatpush1.msra.mxu0 0.0
      %2188 = vmatprep.subr.mxu0 0.0
      %2189 = vmatpush1.msra.mxu0 0.0
      %2190 = vmatprep.subr.mxu0 0.0
      %2191 = vmatpush1.msra.mxu0 0.0
      %2192 = vmatprep.subr.mxu0 0.0
      %2193 = vmatpush1.msra.mxu0 0.0
      %2194 = vmatprep.subr.mxu0 0.0
      %2195 = vmatpush1.msra.mxu0 0.0
      %2196 = vmatprep.subr.mxu0 0.0
      %2197 = vmatpush1.msra.mxu0 0.0
      %2198 = vmatprep.subr.mxu0 0.0
      %2199 = vmatpush1.msra.mxu0 0.0
      %2200 = vmatprep.subr.mxu0 0.0
      %2201 = vmatpush1.msra.mxu0 0.0
      %2202 = vmatprep.subr.mxu0 0.0
      %2203 = vmatpush1.msra.mxu0 0.0
      %2204 = vmatprep.subr.mxu0 0.0
      %2205 = vmatpush1.msra.mxu0 0.0
      %2206 = vmatprep.subr.mxu0 0.0
      %2207 = vmatpush1.msra.mxu0 0.0
      %2208 = vmatprep.subr.mxu0 0.0
      %2209 = vmatpush1.msra.mxu0 0.0
      %2210 = vmatprep.subr.mxu0 0.0
      %2211 = vmatpush1.msra.mxu0 0.0
      %2212 = vmatprep.subr.mxu0 0.0
      %2213 = vmatpush1.msra.mxu0 0.0
      %2214 = vmatprep.subr.mxu0 0.0
      %2215 = vmatpush1.msra.mxu0 0.0
      %2216 = vmatprep.subr.mxu0 0.0
      %2217 = vmatpush1.msra.mxu0 0.0
      %2218 = vmatprep.subr.mxu0 0.0
      %2219 = vmatpush1.msra.mxu0 0.0
      %2220 = vmatprep.subr.mxu0 0.0
      %2221 = vmatpush1.msra.mxu0 0.0
      %2222 = vmatprep.subr.mxu0 0.0
      %2223 = vmatpush1.msra.mxu0 0.0
      %2224 = vmatprep.subr.mxu0 0.0
      %2225 = vmatpush1.msra.mxu0 0.0
      %2226 = vmatprep.subr.mxu0 0.0
      %2227 = vmatpush1.msra.mxu0 0.0
      %2228 = vmatprep.subr.mxu0 0.0
      %2229 = vmatpush1.msra.mxu0 0.0
      %2230 = vmatprep.subr.mxu0 0.0
      %2231 = vmatpush1.msra.mxu0 0.0
      %2232 = vmatprep.subr.mxu0 0.0
      %2233 = vmatpush1.msra.mxu0 0.0
      %2234 = vmatprep.subr.mxu0 0.0
      %2235 = vmatpush1.msra.mxu0 0.0
      %2236 = vmatprep.subr.mxu0 0.0
      %2237 = vmatpush1.msra.mxu0 0.0
      %2238 = vmatprep.subr.mxu0 0.0
      %2239 = vmatpush1.msra.mxu0 0.0
      %2240 = vmatprep.subr.mxu0 0.0
      %2241 = vmatpush1.msra.mxu0 0.0
      %2242 = vmatprep.subr.mxu0 0.0
      %2243 = vmatpush1.msra.mxu0 0.0
      %2244 = vmatprep.subr.mxu0 0.0
      %2245 = vmatpush1.msra.mxu0 0.0
      %2246 = vmatprep.mubr.f32.mxu0 0.0
      %2247 = vmatmul.mubr.f32.gmra.mrb[0].mxu0 %v2177
      %v2248 = vpop.f32.mrb[0].mxu0
      %v2249 = vadd.f32 0.0, %v2248
      %v2250 = vpop.f32.mrb[0].mxu0
      %2251 = vmatprep.mubr.f32.mxu0 0.0
      %2252 = vmatmul.mubr.f32.gmra.mrb[0].mxu0 %v2180
      %v2253 = vpop.f32.mrb[0].mxu0
      %v2254 = vadd.f32 0.0, %v2253
      %v2255 = vpop.f32.mrb[0].mxu0
      %2256 = vdwg.mxu0
      %v2257 = vadd.f32 %v2171, %v2249
      %v2258 = vadd.f32 %v2172, %v2254
      %s2259 = scalar_lea.vmem %s11, 112
      %v2260 = vld [vmem:[%s2259] sm:$0xff]
      %v2261 = vld [vmem:[%s2259 + $0x8] sm:$0xff]
      %v2263 = vsel %vm832, %v2260, 0
      %v2266 = vsel %vm832, %v2261, 0
      %2268 = vmatprep.subr.mxu0 0.0
      %2269 = vmatpush1.msra.mxu0 %v1570
      %2270 = vmatprep.subr.mxu0 0.0
      %2271 = vmatpush1.msra.mxu0 0.0
      %2272 = vmatprep.subr.mxu0 0.0
      %2273 = vmatpush1.msra.mxu0 0.0
      %2274 = vmatprep.subr.mxu0 0.0
      %2275 = vmatpush1.msra.mxu0 0.0
      %2276 = vmatprep.subr.mxu0 0.0
      %2277 = vmatpush1.msra.mxu0 0.0
      %2278 = vmatprep.subr.mxu0 0.0
      %2279 = vmatpush1.msra.mxu0 0.0
      %2280 = vmatprep.subr.mxu0 0.0
      %2281 = vmatpush1.msra.mxu0 0.0
      %2282 = vmatprep.subr.mxu0 0.0
      %2283 = vmatpush1.msra.mxu0 0.0
      %2284 = vmatprep.subr.mxu0 0.0
      %2285 = vmatpush1.msra.mxu0 0.0
      %2286 = vmatprep.subr.mxu0 0.0
      %2287 = vmatpush1.msra.mxu0 0.0
      %2288 = vmatprep.subr.mxu0 0.0
      %2289 = vmatpush1.msra.mxu0 0.0
      %2290 = vmatprep.subr.mxu0 0.0
      %2291 = vmatpush1.msra.mxu0 0.0
      %2292 = vmatprep.subr.mxu0 0.0
      %2293 = vmatpush1.msra.mxu0 0.0
      %2294 = vmatprep.subr.mxu0 0.0
      %2295 = vmatpush1.msra.mxu0 0.0
      %2296 = vmatprep.subr.mxu0 0.0
      %2297 = vmatpush1.msra.mxu0 0.0
      %2298 = vmatprep.subr.mxu0 0.0
      %2299 = vmatpush1.msra.mxu0 0.0
      %2300 = vmatprep.subr.mxu0 0.0
      %2301 = vmatpush1.msra.mxu0 0.0
      %2302 = vmatprep.subr.mxu0 0.0
      %2303 = vmatpush1.msra.mxu0 0.0
      %2304 = vmatprep.subr.mxu0 0.0
      %2305 = vmatpush1.msra.mxu0 0.0
      %2306 = vmatprep.subr.mxu0 0.0
      %2307 = vmatpush1.msra.mxu0 0.0
      %2308 = vmatprep.subr.mxu0 0.0
      %2309 = vmatpush1.msra.mxu0 0.0
      %2310 = vmatprep.subr.mxu0 0.0
      %2311 = vmatpush1.msra.mxu0 0.0
      %2312 = vmatprep.subr.mxu0 0.0
      %2313 = vmatpush1.msra.mxu0 0.0
      %2314 = vmatprep.subr.mxu0 0.0
      %2315 = vmatpush1.msra.mxu0 0.0
      %2316 = vmatprep.subr.mxu0 0.0
      %2317 = vmatpush1.msra.mxu0 0.0
      %2318 = vmatprep.subr.mxu0 0.0
      %2319 = vmatpush1.msra.mxu0 0.0
      %2320 = vmatprep.subr.mxu0 0.0
      %2321 = vmatpush1.msra.mxu0 0.0
      %2322 = vmatprep.subr.mxu0 0.0
      %2323 = vmatpush1.msra.mxu0 0.0
      %2324 = vmatprep.subr.mxu0 0.0
      %2325 = vmatpush1.msra.mxu0 0.0
      %2326 = vmatprep.subr.mxu0 0.0
      %2327 = vmatpush1.msra.mxu0 0.0
      %2328 = vmatprep.subr.mxu0 0.0
      %2329 = vmatpush1.msra.mxu0 0.0
      %2330 = vmatprep.subr.mxu0 0.0
      %2331 = vmatpush1.msra.mxu0 0.0
      %2332 = vmatprep.mubr.f32.mxu0 0.0
      %2333 = vmatmul.mubr.f32.gmra.mrb[0].mxu0 %v2263
      %v2334 = vpop.f32.mrb[0].mxu0
      %v2335 = vadd.f32 0.0, %v2334
      %v2336 = vpop.f32.mrb[0].mxu0
      %2337 = vmatprep.mubr.f32.mxu0 0.0
      %2338 = vmatmul.mubr.f32.gmra.mrb[0].mxu0 %v2266
      %v2339 = vpop.f32.mrb[0].mxu0
      %v2340 = vadd.f32 0.0, %v2339
      %v2341 = vpop.f32.mrb[0].mxu0
      %2342 = vdwg.mxu0
      %v2343 = vadd.f32 %v2257, %v2335
      %v2344 = vadd.f32 %v2258, %v2340
      %s2345 = scalar_lea.vmem %s11, 128
      %v2346 = vld [vmem:[%s2345] sm:$0xff]
      %v2347 = vld [vmem:[%s2345 + $0x8] sm:$0xff]
      %v2349 = vsel %vm832, %v2346, 0
      %v2352 = vsel %vm832, %v2347, 0
      %2354 = vmatprep.subr.mxu0 0.0
      %2355 = vmatpush1.msra.mxu0 %v1643
      %2356 = vmatprep.subr.mxu0 0.0
      %2357 = vmatpush1.msra.mxu0 0.0
      %2358 = vmatprep.subr.mxu0 0.0
      %2359 = vmatpush1.msra.mxu0 0.0
      %2360 = vmatprep.subr.mxu0 0.0
      %2361 = vmatpush1.msra.mxu0 0.0
      %2362 = vmatprep.subr.mxu0 0.0
      %2363 = vmatpush1.msra.mxu0 0.0
      %2364 = vmatprep.subr.mxu0 0.0
      %2365 = vmatpush1.msra.mxu0 0.0
      %2366 = vmatprep.subr.mxu0 0.0
      %2367 = vmatpush1.msra.mxu0 0.0
      %2368 = vmatprep.subr.mxu0 0.0
      %2369 = vmatpush1.msra.mxu0 0.0
      %2370 = vmatprep.subr.mxu0 0.0
      %2371 = vmatpush1.msra.mxu0 0.0
      %2372 = vmatprep.subr.mxu0 0.0
      %2373 = vmatpush1.msra.mxu0 0.0
      %2374 = vmatprep.subr.mxu0 0.0
      %2375 = vmatpush1.msra.mxu0 0.0
      %2376 = vmatprep.subr.mxu0 0.0
      %2377 = vmatpush1.msra.mxu0 0.0
      %2378 = vmatprep.subr.mxu0 0.0
      %2379 = vmatpush1.msra.mxu0 0.0
      %2380 = vmatprep.subr.mxu0 0.0
      %2381 = vmatpush1.msra.mxu0 0.0
      %2382 = vmatprep.subr.mxu0 0.0
      %2383 = vmatpush1.msra.mxu0 0.0
      %2384 = vmatprep.subr.mxu0 0.0
      %2385 = vmatpush1.msra.mxu0 0.0
      %2386 = vmatprep.subr.mxu0 0.0
      %2387 = vmatpush1.msra.mxu0 0.0
      %2388 = vmatprep.subr.mxu0 0.0
      %2389 = vmatpush1.msra.mxu0 0.0
      %2390 = vmatprep.subr.mxu0 0.0
      %2391 = vmatpush1.msra.mxu0 0.0
      %2392 = vmatprep.subr.mxu0 0.0
      %2393 = vmatpush1.msra.mxu0 0.0
      %2394 = vmatprep.subr.mxu0 0.0
      %2395 = vmatpush1.msra.mxu0 0.0
      %2396 = vmatprep.subr.mxu0 0.0
      %2397 = vmatpush1.msra.mxu0 0.0
      %2398 = vmatprep.subr.mxu0 0.0
      %2399 = vmatpush1.msra.mxu0 0.0
      %2400 = vmatprep.subr.mxu0 0.0
      %2401 = vmatpush1.msra.mxu0 0.0
      %2402 = vmatprep.subr.mxu0 0.0
      %2403 = vmatpush1.msra.mxu0 0.0
      %2404 = vmatprep.subr.mxu0 0.0
      %2405 = vmatpush1.msra.mxu0 0.0
      %2406 = vmatprep.subr.mxu0 0.0
      %2407 = vmatpush1.msra.mxu0 0.0
      %2408 = vmatprep.subr.mxu0 0.0
      %2409 = vmatpush1.msra.mxu0 0.0
      %2410 = vmatprep.subr.mxu0 0.0
      %2411 = vmatpush1.msra.mxu0 0.0
      %2412 = vmatprep.subr.mxu0 0.0
      %2413 = vmatpush1.msra.mxu0 0.0
      %2414 = vmatprep.subr.mxu0 0.0
      %2415 = vmatpush1.msra.mxu0 0.0
      %2416 = vmatprep.subr.mxu0 0.0
      %2417 = vmatpush1.msra.mxu0 0.0
      %2418 = vmatprep.mubr.f32.mxu0 0.0
      %2419 = vmatmul.mubr.f32.gmra.mrb[0].mxu0 %v2349
      %v2420 = vpop.f32.mrb[0].mxu0
      %v2421 = vadd.f32 0.0, %v2420
      %v2422 = vpop.f32.mrb[0].mxu0
      %2423 = vmatprep.mubr.f32.mxu0 0.0
      %2424 = vmatmul.mubr.f32.gmra.mrb[0].mxu0 %v2352
      %v2425 = vpop.f32.mrb[0].mxu0
      %v2426 = vadd.f32 0.0, %v2425
      %v2427 = vpop.f32.mrb[0].mxu0
      %2428 = vdwg.mxu0
      %v2429 = vadd.f32 %v2343, %v2421
      %v2430 = vadd.f32 %v2344, %v2426
      %v2431 = vxor.u32 %v2429, 2147483648
      %v2432 = vmul.f32 %v2431, 1.442695
      %v2433 = vpow.pop %v2432
      %v2434 = vadd.f32 %v2433, 1.0
      %v2435 = vrcp.pop %v2434
      %v2436 = vmul.f32 1.0, %v2435
      %v2437 = vtanh.pop %v2430
      %v2438 = vmul.f32 %v2436, %v2437
      %v2440 = vsel %vm746, %v2438, 0
      %2442 = vmatprep.subr.mxu0 0.0
      %2443 = vmatpush1.msra.mxu0 %v987
      %2444 = vmatprep.subr.mxu0 0.0
      %2445 = vmatpush1.msra.mxu0 %v988
      %2446 = vmatprep.subr.mxu0 0.0
      %2447 = vmatpush1.msra.mxu0 0.0
      %2448 = vmatprep.subr.mxu0 0.0
      %2449 = vmatpush1.msra.mxu0 0.0
      %2450 = vmatprep.subr.mxu0 0.0
      %2451 = vmatpush1.msra.mxu0 0.0
      %2452 = vmatprep.subr.mxu0 0.0
      %2453 = vmatpush1.msra.mxu0 0.0
      %2454 = vmatprep.subr.mxu0 0.0
      %2455 = vmatpush1.msra.mxu0 0.0
      %2456 = vmatprep.subr.mxu0 0.0
      %2457 = vmatpush1.msra.mxu0 0.0
      %2458 = vmatprep.subr.mxu0 0.0
      %2459 = vmatpush1.msra.mxu0 0.0
      %2460 = vmatprep.subr.mxu0 0.0
      %2461 = vmatpush1.msra.mxu0 0.0
      %2462 = vmatprep.subr.mxu0 0.0
      %2463 = vmatpush1.msra.mxu0 0.0
      %2464 = vmatprep.subr.mxu0 0.0
      %2465 = vmatpush1.msra.mxu0 0.0
      %2466 = vmatprep.subr.mxu0 0.0
      %2467 = vmatpush1.msra.mxu0 0.0
      %2468 = vmatprep.subr.mxu0 0.0
      %2469 = vmatpush1.msra.mxu0 0.0
      %2470 = vmatprep.subr.mxu0 0.0
      %2471 = vmatpush1.msra.mxu0 0.0
      %2472 = vmatprep.subr.mxu0 0.0
      %2473 = vmatpush1.msra.mxu0 0.0
      %2474 = vmatprep.subr.mxu0 0.0
      %2475 = vmatpush1.msra.mxu0 0.0
      %2476 = vmatprep.subr.mxu0 0.0
      %2477 = vmatpush1.msra.mxu0 0.0
      %2478 = vmatprep.subr.mxu0 0.0
      %2479 = vmatpush1.msra.mxu0 0.0
      %2480 = vmatprep.subr.mxu0 0.0
      %2481 = vmatpush1.msra.mxu0 0.0
      %2482 = vmatprep.subr.mxu0 0.0
      %2483 = vmatpush1.msra.mxu0 0.0
      %2484 = vmatprep.subr.mxu0 0.0
      %2485 = vmatpush1.msra.mxu0 0.0
      %2486 = vmatprep.subr.mxu0 0.0
      %2487 = vmatpush1.msra.mxu0 0.0
      %2488 = vmatprep.subr.mxu0 0.0
      %2489 = vmatpush1.msra.mxu0 0.0
      %2490 = vmatprep.subr.mxu0 0.0
      %2491 = vmatpush1.msra.mxu0 0.0
      %2492 = vmatprep.subr.mxu0 0.0
      %2493 = vmatpush1.msra.mxu0 0.0
      %2494 = vmatprep.subr.mxu0 0.0
      %2495 = vmatpush1.msra.mxu0 0.0
      %2496 = vmatprep.subr.mxu0 0.0
      %2497 = vmatpush1.msra.mxu0 0.0
      %2498 = vmatprep.subr.mxu0 0.0
      %2499 = vmatpush1.msra.mxu0 0.0
      %2500 = vmatprep.subr.mxu0 0.0
      %2501 = vmatpush1.msra.mxu0 0.0
      %2502 = vmatprep.subr.mxu0 0.0
      %2503 = vmatpush1.msra.mxu0 0.0
      %2504 = vmatprep.subr.mxu0 0.0
      %2505 = vmatpush1.msra.mxu0 0.0
      %2506 = vmatprep.mubr.f32.mxu0 0.0
      %2507 = vmatmul.mubr.f32.gmra.mrb[0].mxu0 %v2440
      %v2508 = vpop.f32.mrb[0].mxu0
      %v2509 = vadd.f32 0.0, %v2508
      %v2510 = vpop.f32.mrb[0].mxu0
      %2511 = vdwg.mxu0
      %2512 = vmatprep.subr.mxu0 0.0
      %2513 = vmatpush1.msra.mxu0 %v1063
      %2514 = vmatprep.subr.mxu0 0.0
      %2515 = vmatpush1.msra.mxu0 %v1064
      %2516 = vmatprep.subr.mxu0 0.0
      %2517 = vmatpush1.msra.mxu0 0.0
      %2518 = vmatprep.subr.mxu0 0.0
      %2519 = vmatpush1.msra.mxu0 0.0
      %2520 = vmatprep.subr.mxu0 0.0
      %2521 = vmatpush1.msra.mxu0 0.0
      %2522 = vmatprep.subr.mxu0 0.0
      %2523 = vmatpush1.msra.mxu0 0.0
      %2524 = vmatprep.subr.mxu0 0.0
      %2525 = vmatpush1.msra.mxu0 0.0
      %2526 = vmatprep.subr.mxu0 0.0
      %2527 = vmatpush1.msra.mxu0 0.0
      %2528 = vmatprep.subr.mxu0 0.0
      %2529 = vmatpush1.msra.mxu0 0.0
      %2530 = vmatprep.subr.mxu0 0.0
      %2531 = vmatpush1.msra.mxu0 0.0
      %2532 = vmatprep.subr.mxu0 0.0
      %2533 = vmatpush1.msra.mxu0 0.0
      %2534 = vmatprep.subr.mxu0 0.0
      %2535 = vmatpush1.msra.mxu0 0.0
      %2536 = vmatprep.subr.mxu0 0.0
      %2537 = vmatpush1.msra.mxu0 0.0
      %2538 = vmatprep.subr.mxu0 0.0
      %2539 = vmatpush1.msra.mxu0 0.0
      %2540 = vmatprep.subr.mxu0 0.0
      %2541 = vmatpush1.msra.mxu0 0.0
      %2542 = vmatprep.subr.mxu0 0.0
      %2543 = vmatpush1.msra.mxu0 0.0
      %2544 = vmatprep.subr.mxu0 0.0
      %2545 = vmatpush1.msra.mxu0 0.0
      %2546 = vmatprep.subr.mxu0 0.0
      %2547 = vmatpush1.msra.mxu0 0.0
      %2548 = vmatprep.subr.mxu0 0.0
      %2549 = vmatpush1.msra.mxu0 0.0
      %2550 = vmatprep.subr.mxu0 0.0
      %2551 = vmatpush1.msra.mxu0 0.0
      %2552 = vmatprep.subr.mxu0 0.0
      %2553 = vmatpush1.msra.mxu0 0.0
      %2554 = vmatprep.subr.mxu0 0.0
      %2555 = vmatpush1.msra.mxu0 0.0
      %2556 = vmatprep.subr.mxu0 0.0
      %2557 = vmatpush1.msra.mxu0 0.0
      %2558 = vmatprep.subr.mxu0 0.0
      %2559 = vmatpush1.msra.mxu0 0.0
      %2560 = vmatprep.subr.mxu0 0.0
      %2561 = vmatpush1.msra.mxu0 0.0
      %2562 = vmatprep.subr.mxu0 0.0
      %2563 = vmatpush1.msra.mxu0 0.0
      %2564 = vmatprep.subr.mxu0 0.0
      %2565 = vmatpush1.msra.mxu0 0.0
      %2566 = vmatprep.subr.mxu0 0.0
      %2567 = vmatpush1.msra.mxu0 0.0
      %2568 = vmatprep.subr.mxu0 0.0
      %2569 = vmatpush1.msra.mxu0 0.0
      %2570 = vmatprep.subr.mxu0 0.0
      %2571 = vmatpush1.msra.mxu0 0.0
      %2572 = vmatprep.subr.mxu0 0.0
      %2573 = vmatpush1.msra.mxu0 0.0
      %2574 = vmatprep.subr.mxu0 0.0
      %2575 = vmatpush1.msra.mxu0 0.0
      %2576 = vmatprep.mubr.f32.mxu0 0.0
      %2577 = vmatmul.mubr.f32.gmra.mrb[0].mxu0 %v2440
      %v2578 = vpop.f32.mrb[0].mxu0
      %v2579 = vadd.f32 0.0, %v2578
      %v2580 = vpop.f32.mrb[0].mxu0
      %2581 = vdwg.mxu0
      %2582 = vmatprep.subr.mxu0 0.0
      %2583 = vmatpush1.msra.mxu0 %v1136
      %2584 = vmatprep.subr.mxu0 0.0
      %2585 = vmatpush1.msra.mxu0 %v1137
      %2586 = vmatprep.subr.mxu0 0.0
      %2587 = vmatpush1.msra.mxu0 0.0
      %2588 = vmatprep.subr.mxu0 0.0
      %2589 = vmatpush1.msra.mxu0 0.0
      %2590 = vmatprep.subr.mxu0 0.0
      %2591 = vmatpush1.msra.mxu0 0.0
      %2592 = vmatprep.subr.mxu0 0.0
      %2593 = vmatpush1.msra.mxu0 0.0
      %2594 = vmatprep.subr.mxu0 0.0
      %2595 = vmatpush1.msra.mxu0 0.0
      %2596 = vmatprep.subr.mxu0 0.0
      %2597 = vmatpush1.msra.mxu0 0.0
      %2598 = vmatprep.subr.mxu0 0.0
      %2599 = vmatpush1.msra.mxu0 0.0
      %2600 = vmatprep.subr.mxu0 0.0
      %2601 = vmatpush1.msra.mxu0 0.0
      %2602 = vmatprep.subr.mxu0 0.0
      %2603 = vmatpush1.msra.mxu0 0.0
      %2604 = vmatprep.subr.mxu0 0.0
      %2605 = vmatpush1.msra.mxu0 0.0
      %2606 = vmatprep.subr.mxu0 0.0
      %2607 = vmatpush1.msra.mxu0 0.0
      %2608 = vmatprep.subr.mxu0 0.0
      %2609 = vmatpush1.msra.mxu0 0.0
      %2610 = vmatprep.subr.mxu0 0.0
      %2611 = vmatpush1.msra.mxu0 0.0
      %2612 = vmatprep.subr.mxu0 0.0
      %2613 = vmatpush1.msra.mxu0 0.0
      %2614 = vmatprep.subr.mxu0 0.0
      %2615 = vmatpush1.msra.mxu0 0.0
      %2616 = vmatprep.subr.mxu0 0.0
      %2617 = vmatpush1.msra.mxu0 0.0
      %2618 = vmatprep.subr.mxu0 0.0
      %2619 = vmatpush1.msra.mxu0 0.0
      %2620 = vmatprep.subr.mxu0 0.0
      %2621 = vmatpush1.msra.mxu0 0.0
      %2622 = vmatprep.subr.mxu0 0.0
      %2623 = vmatpush1.msra.mxu0 0.0
      %2624 = vmatprep.subr.mxu0 0.0
      %2625 = vmatpush1.msra.mxu0 0.0
      %2626 = vmatprep.subr.mxu0 0.0
      %2627 = vmatpush1.msra.mxu0 0.0
      %2628 = vmatprep.subr.mxu0 0.0
      %2629 = vmatpush1.msra.mxu0 0.0
      %2630 = vmatprep.subr.mxu0 0.0
      %2631 = vmatpush1.msra.mxu0 0.0
      %2632 = vmatprep.subr.mxu0 0.0
      %2633 = vmatpush1.msra.mxu0 0.0
      %2634 = vmatprep.subr.mxu0 0.0
      %2635 = vmatpush1.msra.mxu0 0.0
      %2636 = vmatprep.subr.mxu0 0.0
      %2637 = vmatpush1.msra.mxu0 0.0
      %2638 = vmatprep.subr.mxu0 0.0
      %2639 = vmatpush1.msra.mxu0 0.0
      %2640 = vmatprep.subr.mxu0 0.0
      %2641 = vmatpush1.msra.mxu0 0.0
      %2642 = vmatprep.subr.mxu0 0.0
      %2643 = vmatpush1.msra.mxu0 0.0
      %2644 = vmatprep.subr.mxu0 0.0
      %2645 = vmatpush1.msra.mxu0 0.0
      %2646 = vmatprep.mubr.f32.mxu0 0.0
      %2647 = vmatmul.mubr.f32.gmra.mrb[0].mxu0 %v2440
      %v2648 = vpop.f32.mrb[0].mxu0
      %v2649 = vadd.f32 0.0, %v2648
      %v2650 = vpop.f32.mrb[0].mxu0
      %2651 = vdwg.mxu0
      %2652 = vmatprep.subr.mxu0 0.0
      %2653 = vmatpush1.msra.mxu0 %v1209
      %2654 = vmatprep.subr.mxu0 0.0
      %2655 = vmatpush1.msra.mxu0 %v1210
      %2656 = vmatprep.subr.mxu0 0.0
      %2657 = vmatpush1.msra.mxu0 0.0
      %2658 = vmatprep.subr.mxu0 0.0
      %2659 = vmatpush1.msra.mxu0 0.0
      %2660 = vmatprep.subr.mxu0 0.0
      %2661 = vmatpush1.msra.mxu0 0.0
      %2662 = vmatprep.subr.mxu0 0.0
      %2663 = vmatpush1.msra.mxu0 0.0
      %2664 = vmatprep.subr.mxu0 0.0
      %2665 = vmatpush1.msra.mxu0 0.0
      %2666 = vmatprep.subr.mxu0 0.0
      %2667 = vmatpush1.msra.mxu0 0.0
      %2668 = vmatprep.subr.mxu0 0.0
      %2669 = vmatpush1.msra.mxu0 0.0
      %2670 = vmatprep.subr.mxu0 0.0
      %2671 = vmatpush1.msra.mxu0 0.0
      %2672 = vmatprep.subr.mxu0 0.0
      %2673 = vmatpush1.msra.mxu0 0.0
      %2674 = vmatprep.subr.mxu0 0.0
      %2675 = vmatpush1.msra.mxu0 0.0
      %2676 = vmatprep.subr.mxu0 0.0
      %2677 = vmatpush1.msra.mxu0 0.0
      %2678 = vmatprep.subr.mxu0 0.0
      %2679 = vmatpush1.msra.mxu0 0.0
      %2680 = vmatprep.subr.mxu0 0.0
      %2681 = vmatpush1.msra.mxu0 0.0
      %2682 = vmatprep.subr.mxu0 0.0
      %2683 = vmatpush1.msra.mxu0 0.0
      %2684 = vmatprep.subr.mxu0 0.0
      %2685 = vmatpush1.msra.mxu0 0.0
      %2686 = vmatprep.subr.mxu0 0.0
      %2687 = vmatpush1.msra.mxu0 0.0
      %2688 = vmatprep.subr.mxu0 0.0
      %2689 = vmatpush1.msra.mxu0 0.0
      %2690 = vmatprep.subr.mxu0 0.0
      %2691 = vmatpush1.msra.mxu0 0.0
      %2692 = vmatprep.subr.mxu0 0.0
      %2693 = vmatpush1.msra.mxu0 0.0
      %2694 = vmatprep.subr.mxu0 0.0
      %2695 = vmatpush1.msra.mxu0 0.0
      %2696 = vmatprep.subr.mxu0 0.0
      %2697 = vmatpush1.msra.mxu0 0.0
      %2698 = vmatprep.subr.mxu0 0.0
      %2699 = vmatpush1.msra.mxu0 0.0
      %2700 = vmatprep.subr.mxu0 0.0
      %2701 = vmatpush1.msra.mxu0 0.0
      %2702 = vmatprep.subr.mxu0 0.0
      %2703 = vmatpush1.msra.mxu0 0.0
      %2704 = vmatprep.subr.mxu0 0.0
      %2705 = vmatpush1.msra.mxu0 0.0
      %2706 = vmatprep.subr.mxu0 0.0
      %2707 = vmatpush1.msra.mxu0 0.0
      %2708 = vmatprep.subr.mxu0 0.0
      %2709 = vmatpush1.msra.mxu0 0.0
      %2710 = vmatprep.subr.mxu0 0.0
      %2711 = vmatpush1.msra.mxu0 0.0
      %2712 = vmatprep.subr.mxu0 0.0
      %2713 = vmatpush1.msra.mxu0 0.0
      %2714 = vmatprep.subr.mxu0 0.0
      %2715 = vmatpush1.msra.mxu0 0.0
      %2716 = vmatprep.mubr.f32.mxu0 0.0
      %2717 = vmatmul.mubr.f32.gmra.mrb[0].mxu0 %v2440
      %v2718 = vpop.f32.mrb[0].mxu0
      %v2719 = vadd.f32 0.0, %v2718
      %v2720 = vpop.f32.mrb[0].mxu0
      %2721 = vdwg.mxu0
      %2722 = vmatprep.subr.mxu0 0.0
      %2723 = vmatpush1.msra.mxu0 %v1282
      %2724 = vmatprep.subr.mxu0 0.0
      %2725 = vmatpush1.msra.mxu0 %v1283
      %2726 = vmatprep.subr.mxu0 0.0
      %2727 = vmatpush1.msra.mxu0 0.0
      %2728 = vmatprep.subr.mxu0 0.0
      %2729 = vmatpush1.msra.mxu0 0.0
      %2730 = vmatprep.subr.mxu0 0.0
      %2731 = vmatpush1.msra.mxu0 0.0
      %2732 = vmatprep.subr.mxu0 0.0
      %2733 = vmatpush1.msra.mxu0 0.0
      %2734 = vmatprep.subr.mxu0 0.0
      %2735 = vmatpush1.msra.mxu0 0.0
      %2736 = vmatprep.subr.mxu0 0.0
      %2737 = vmatpush1.msra.mxu0 0.0
      %2738 = vmatprep.subr.mxu0 0.0
      %2739 = vmatpush1.msra.mxu0 0.0
      %2740 = vmatprep.subr.mxu0 0.0
      %2741 = vmatpush1.msra.mxu0 0.0
      %2742 = vmatprep.subr.mxu0 0.0
      %2743 = vmatpush1.msra.mxu0 0.0
      %2744 = vmatprep.subr.mxu0 0.0
      %2745 = vmatpush1.msra.mxu0 0.0
      %2746 = vmatprep.subr.mxu0 0.0
      %2747 = vmatpush1.msra.mxu0 0.0
      %2748 = vmatprep.subr.mxu0 0.0
      %2749 = vmatpush1.msra.mxu0 0.0
      %2750 = vmatprep.subr.mxu0 0.0
      %2751 = vmatpush1.msra.mxu0 0.0
      %2752 = vmatprep.subr.mxu0 0.0
      %2753 = vmatpush1.msra.mxu0 0.0
      %2754 = vmatprep.subr.mxu0 0.0
      %2755 = vmatpush1.msra.mxu0 0.0
      %2756 = vmatprep.subr.mxu0 0.0
      %2757 = vmatpush1.msra.mxu0 0.0
      %2758 = vmatprep.subr.mxu0 0.0
      %2759 = vmatpush1.msra.mxu0 0.0
      %2760 = vmatprep.subr.mxu0 0.0
      %2761 = vmatpush1.msra.mxu0 0.0
      %2762 = vmatprep.subr.mxu0 0.0
      %2763 = vmatpush1.msra.mxu0 0.0
      %2764 = vmatprep.subr.mxu0 0.0
      %2765 = vmatpush1.msra.mxu0 0.0
      %2766 = vmatprep.subr.mxu0 0.0
      %2767 = vmatpush1.msra.mxu0 0.0
      %2768 = vmatprep.subr.mxu0 0.0
      %2769 = vmatpush1.msra.mxu0 0.0
      %2770 = vmatprep.subr.mxu0 0.0
      %2771 = vmatpush1.msra.mxu0 0.0
      %2772 = vmatprep.subr.mxu0 0.0
      %2773 = vmatpush1.msra.mxu0 0.0
      %2774 = vmatprep.subr.mxu0 0.0
      %2775 = vmatpush1.msra.mxu0 0.0
      %2776 = vmatprep.subr.mxu0 0.0
      %2777 = vmatpush1.msra.mxu0 0.0
      %2778 = vmatprep.subr.mxu0 0.0
      %2779 = vmatpush1.msra.mxu0 0.0
      %2780 = vmatprep.subr.mxu0 0.0
      %2781 = vmatpush1.msra.mxu0 0.0
      %2782 = vmatprep.subr.mxu0 0.0
      %2783 = vmatpush1.msra.mxu0 0.0
      %2784 = vmatprep.subr.mxu0 0.0
      %2785 = vmatpush1.msra.mxu0 0.0
      %2786 = vmatprep.mubr.f32.mxu0 0.0
      %2787 = vmatmul.mubr.f32.gmra.mrb[0].mxu0 %v2440
      %v2788 = vpop.f32.mrb[0].mxu0
      %v2789 = vadd.f32 0.0, %v2788
      %v2790 = vpop.f32.mrb[0].mxu0
      %2791 = vdwg.mxu0
      %2792 = vmatprep.subr.mxu0 0.0
      %2793 = vmatpush1.msra.mxu0 %v1355
      %2794 = vmatprep.subr.mxu0 0.0
      %2795 = vmatpush1.msra.mxu0 %v1356
      %2796 = vmatprep.subr.mxu0 0.0
      %2797 = vmatpush1.msra.mxu0 0.0
      %2798 = vmatprep.subr.mxu0 0.0
      %2799 = vmatpush1.msra.mxu0 0.0
      %2800 = vmatprep.subr.mxu0 0.0
      %2801 = vmatpush1.msra.mxu0 0.0
      %2802 = vmatprep.subr.mxu0 0.0
      %2803 = vmatpush1.msra.mxu0 0.0
      %2804 = vmatprep.subr.mxu0 0.0
      %2805 = vmatpush1.msra.mxu0 0.0
      %2806 = vmatprep.subr.mxu0 0.0
      %2807 = vmatpush1.msra.mxu0 0.0
      %2808 = vmatprep.subr.mxu0 0.0
      %2809 = vmatpush1.msra.mxu0 0.0
      %2810 = vmatprep.subr.mxu0 0.0
      %2811 = vmatpush1.msra.mxu0 0.0
      %2812 = vmatprep.subr.mxu0 0.0
      %2813 = vmatpush1.msra.mxu0 0.0
      %2814 = vmatprep.subr.mxu0 0.0
      %2815 = vmatpush1.msra.mxu0 0.0
      %2816 = vmatprep.subr.mxu0 0.0
      %2817 = vmatpush1.msra.mxu0 0.0
      %2818 = vmatprep.subr.mxu0 0.0
      %2819 = vmatpush1.msra.mxu0 0.0
      %2820 = vmatprep.subr.mxu0 0.0
      %2821 = vmatpush1.msra.mxu0 0.0
      %2822 = vmatprep.subr.mxu0 0.0
      %2823 = vmatpush1.msra.mxu0 0.0
      %2824 = vmatprep.subr.mxu0 0.0
      %2825 = vmatpush1.msra.mxu0 0.0
      %2826 = vmatprep.subr.mxu0 0.0
      %2827 = vmatpush1.msra.mxu0 0.0
      %2828 = vmatprep.subr.mxu0 0.0
      %2829 = vmatpush1.msra.mxu0 0.0
      %2830 = vmatprep.subr.mxu0 0.0
      %2831 = vmatpush1.msra.mxu0 0.0
      %2832 = vmatprep.subr.mxu0 0.0
      %2833 = vmatpush1.msra.mxu0 0.0
      %2834 = vmatprep.subr.mxu0 0.0
      %2835 = vmatpush1.msra.mxu0 0.0
      %2836 = vmatprep.subr.mxu0 0.0
      %2837 = vmatpush1.msra.mxu0 0.0
      %2838 = vmatprep.subr.mxu0 0.0
      %2839 = vmatpush1.msra.mxu0 0.0
      %2840 = vmatprep.subr.mxu0 0.0
      %2841 = vmatpush1.msra.mxu0 0.0
      %2842 = vmatprep.subr.mxu0 0.0
      %2843 = vmatpush1.msra.mxu0 0.0
      %2844 = vmatprep.subr.mxu0 0.0
      %2845 = vmatpush1.msra.mxu0 0.0
      %2846 = vmatprep.subr.mxu0 0.0
      %2847 = vmatpush1.msra.mxu0 0.0
      %2848 = vmatprep.subr.mxu0 0.0
      %2849 = vmatpush1.msra.mxu0 0.0
      %2850 = vmatprep.subr.mxu0 0.0
      %2851 = vmatpush1.msra.mxu0 0.0
      %2852 = vmatprep.subr.mxu0 0.0
      %2853 = vmatpush1.msra.mxu0 0.0
      %2854 = vmatprep.subr.mxu0 0.0
      %2855 = vmatpush1.msra.mxu0 0.0
      %2856 = vmatprep.mubr.f32.mxu0 0.0
      %2857 = vmatmul.mubr.f32.gmra.mrb[0].mxu0 %v2440
      %v2858 = vpop.f32.mrb[0].mxu0
      %v2859 = vadd.f32 0.0, %v2858
      %v2860 = vpop.f32.mrb[0].mxu0
      %2861 = vdwg.mxu0
      %2862 = vmatprep.subr.mxu0 0.0
      %2863 = vmatpush1.msra.mxu0 %v1428
      %2864 = vmatprep.subr.mxu0 0.0
      %2865 = vmatpush1.msra.mxu0 %v1429
      %2866 = vmatprep.subr.mxu0 0.0
      %2867 = vmatpush1.msra.mxu0 0.0
      %2868 = vmatprep.subr.mxu0 0.0
      %2869 = vmatpush1.msra.mxu0 0.0
      %2870 = vmatprep.subr.mxu0 0.0
      %2871 = vmatpush1.msra.mxu0 0.0
      %2872 = vmatprep.subr.mxu0 0.0
      %2873 = vmatpush1.msra.mxu0 0.0
      %2874 = vmatprep.subr.mxu0 0.0
      %2875 = vmatpush1.msra.mxu0 0.0
      %2876 = vmatprep.subr.mxu0 0.0
      %2877 = vmatpush1.msra.mxu0 0.0
      %2878 = vmatprep.subr.mxu0 0.0
      %2879 = vmatpush1.msra.mxu0 0.0
      %2880 = vmatprep.subr.mxu0 0.0
      %2881 = vmatpush1.msra.mxu0 0.0
      %2882 = vmatprep.subr.mxu0 0.0
      %2883 = vmatpush1.msra.mxu0 0.0
      %2884 = vmatprep.subr.mxu0 0.0
      %2885 = vmatpush1.msra.mxu0 0.0
      %2886 = vmatprep.subr.mxu0 0.0
      %2887 = vmatpush1.msra.mxu0 0.0
      %2888 = vmatprep.subr.mxu0 0.0
      %2889 = vmatpush1.msra.mxu0 0.0
      %2890 = vmatprep.subr.mxu0 0.0
      %2891 = vmatpush1.msra.mxu0 0.0
      %2892 = vmatprep.subr.mxu0 0.0
      %2893 = vmatpush1.msra.mxu0 0.0
      %2894 = vmatprep.subr.mxu0 0.0
      %2895 = vmatpush1.msra.mxu0 0.0
      %2896 = vmatprep.subr.mxu0 0.0
      %2897 = vmatpush1.msra.mxu0 0.0
      %2898 = vmatprep.subr.mxu0 0.0
      %2899 = vmatpush1.msra.mxu0 0.0
      %2900 = vmatprep.subr.mxu0 0.0
      %2901 = vmatpush1.msra.mxu0 0.0
      %2902 = vmatprep.subr.mxu0 0.0
      %2903 = vmatpush1.msra.mxu0 0.0
      %2904 = vmatprep.subr.mxu0 0.0
      %2905 = vmatpush1.msra.mxu0 0.0
      %2906 = vmatprep.subr.mxu0 0.0
      %2907 = vmatpush1.msra.mxu0 0.0
      %2908 = vmatprep.subr.mxu0 0.0
      %2909 = vmatpush1.msra.mxu0 0.0
      %2910 = vmatprep.subr.mxu0 0.0
      %2911 = vmatpush1.msra.mxu0 0.0
      %2912 = vmatprep.subr.mxu0 0.0
      %2913 = vmatpush1.msra.mxu0 0.0
      %2914 = vmatprep.subr.mxu0 0.0
      %2915 = vmatpush1.msra.mxu0 0.0
      %2916 = vmatprep.subr.mxu0 0.0
      %2917 = vmatpush1.msra.mxu0 0.0
      %2918 = vmatprep.subr.mxu0 0.0
      %2919 = vmatpush1.msra.mxu0 0.0
      %2920 = vmatprep.subr.mxu0 0.0
      %2921 = vmatpush1.msra.mxu0 0.0
      %2922 = vmatprep.subr.mxu0 0.0
      %2923 = vmatpush1.msra.mxu0 0.0
      %2924 = vmatprep.subr.mxu0 0.0
      %2925 = vmatpush1.msra.mxu0 0.0
      %2926 = vmatprep.mubr.f32.mxu0 0.0
      %2927 = vmatmul.mubr.f32.gmra.mrb[0].mxu0 %v2440
      %v2928 = vpop.f32.mrb[0].mxu0
      %v2929 = vadd.f32 0.0, %v2928
      %v2930 = vpop.f32.mrb[0].mxu0
      %2931 = vdwg.mxu0
      %2932 = vmatprep.subr.mxu0 0.0
      %2933 = vmatpush1.msra.mxu0 %v1501
      %2934 = vmatprep.subr.mxu0 0.0
      %2935 = vmatpush1.msra.mxu0 %v1502
      %2936 = vmatprep.subr.mxu0 0.0
      %2937 = vmatpush1.msra.mxu0 0.0
      %2938 = vmatprep.subr.mxu0 0.0
      %2939 = vmatpush1.msra.mxu0 0.0
      %2940 = vmatprep.subr.mxu0 0.0
      %2941 = vmatpush1.msra.mxu0 0.0
      %2942 = vmatprep.subr.mxu0 0.0
      %2943 = vmatpush1.msra.mxu0 0.0
      %2944 = vmatprep.subr.mxu0 0.0
      %2945 = vmatpush1.msra.mxu0 0.0
      %2946 = vmatprep.subr.mxu0 0.0
      %2947 = vmatpush1.msra.mxu0 0.0
      %2948 = vmatprep.subr.mxu0 0.0
      %2949 = vmatpush1.msra.mxu0 0.0
      %2950 = vmatprep.subr.mxu0 0.0
      %2951 = vmatpush1.msra.mxu0 0.0
      %2952 = vmatprep.subr.mxu0 0.0
      %2953 = vmatpush1.msra.mxu0 0.0
      %2954 = vmatprep.subr.mxu0 0.0
      %2955 = vmatpush1.msra.mxu0 0.0
      %2956 = vmatprep.subr.mxu0 0.0
      %2957 = vmatpush1.msra.mxu0 0.0
      %2958 = vmatprep.subr.mxu0 0.0
      %2959 = vmatpush1.msra.mxu0 0.0
      %2960 = vmatprep.subr.mxu0 0.0
      %2961 = vmatpush1.msra.mxu0 0.0
      %2962 = vmatprep.subr.mxu0 0.0
      %2963 = vmatpush1.msra.mxu0 0.0
      %2964 = vmatprep.subr.mxu0 0.0
      %2965 = vmatpush1.msra.mxu0 0.0
      %2966 = vmatprep.subr.mxu0 0.0
      %2967 = vmatpush1.msra.mxu0 0.0
      %2968 = vmatprep.subr.mxu0 0.0
      %2969 = vmatpush1.msra.mxu0 0.0
      %2970 = vmatprep.subr.mxu0 0.0
      %2971 = vmatpush1.msra.mxu0 0.0
      %2972 = vmatprep.subr.mxu0 0.0
      %2973 = vmatpush1.msra.mxu0 0.0
      %2974 = vmatprep.subr.mxu0 0.0
      %2975 = vmatpush1.msra.mxu0 0.0
      %2976 = vmatprep.subr.mxu0 0.0
      %2977 = vmatpush1.msra.mxu0 0.0
      %2978 = vmatprep.subr.mxu0 0.0
      %2979 = vmatpush1.msra.mxu0 0.0
      %2980 = vmatprep.subr.mxu0 0.0
      %2981 = vmatpush1.msra.mxu0 0.0
      %2982 = vmatprep.subr.mxu0 0.0
      %2983 = vmatpush1.msra.mxu0 0.0
      %2984 = vmatprep.subr.mxu0 0.0
      %2985 = vmatpush1.msra.mxu0 0.0
      %2986 = vmatprep.subr.mxu0 0.0
      %2987 = vmatpush1.msra.mxu0 0.0
      %2988 = vmatprep.subr.mxu0 0.0
      %2989 = vmatpush1.msra.mxu0 0.0
      %2990 = vmatprep.subr.mxu0 0.0
      %2991 = vmatpush1.msra.mxu0 0.0
      %2992 = vmatprep.subr.mxu0 0.0
      %2993 = vmatpush1.msra.mxu0 0.0
      %2994 = vmatprep.subr.mxu0 0.0
      %2995 = vmatpush1.msra.mxu0 0.0
      %2996 = vmatprep.mubr.f32.mxu0 0.0
      %2997 = vmatmul.mubr.f32.gmra.mrb[0].mxu0 %v2440
      %v2998 = vpop.f32.mrb[0].mxu0
      %v2999 = vadd.f32 0.0, %v2998
      %v3000 = vpop.f32.mrb[0].mxu0
      %3001 = vdwg.mxu0
      %3002 = vmatprep.subr.mxu0 0.0
      %3003 = vmatpush1.msra.mxu0 %v1574
      %3004 = vmatprep.subr.mxu0 0.0
      %3005 = vmatpush1.msra.mxu0 %v1575
      %3006 = vmatprep.subr.mxu0 0.0
      %3007 = vmatpush1.msra.mxu0 0.0
      %3008 = vmatprep.subr.mxu0 0.0
      %3009 = vmatpush1.msra.mxu0 0.0
      %3010 = vmatprep.subr.mxu0 0.0
      %3011 = vmatpush1.msra.mxu0 0.0
      %3012 = vmatprep.subr.mxu0 0.0
      %3013 = vmatpush1.msra.mxu0 0.0
      %3014 = vmatprep.subr.mxu0 0.0
      %3015 = vmatpush1.msra.mxu0 0.0
      %3016 = vmatprep.subr.mxu0 0.0
      %3017 = vmatpush1.msra.mxu0 0.0
      %3018 = vmatprep.subr.mxu0 0.0
      %3019 = vmatpush1.msra.mxu0 0.0
      %3020 = vmatprep.subr.mxu0 0.0
      %3021 = vmatpush1.msra.mxu0 0.0
      %3022 = vmatprep.subr.mxu0 0.0
      %3023 = vmatpush1.msra.mxu0 0.0
      %3024 = vmatprep.subr.mxu0 0.0
      %3025 = vmatpush1.msra.mxu0 0.0
      %3026 = vmatprep.subr.mxu0 0.0
      %3027 = vmatpush1.msra.mxu0 0.0
      %3028 = vmatprep.subr.mxu0 0.0
      %3029 = vmatpush1.msra.mxu0 0.0
      %3030 = vmatprep.subr.mxu0 0.0
      %3031 = vmatpush1.msra.mxu0 0.0
      %3032 = vmatprep.subr.mxu0 0.0
      %3033 = vmatpush1.msra.mxu0 0.0
      %3034 = vmatprep.subr.mxu0 0.0
      %3035 = vmatpush1.msra.mxu0 0.0
      %3036 = vmatprep.subr.mxu0 0.0
      %3037 = vmatpush1.msra.mxu0 0.0
      %3038 = vmatprep.subr.mxu0 0.0
      %3039 = vmatpush1.msra.mxu0 0.0
      %3040 = vmatprep.subr.mxu0 0.0
      %3041 = vmatpush1.msra.mxu0 0.0
      %3042 = vmatprep.subr.mxu0 0.0
      %3043 = vmatpush1.msra.mxu0 0.0
      %3044 = vmatprep.subr.mxu0 0.0
      %3045 = vmatpush1.msra.mxu0 0.0
      %3046 = vmatprep.subr.mxu0 0.0
      %3047 = vmatpush1.msra.mxu0 0.0
      %3048 = vmatprep.subr.mxu0 0.0
      %3049 = vmatpush1.msra.mxu0 0.0
      %3050 = vmatprep.subr.mxu0 0.0
      %3051 = vmatpush1.msra.mxu0 0.0
      %3052 = vmatprep.subr.mxu0 0.0
      %3053 = vmatpush1.msra.mxu0 0.0
      %3054 = vmatprep.subr.mxu0 0.0
      %3055 = vmatpush1.msra.mxu0 0.0
      %3056 = vmatprep.subr.mxu0 0.0
      %3057 = vmatpush1.msra.mxu0 0.0
      %3058 = vmatprep.subr.mxu0 0.0
      %3059 = vmatpush1.msra.mxu0 0.0
      %3060 = vmatprep.subr.mxu0 0.0
      %3061 = vmatpush1.msra.mxu0 0.0
      %3062 = vmatprep.subr.mxu0 0.0
      %3063 = vmatpush1.msra.mxu0 0.0
      %3064 = vmatprep.subr.mxu0 0.0
      %3065 = vmatpush1.msra.mxu0 0.0
      %3066 = vmatprep.mubr.f32.mxu0 0.0
      %3067 = vmatmul.mubr.f32.gmra.mrb[0].mxu0 %v2440
      %v3068 = vpop.f32.mrb[0].mxu0
      %v3069 = vadd.f32 0.0, %v3068
      %v3070 = vpop.f32.mrb[0].mxu0
      %3071 = vdwg.mxu0
      %v3072 = vld [vmem:[%s14] sm:$0xff]
      %v3073 = vld [vmem:[%s13] sm:$0xff]
      %v3075 = vsel %vm832, %v3073, 0
      %3077 = vmatprep.subr.mxu0 0.0
      %3078 = vmatpush1.msra.mxu0 %v2509
      %3079 = vmatprep.subr.mxu0 0.0
      %3080 = vmatpush1.msra.mxu0 0.0
      %3081 = vmatprep.subr.mxu0 0.0
      %3082 = vmatpush1.msra.mxu0 0.0
      %3083 = vmatprep.subr.mxu0 0.0
      %3084 = vmatpush1.msra.mxu0 0.0
      %3085 = vmatprep.subr.mxu0 0.0
      %3086 = vmatpush1.msra.mxu0 0.0
      %3087 = vmatprep.subr.mxu0 0.0
      %3088 = vmatpush1.msra.mxu0 0.0
      %3089 = vmatprep.subr.mxu0 0.0
      %3090 = vmatpush1.msra.mxu0 0.0
      %3091 = vmatprep.subr.mxu0 0.0
      %3092 = vmatpush1.msra.mxu0 0.0
      %3093 = vmatprep.subr.mxu0 0.0
      %3094 = vmatpush1.msra.mxu0 0.0
      %3095 = vmatprep.subr.mxu0 0.0
      %3096 = vmatpush1.msra.mxu0 0.0
      %3097 = vmatprep.subr.mxu0 0.0
      %3098 = vmatpush1.msra.mxu0 0.0
      %3099 = vmatprep.subr.mxu0 0.0
      %3100 = vmatpush1.msra.mxu0 0.0
      %3101 = vmatprep.subr.mxu0 0.0
      %3102 = vmatpush1.msra.mxu0 0.0
      %3103 = vmatprep.subr.mxu0 0.0
      %3104 = vmatpush1.msra.mxu0 0.0
      %3105 = vmatprep.subr.mxu0 0.0
      %3106 = vmatpush1.msra.mxu0 0.0
      %3107 = vmatprep.subr.mxu0 0.0
      %3108 = vmatpush1.msra.mxu0 0.0
      %3109 = vmatprep.subr.mxu0 0.0
      %3110 = vmatpush1.msra.mxu0 0.0
      %3111 = vmatprep.subr.mxu0 0.0
      %3112 = vmatpush1.msra.mxu0 0.0
      %3113 = vmatprep.subr.mxu0 0.0
      %3114 = vmatpush1.msra.mxu0 0.0
      %3115 = vmatprep.subr.mxu0 0.0
      %3116 = vmatpush1.msra.mxu0 0.0
      %3117 = vmatprep.subr.mxu0 0.0
      %3118 = vmatpush1.msra.mxu0 0.0
      %3119 = vmatprep.subr.mxu0 0.0
      %3120 = vmatpush1.msra.mxu0 0.0
      %3121 = vmatprep.subr.mxu0 0.0
      %3122 = vmatpush1.msra.mxu0 0.0
      %3123 = vmatprep.subr.mxu0 0.0
      %3124 = vmatpush1.msra.mxu0 0.0
      %3125 = vmatprep.subr.mxu0 0.0
      %3126 = vmatpush1.msra.mxu0 0.0
      %3127 = vmatprep.subr.mxu0 0.0
      %3128 = vmatpush1.msra.mxu0 0.0
      %3129 = vmatprep.subr.mxu0 0.0
      %3130 = vmatpush1.msra.mxu0 0.0
      %3131 = vmatprep.subr.mxu0 0.0
      %3132 = vmatpush1.msra.mxu0 0.0
      %3133 = vmatprep.subr.mxu0 0.0
      %3134 = vmatpush1.msra.mxu0 0.0
      %3135 = vmatprep.subr.mxu0 0.0
      %3136 = vmatpush1.msra.mxu0 0.0
      %3137 = vmatprep.subr.mxu0 0.0
      %3138 = vmatpush1.msra.mxu0 0.0
      %3139 = vmatprep.subr.mxu0 0.0
      %3140 = vmatpush1.msra.mxu0 0.0
      %3141 = vmatprep.mubr.f32.mxu0 0.0
      %3142 = vmatmul.mubr.f32.gmra.mrb[0].mxu0 %v3075
      %v3143 = vpop.f32.mrb[0].mxu0
      %v3144 = vadd.f32 0.0, %v3143
      %v3145 = vpop.f32.mrb[0].mxu0
      %3146 = vdwg.mxu0
      %3148 = vset.pattern.permute.xlu0 0
      %3149 = vperm.xlu0 %3148, %v3072
      %v3150 = vpop.permute.xlu0 %3149
      %v3152 = vadd.f32 %v3150, %v3144
      %s3153 = scalar_lea.vmem %s13, 8
      %v3154 = vld [vmem:[%s3153] sm:$0xff]
      %v3156 = vsel %vm832, %v3154, 0
      %3158 = vmatprep.subr.mxu0 0.0
      %3159 = vmatpush1.msra.mxu0 %v2579
      %3160 = vmatprep.subr.mxu0 0.0
      %3161 = vmatpush1.msra.mxu0 0.0
      %3162 = vmatprep.subr.mxu0 0.0
      %3163 = vmatpush1.msra.mxu0 0.0
      %3164 = vmatprep.subr.mxu0 0.0
      %3165 = vmatpush1.msra.mxu0 0.0
      %3166 = vmatprep.subr.mxu0 0.0
      %3167 = vmatpush1.msra.mxu0 0.0
      %3168 = vmatprep.subr.mxu0 0.0
      %3169 = vmatpush1.msra.mxu0 0.0
      %3170 = vmatprep.subr.mxu0 0.0
      %3171 = vmatpush1.msra.mxu0 0.0
      %3172 = vmatprep.subr.mxu0 0.0
      %3173 = vmatpush1.msra.mxu0 0.0
      %3174 = vmatprep.subr.mxu0 0.0
      %3175 = vmatpush1.msra.mxu0 0.0
      %3176 = vmatprep.subr.mxu0 0.0
      %3177 = vmatpush1.msra.mxu0 0.0
      %3178 = vmatprep.subr.mxu0 0.0
      %3179 = vmatpush1.msra.mxu0 0.0
      %3180 = vmatprep.subr.mxu0 0.0
      %3181 = vmatpush1.msra.mxu0 0.0
      %3182 = vmatprep.subr.mxu0 0.0
      %3183 = vmatpush1.msra.mxu0 0.0
      %3184 = vmatprep.subr.mxu0 0.0
      %3185 = vmatpush1.msra.mxu0 0.0
      %3186 = vmatprep.subr.mxu0 0.0
      %3187 = vmatpush1.msra.mxu0 0.0
      %3188 = vmatprep.subr.mxu0 0.0
      %3189 = vmatpush1.msra.mxu0 0.0
      %3190 = vmatprep.subr.mxu0 0.0
      %3191 = vmatpush1.msra.mxu0 0.0
      %3192 = vmatprep.subr.mxu0 0.0
      %3193 = vmatpush1.msra.mxu0 0.0
      %3194 = vmatprep.subr.mxu0 0.0
      %3195 = vmatpush1.msra.mxu0 0.0
      %3196 = vmatprep.subr.mxu0 0.0
      %3197 = vmatpush1.msra.mxu0 0.0
      %3198 = vmatprep.subr.mxu0 0.0
      %3199 = vmatpush1.msra.mxu0 0.0
      %3200 = vmatprep.subr.mxu0 0.0
      %3201 = vmatpush1.msra.mxu0 0.0
      %3202 = vmatprep.subr.mxu0 0.0
      %3203 = vmatpush1.msra.mxu0 0.0
      %3204 = vmatprep.subr.mxu0 0.0
      %3205 = vmatpush1.msra.mxu0 0.0
      %3206 = vmatprep.subr.mxu0 0.0
      %3207 = vmatpush1.msra.mxu0 0.0
      %3208 = vmatprep.subr.mxu0 0.0
      %3209 = vmatpush1.msra.mxu0 0.0
      %3210 = vmatprep.subr.mxu0 0.0
      %3211 = vmatpush1.msra.mxu0 0.0
      %3212 = vmatprep.subr.mxu0 0.0
      %3213 = vmatpush1.msra.mxu0 0.0
      %3214 = vmatprep.subr.mxu0 0.0
      %3215 = vmatpush1.msra.mxu0 0.0
      %3216 = vmatprep.subr.mxu0 0.0
      %3217 = vmatpush1.msra.mxu0 0.0
      %3218 = vmatprep.subr.mxu0 0.0
      %3219 = vmatpush1.msra.mxu0 0.0
      %3220 = vmatprep.subr.mxu0 0.0
      %3221 = vmatpush1.msra.mxu0 0.0
      %3222 = vmatprep.mubr.f32.mxu0 0.0
      %3223 = vmatmul.mubr.f32.gmra.mrb[0].mxu0 %v3156
      %v3224 = vpop.f32.mrb[0].mxu0
      %v3225 = vadd.f32 0.0, %v3224
      %v3226 = vpop.f32.mrb[0].mxu0
      %3227 = vdwg.mxu0
      %v3228 = vadd.f32 %v3152, %v3225
      %s3229 = scalar_lea.vmem %s13, 16
      %v3230 = vld [vmem:[%s3229] sm:$0xff]
      %v3232 = vsel %vm832, %v3230, 0
      %3234 = vmatprep.subr.mxu0 0.0
      %3235 = vmatpush1.msra.mxu0 %v2649
      %3236 = vmatprep.subr.mxu0 0.0
      %3237 = vmatpush1.msra.mxu0 0.0
      %3238 = vmatprep.subr.mxu0 0.0
      %3239 = vmatpush1.msra.mxu0 0.0
      %3240 = vmatprep.subr.mxu0 0.0
      %3241 = vmatpush1.msra.mxu0 0.0
      %3242 = vmatprep.subr.mxu0 0.0
      %3243 = vmatpush1.msra.mxu0 0.0
      %3244 = vmatprep.subr.mxu0 0.0
      %3245 = vmatpush1.msra.mxu0 0.0
      %3246 = vmatprep.subr.mxu0 0.0
      %3247 = vmatpush1.msra.mxu0 0.0
      %3248 = vmatprep.subr.mxu0 0.0
      %3249 = vmatpush1.msra.mxu0 0.0
      %3250 = vmatprep.subr.mxu0 0.0
      %3251 = vmatpush1.msra.mxu0 0.0
      %3252 = vmatprep.subr.mxu0 0.0
      %3253 = vmatpush1.msra.mxu0 0.0
      %3254 = vmatprep.subr.mxu0 0.0
      %3255 = vmatpush1.msra.mxu0 0.0
      %3256 = vmatprep.subr.mxu0 0.0
      %3257 = vmatpush1.msra.mxu0 0.0
      %3258 = vmatprep.subr.mxu0 0.0
      %3259 = vmatpush1.msra.mxu0 0.0
      %3260 = vmatprep.subr.mxu0 0.0
      %3261 = vmatpush1.msra.mxu0 0.0
      %3262 = vmatprep.subr.mxu0 0.0
      %3263 = vmatpush1.msra.mxu0 0.0
      %3264 = vmatprep.subr.mxu0 0.0
      %3265 = vmatpush1.msra.mxu0 0.0
      %3266 = vmatprep.subr.mxu0 0.0
      %3267 = vmatpush1.msra.mxu0 0.0
      %3268 = vmatprep.subr.mxu0 0.0
      %3269 = vmatpush1.msra.mxu0 0.0
      %3270 = vmatprep.subr.mxu0 0.0
      %3271 = vmatpush1.msra.mxu0 0.0
      %3272 = vmatprep.subr.mxu0 0.0
      %3273 = vmatpush1.msra.mxu0 0.0
      %3274 = vmatprep.subr.mxu0 0.0
      %3275 = vmatpush1.msra.mxu0 0.0
      %3276 = vmatprep.subr.mxu0 0.0
      %3277 = vmatpush1.msra.mxu0 0.0
      %3278 = vmatprep.subr.mxu0 0.0
      %3279 = vmatpush1.msra.mxu0 0.0
      %3280 = vmatprep.subr.mxu0 0.0
      %3281 = vmatpush1.msra.mxu0 0.0
      %3282 = vmatprep.subr.mxu0 0.0
      %3283 = vmatpush1.msra.mxu0 0.0
      %3284 = vmatprep.subr.mxu0 0.0
      %3285 = vmatpush1.msra.mxu0 0.0
      %3286 = vmatprep.subr.mxu0 0.0
      %3287 = vmatpush1.msra.mxu0 0.0
      %3288 = vmatprep.subr.mxu0 0.0
      %3289 = vmatpush1.msra.mxu0 0.0
      %3290 = vmatprep.subr.mxu0 0.0
      %3291 = vmatpush1.msra.mxu0 0.0
      %3292 = vmatprep.subr.mxu0 0.0
      %3293 = vmatpush1.msra.mxu0 0.0
      %3294 = vmatprep.subr.mxu0 0.0
      %3295 = vmatpush1.msra.mxu0 0.0
      %3296 = vmatprep.subr.mxu0 0.0
      %3297 = vmatpush1.msra.mxu0 0.0
      %3298 = vmatprep.mubr.f32.mxu0 0.0
      %3299 = vmatmul.mubr.f32.gmra.mrb[0].mxu0 %v3232
      %v3300 = vpop.f32.mrb[0].mxu0
      %v3301 = vadd.f32 0.0, %v3300
      %v3302 = vpop.f32.mrb[0].mxu0
      %3303 = vdwg.mxu0
      %v3304 = vadd.f32 %v3228, %v3301
      %s3305 = scalar_lea.vmem %s13, 24
      %v3306 = vld [vmem:[%s3305] sm:$0xff]
      %v3308 = vsel %vm832, %v3306, 0
      %3310 = vmatprep.subr.mxu0 0.0
      %3311 = vmatpush1.msra.mxu0 %v2719
      %3312 = vmatprep.subr.mxu0 0.0
      %3313 = vmatpush1.msra.mxu0 0.0
      %3314 = vmatprep.subr.mxu0 0.0
      %3315 = vmatpush1.msra.mxu0 0.0
      %3316 = vmatprep.subr.mxu0 0.0
      %3317 = vmatpush1.msra.mxu0 0.0
      %3318 = vmatprep.subr.mxu0 0.0
      %3319 = vmatpush1.msra.mxu0 0.0
      %3320 = vmatprep.subr.mxu0 0.0
      %3321 = vmatpush1.msra.mxu0 0.0
      %3322 = vmatprep.subr.mxu0 0.0
      %3323 = vmatpush1.msra.mxu0 0.0
      %3324 = vmatprep.subr.mxu0 0.0
      %3325 = vmatpush1.msra.mxu0 0.0
      %3326 = vmatprep.subr.mxu0 0.0
      %3327 = vmatpush1.msra.mxu0 0.0
      %3328 = vmatprep.subr.mxu0 0.0
      %3329 = vmatpush1.msra.mxu0 0.0
      %3330 = vmatprep.subr.mxu0 0.0
      %3331 = vmatpush1.msra.mxu0 0.0
      %3332 = vmatprep.subr.mxu0 0.0
      %3333 = vmatpush1.msra.mxu0 0.0
      %3334 = vmatprep.subr.mxu0 0.0
      %3335 = vmatpush1.msra.mxu0 0.0
      %3336 = vmatprep.subr.mxu0 0.0
      %3337 = vmatpush1.msra.mxu0 0.0
      %3338 = vmatprep.subr.mxu0 0.0
      %3339 = vmatpush1.msra.mxu0 0.0
      %3340 = vmatprep.subr.mxu0 0.0
      %3341 = vmatpush1.msra.mxu0 0.0
      %3342 = vmatprep.subr.mxu0 0.0
      %3343 = vmatpush1.msra.mxu0 0.0
      %3344 = vmatprep.subr.mxu0 0.0
      %3345 = vmatpush1.msra.mxu0 0.0
      %3346 = vmatprep.subr.mxu0 0.0
      %3347 = vmatpush1.msra.mxu0 0.0
      %3348 = vmatprep.subr.mxu0 0.0
      %3349 = vmatpush1.msra.mxu0 0.0
      %3350 = vmatprep.subr.mxu0 0.0
      %3351 = vmatpush1.msra.mxu0 0.0
      %3352 = vmatprep.subr.mxu0 0.0
      %3353 = vmatpush1.msra.mxu0 0.0
      %3354 = vmatprep.subr.mxu0 0.0
      %3355 = vmatpush1.msra.mxu0 0.0
      %3356 = vmatprep.subr.mxu0 0.0
      %3357 = vmatpush1.msra.mxu0 0.0
      %3358 = vmatprep.subr.mxu0 0.0
      %3359 = vmatpush1.msra.mxu0 0.0
      %3360 = vmatprep.subr.mxu0 0.0
      %3361 = vmatpush1.msra.mxu0 0.0
      %3362 = vmatprep.subr.mxu0 0.0
      %3363 = vmatpush1.msra.mxu0 0.0
      %3364 = vmatprep.subr.mxu0 0.0
      %3365 = vmatpush1.msra.mxu0 0.0
      %3366 = vmatprep.subr.mxu0 0.0
      %3367 = vmatpush1.msra.mxu0 0.0
      %3368 = vmatprep.subr.mxu0 0.0
      %3369 = vmatpush1.msra.mxu0 0.0
      %3370 = vmatprep.subr.mxu0 0.0
      %3371 = vmatpush1.msra.mxu0 0.0
      %3372 = vmatprep.subr.mxu0 0.0
      %3373 = vmatpush1.msra.mxu0 0.0
      %3374 = vmatprep.mubr.f32.mxu0 0.0
      %3375 = vmatmul.mubr.f32.gmra.mrb[0].mxu0 %v3308
      %v3376 = vpop.f32.mrb[0].mxu0
      %v3377 = vadd.f32 0.0, %v3376
      %v3378 = vpop.f32.mrb[0].mxu0
      %3379 = vdwg.mxu0
      %v3380 = vadd.f32 %v3304, %v3377
      %s3381 = scalar_lea.vmem %s13, 32
      %v3382 = vld [vmem:[%s3381] sm:$0xff]
      %v3384 = vsel %vm832, %v3382, 0
      %3386 = vmatprep.subr.mxu0 0.0
      %3387 = vmatpush1.msra.mxu0 %v2789
      %3388 = vmatprep.subr.mxu0 0.0
      %3389 = vmatpush1.msra.mxu0 0.0
      %3390 = vmatprep.subr.mxu0 0.0
      %3391 = vmatpush1.msra.mxu0 0.0
      %3392 = vmatprep.subr.mxu0 0.0
      %3393 = vmatpush1.msra.mxu0 0.0
      %3394 = vmatprep.subr.mxu0 0.0
      %3395 = vmatpush1.msra.mxu0 0.0
      %3396 = vmatprep.subr.mxu0 0.0
      %3397 = vmatpush1.msra.mxu0 0.0
      %3398 = vmatprep.subr.mxu0 0.0
      %3399 = vmatpush1.msra.mxu0 0.0
      %3400 = vmatprep.subr.mxu0 0.0
      %3401 = vmatpush1.msra.mxu0 0.0
      %3402 = vmatprep.subr.mxu0 0.0
      %3403 = vmatpush1.msra.mxu0 0.0
      %3404 = vmatprep.subr.mxu0 0.0
      %3405 = vmatpush1.msra.mxu0 0.0
      %3406 = vmatprep.subr.mxu0 0.0
      %3407 = vmatpush1.msra.mxu0 0.0
      %3408 = vmatprep.subr.mxu0 0.0
      %3409 = vmatpush1.msra.mxu0 0.0
      %3410 = vmatprep.subr.mxu0 0.0
      %3411 = vmatpush1.msra.mxu0 0.0
      %3412 = vmatprep.subr.mxu0 0.0
      %3413 = vmatpush1.msra.mxu0 0.0
      %3414 = vmatprep.subr.mxu0 0.0
      %3415 = vmatpush1.msra.mxu0 0.0
      %3416 = vmatprep.subr.mxu0 0.0
      %3417 = vmatpush1.msra.mxu0 0.0
      %3418 = vmatprep.subr.mxu0 0.0
      %3419 = vmatpush1.msra.mxu0 0.0
      %3420 = vmatprep.subr.mxu0 0.0
      %3421 = vmatpush1.msra.mxu0 0.0
      %3422 = vmatprep.subr.mxu0 0.0
      %3423 = vmatpush1.msra.mxu0 0.0
      %3424 = vmatprep.subr.mxu0 0.0
      %3425 = vmatpush1.msra.mxu0 0.0
      %3426 = vmatprep.subr.mxu0 0.0
      %3427 = vmatpush1.msra.mxu0 0.0
      %3428 = vmatprep.subr.mxu0 0.0
      %3429 = vmatpush1.msra.mxu0 0.0
      %3430 = vmatprep.subr.mxu0 0.0
      %3431 = vmatpush1.msra.mxu0 0.0
      %3432 = vmatprep.subr.mxu0 0.0
      %3433 = vmatpush1.msra.mxu0 0.0
      %3434 = vmatprep.subr.mxu0 0.0
      %3435 = vmatpush1.msra.mxu0 0.0
      %3436 = vmatprep.subr.mxu0 0.0
      %3437 = vmatpush1.msra.mxu0 0.0
      %3438 = vmatprep.subr.mxu0 0.0
      %3439 = vmatpush1.msra.mxu0 0.0
      %3440 = vmatprep.subr.mxu0 0.0
      %3441 = vmatpush1.msra.mxu0 0.0
      %3442 = vmatprep.subr.mxu0 0.0
      %3443 = vmatpush1.msra.mxu0 0.0
      %3444 = vmatprep.subr.mxu0 0.0
      %3445 = vmatpush1.msra.mxu0 0.0
      %3446 = vmatprep.subr.mxu0 0.0
      %3447 = vmatpush1.msra.mxu0 0.0
      %3448 = vmatprep.subr.mxu0 0.0
      %3449 = vmatpush1.msra.mxu0 0.0
      %3450 = vmatprep.mubr.f32.mxu0 0.0
      %3451 = vmatmul.mubr.f32.gmra.mrb[0].mxu0 %v3384
      %v3452 = vpop.f32.mrb[0].mxu0
      %v3453 = vadd.f32 0.0, %v3452
      %v3454 = vpop.f32.mrb[0].mxu0
      %3455 = vdwg.mxu0
      %v3456 = vadd.f32 %v3380, %v3453
      %s3457 = scalar_lea.vmem %s13, 40
      %v3458 = vld [vmem:[%s3457] sm:$0xff]
      %v3460 = vsel %vm832, %v3458, 0
      %3462 = vmatprep.subr.mxu0 0.0
      %3463 = vmatpush1.msra.mxu0 %v2859
      %3464 = vmatprep.subr.mxu0 0.0
      %3465 = vmatpush1.msra.mxu0 0.0
      %3466 = vmatprep.subr.mxu0 0.0
      %3467 = vmatpush1.msra.mxu0 0.0
      %3468 = vmatprep.subr.mxu0 0.0
      %3469 = vmatpush1.msra.mxu0 0.0
      %3470 = vmatprep.subr.mxu0 0.0
      %3471 = vmatpush1.msra.mxu0 0.0
      %3472 = vmatprep.subr.mxu0 0.0
      %3473 = vmatpush1.msra.mxu0 0.0
      %3474 = vmatprep.subr.mxu0 0.0
      %3475 = vmatpush1.msra.mxu0 0.0
      %3476 = vmatprep.subr.mxu0 0.0
      %3477 = vmatpush1.msra.mxu0 0.0
      %3478 = vmatprep.subr.mxu0 0.0
      %3479 = vmatpush1.msra.mxu0 0.0
      %3480 = vmatprep.subr.mxu0 0.0
      %3481 = vmatpush1.msra.mxu0 0.0
      %3482 = vmatprep.subr.mxu0 0.0
      %3483 = vmatpush1.msra.mxu0 0.0
      %3484 = vmatprep.subr.mxu0 0.0
      %3485 = vmatpush1.msra.mxu0 0.0
      %3486 = vmatprep.subr.mxu0 0.0
      %3487 = vmatpush1.msra.mxu0 0.0
      %3488 = vmatprep.subr.mxu0 0.0
      %3489 = vmatpush1.msra.mxu0 0.0
      %3490 = vmatprep.subr.mxu0 0.0
      %3491 = vmatpush1.msra.mxu0 0.0
      %3492 = vmatprep.subr.mxu0 0.0
      %3493 = vmatpush1.msra.mxu0 0.0
      %3494 = vmatprep.subr.mxu0 0.0
      %3495 = vmatpush1.msra.mxu0 0.0
      %3496 = vmatprep.subr.mxu0 0.0
      %3497 = vmatpush1.msra.mxu0 0.0
      %3498 = vmatprep.subr.mxu0 0.0
      %3499 = vmatpush1.msra.mxu0 0.0
      %3500 = vmatprep.subr.mxu0 0.0
      %3501 = vmatpush1.msra.mxu0 0.0
      %3502 = vmatprep.subr.mxu0 0.0
      %3503 = vmatpush1.msra.mxu0 0.0
      %3504 = vmatprep.subr.mxu0 0.0
      %3505 = vmatpush1.msra.mxu0 0.0
      %3506 = vmatprep.subr.mxu0 0.0
      %3507 = vmatpush1.msra.mxu0 0.0
      %3508 = vmatprep.subr.mxu0 0.0
      %3509 = vmatpush1.msra.mxu0 0.0
      %3510 = vmatprep.subr.mxu0 0.0
      %3511 = vmatpush1.msra.mxu0 0.0
      %3512 = vmatprep.subr.mxu0 0.0
      %3513 = vmatpush1.msra.mxu0 0.0
      %3514 = vmatprep.subr.mxu0 0.0
      %3515 = vmatpush1.msra.mxu0 0.0
      %3516 = vmatprep.subr.mxu0 0.0
      %3517 = vmatpush1.msra.mxu0 0.0
      %3518 = vmatprep.subr.mxu0 0.0
      %3519 = vmatpush1.msra.mxu0 0.0
      %3520 = vmatprep.subr.mxu0 0.0
      %3521 = vmatpush1.msra.mxu0 0.0
      %3522 = vmatprep.subr.mxu0 0.0
      %3523 = vmatpush1.msra.mxu0 0.0
      %3524 = vmatprep.subr.mxu0 0.0
      %3525 = vmatpush1.msra.mxu0 0.0
      %3526 = vmatprep.mubr.f32.mxu0 0.0
      %3527 = vmatmul.mubr.f32.gmra.mrb[0].mxu0 %v3460
      %v3528 = vpop.f32.mrb[0].mxu0
      %v3529 = vadd.f32 0.0, %v3528
      %v3530 = vpop.f32.mrb[0].mxu0
      %3531 = vdwg.mxu0
      %v3532 = vadd.f32 %v3456, %v3529
      %s3533 = scalar_lea.vmem %s13, 48
      %v3534 = vld [vmem:[%s3533] sm:$0xff]
      %v3536 = vsel %vm832, %v3534, 0
      %3538 = vmatprep.subr.mxu0 0.0
      %3539 = vmatpush1.msra.mxu0 %v2929
      %3540 = vmatprep.subr.mxu0 0.0
      %3541 = vmatpush1.msra.mxu0 0.0
      %3542 = vmatprep.subr.mxu0 0.0
      %3543 = vmatpush1.msra.mxu0 0.0
      %3544 = vmatprep.subr.mxu0 0.0
      %3545 = vmatpush1.msra.mxu0 0.0
      %3546 = vmatprep.subr.mxu0 0.0
      %3547 = vmatpush1.msra.mxu0 0.0
      %3548 = vmatprep.subr.mxu0 0.0
      %3549 = vmatpush1.msra.mxu0 0.0
      %3550 = vmatprep.subr.mxu0 0.0
      %3551 = vmatpush1.msra.mxu0 0.0
      %3552 = vmatprep.subr.mxu0 0.0
      %3553 = vmatpush1.msra.mxu0 0.0
      %3554 = vmatprep.subr.mxu0 0.0
      %3555 = vmatpush1.msra.mxu0 0.0
      %3556 = vmatprep.subr.mxu0 0.0
      %3557 = vmatpush1.msra.mxu0 0.0
      %3558 = vmatprep.subr.mxu0 0.0
      %3559 = vmatpush1.msra.mxu0 0.0
      %3560 = vmatprep.subr.mxu0 0.0
      %3561 = vmatpush1.msra.mxu0 0.0
      %3562 = vmatprep.subr.mxu0 0.0
      %3563 = vmatpush1.msra.mxu0 0.0
      %3564 = vmatprep.subr.mxu0 0.0
      %3565 = vmatpush1.msra.mxu0 0.0
      %3566 = vmatprep.subr.mxu0 0.0
      %3567 = vmatpush1.msra.mxu0 0.0
      %3568 = vmatprep.subr.mxu0 0.0
      %3569 = vmatpush1.msra.mxu0 0.0
      %3570 = vmatprep.subr.mxu0 0.0
      %3571 = vmatpush1.msra.mxu0 0.0
      %3572 = vmatprep.subr.mxu0 0.0
      %3573 = vmatpush1.msra.mxu0 0.0
      %3574 = vmatprep.subr.mxu0 0.0
      %3575 = vmatpush1.msra.mxu0 0.0
      %3576 = vmatprep.subr.mxu0 0.0
      %3577 = vmatpush1.msra.mxu0 0.0
      %3578 = vmatprep.subr.mxu0 0.0
      %3579 = vmatpush1.msra.mxu0 0.0
      %3580 = vmatprep.subr.mxu0 0.0
      %3581 = vmatpush1.msra.mxu0 0.0
      %3582 = vmatprep.subr.mxu0 0.0
      %3583 = vmatpush1.msra.mxu0 0.0
      %3584 = vmatprep.subr.mxu0 0.0
      %3585 = vmatpush1.msra.mxu0 0.0
      %3586 = vmatprep.subr.mxu0 0.0
      %3587 = vmatpush1.msra.mxu0 0.0
      %3588 = vmatprep.subr.mxu0 0.0
      %3589 = vmatpush1.msra.mxu0 0.0
      %3590 = vmatprep.subr.mxu0 0.0
      %3591 = vmatpush1.msra.mxu0 0.0
      %3592 = vmatprep.subr.mxu0 0.0
      %3593 = vmatpush1.msra.mxu0 0.0
      %3594 = vmatprep.subr.mxu0 0.0
      %3595 = vmatpush1.msra.mxu0 0.0
      %3596 = vmatprep.subr.mxu0 0.0
      %3597 = vmatpush1.msra.mxu0 0.0
      %3598 = vmatprep.subr.mxu0 0.0
      %3599 = vmatpush1.msra.mxu0 0.0
      %3600 = vmatprep.subr.mxu0 0.0
      %3601 = vmatpush1.msra.mxu0 0.0
      %3602 = vmatprep.mubr.f32.mxu0 0.0
      %3603 = vmatmul.mubr.f32.gmra.mrb[0].mxu0 %v3536
      %v3604 = vpop.f32.mrb[0].mxu0
      %v3605 = vadd.f32 0.0, %v3604
      %v3606 = vpop.f32.mrb[0].mxu0
      %3607 = vdwg.mxu0
      %v3608 = vadd.f32 %v3532, %v3605
      %s3609 = scalar_lea.vmem %s13, 56
      %v3610 = vld [vmem:[%s3609] sm:$0xff]
      %v3612 = vsel %vm832, %v3610, 0
      %3614 = vmatprep.subr.mxu0 0.0
      %3615 = vmatpush1.msra.mxu0 %v2999
      %3616 = vmatprep.subr.mxu0 0.0
      %3617 = vmatpush1.msra.mxu0 0.0
      %3618 = vmatprep.subr.mxu0 0.0
      %3619 = vmatpush1.msra.mxu0 0.0
      %3620 = vmatprep.subr.mxu0 0.0
      %3621 = vmatpush1.msra.mxu0 0.0
      %3622 = vmatprep.subr.mxu0 0.0
      %3623 = vmatpush1.msra.mxu0 0.0
      %3624 = vmatprep.subr.mxu0 0.0
      %3625 = vmatpush1.msra.mxu0 0.0
      %3626 = vmatprep.subr.mxu0 0.0
      %3627 = vmatpush1.msra.mxu0 0.0
      %3628 = vmatprep.subr.mxu0 0.0
      %3629 = vmatpush1.msra.mxu0 0.0
      %3630 = vmatprep.subr.mxu0 0.0
      %3631 = vmatpush1.msra.mxu0 0.0
      %3632 = vmatprep.subr.mxu0 0.0
      %3633 = vmatpush1.msra.mxu0 0.0
      %3634 = vmatprep.subr.mxu0 0.0
      %3635 = vmatpush1.msra.mxu0 0.0
      %3636 = vmatprep.subr.mxu0 0.0
      %3637 = vmatpush1.msra.mxu0 0.0
      %3638 = vmatprep.subr.mxu0 0.0
      %3639 = vmatpush1.msra.mxu0 0.0
      %3640 = vmatprep.subr.mxu0 0.0
      %3641 = vmatpush1.msra.mxu0 0.0
      %3642 = vmatprep.subr.mxu0 0.0
      %3643 = vmatpush1.msra.mxu0 0.0
      %3644 = vmatprep.subr.mxu0 0.0
      %3645 = vmatpush1.msra.mxu0 0.0
      %3646 = vmatprep.subr.mxu0 0.0
      %3647 = vmatpush1.msra.mxu0 0.0
      %3648 = vmatprep.subr.mxu0 0.0
      %3649 = vmatpush1.msra.mxu0 0.0
      %3650 = vmatprep.subr.mxu0 0.0
      %3651 = vmatpush1.msra.mxu0 0.0
      %3652 = vmatprep.subr.mxu0 0.0
      %3653 = vmatpush1.msra.mxu0 0.0
      %3654 = vmatprep.subr.mxu0 0.0
      %3655 = vmatpush1.msra.mxu0 0.0
      %3656 = vmatprep.subr.mxu0 0.0
      %3657 = vmatpush1.msra.mxu0 0.0
      %3658 = vmatprep.subr.mxu0 0.0
      %3659 = vmatpush1.msra.mxu0 0.0
      %3660 = vmatprep.subr.mxu0 0.0
      %3661 = vmatpush1.msra.mxu0 0.0
      %3662 = vmatprep.subr.mxu0 0.0
      %3663 = vmatpush1.msra.mxu0 0.0
      %3664 = vmatprep.subr.mxu0 0.0
      %3665 = vmatpush1.msra.mxu0 0.0
      %3666 = vmatprep.subr.mxu0 0.0
      %3667 = vmatpush1.msra.mxu0 0.0
      %3668 = vmatprep.subr.mxu0 0.0
      %3669 = vmatpush1.msra.mxu0 0.0
      %3670 = vmatprep.subr.mxu0 0.0
      %3671 = vmatpush1.msra.mxu0 0.0
      %3672 = vmatprep.subr.mxu0 0.0
      %3673 = vmatpush1.msra.mxu0 0.0
      %3674 = vmatprep.subr.mxu0 0.0
      %3675 = vmatpush1.msra.mxu0 0.0
      %3676 = vmatprep.subr.mxu0 0.0
      %3677 = vmatpush1.msra.mxu0 0.0
      %3678 = vmatprep.mubr.f32.mxu0 0.0
      %3679 = vmatmul.mubr.f32.gmra.mrb[0].mxu0 %v3612
      %v3680 = vpop.f32.mrb[0].mxu0
      %v3681 = vadd.f32 0.0, %v3680
      %v3682 = vpop.f32.mrb[0].mxu0
      %3683 = vdwg.mxu0
      %v3684 = vadd.f32 %v3608, %v3681
      %s3685 = scalar_lea.vmem %s13, 64
      %v3686 = vld [vmem:[%s3685] sm:$0xff]
      %v3688 = vsel %vm832, %v3686, 0
      %3690 = vmatprep.subr.mxu0 0.0
      %3691 = vmatpush1.msra.mxu0 %v3069
      %3692 = vmatprep.subr.mxu0 0.0
      %3693 = vmatpush1.msra.mxu0 0.0
      %3694 = vmatprep.subr.mxu0 0.0
      %3695 = vmatpush1.msra.mxu0 0.0
      %3696 = vmatprep.subr.mxu0 0.0
      %3697 = vmatpush1.msra.mxu0 0.0
      %3698 = vmatprep.subr.mxu0 0.0
      %3699 = vmatpush1.msra.mxu0 0.0
      %3700 = vmatprep.subr.mxu0 0.0
      %3701 = vmatpush1.msra.mxu0 0.0
      %3702 = vmatprep.subr.mxu0 0.0
      %3703 = vmatpush1.msra.mxu0 0.0
      %3704 = vmatprep.subr.mxu0 0.0
      %3705 = vmatpush1.msra.mxu0 0.0
      %3706 = vmatprep.subr.mxu0 0.0
      %3707 = vmatpush1.msra.mxu0 0.0
      %3708 = vmatprep.subr.mxu0 0.0
      %3709 = vmatpush1.msra.mxu0 0.0
      %3710 = vmatprep.subr.mxu0 0.0
      %3711 = vmatpush1.msra.mxu0 0.0
      %3712 = vmatprep.subr.mxu0 0.0
      %3713 = vmatpush1.msra.mxu0 0.0
      %3714 = vmatprep.subr.mxu0 0.0
      %3715 = vmatpush1.msra.mxu0 0.0
      %3716 = vmatprep.subr.mxu0 0.0
      %3717 = vmatpush1.msra.mxu0 0.0
      %3718 = vmatprep.subr.mxu0 0.0
      %3719 = vmatpush1.msra.mxu0 0.0
      %3720 = vmatprep.subr.mxu0 0.0
      %3721 = vmatpush1.msra.mxu0 0.0
      %3722 = vmatprep.subr.mxu0 0.0
      %3723 = vmatpush1.msra.mxu0 0.0
      %3724 = vmatprep.subr.mxu0 0.0
      %3725 = vmatpush1.msra.mxu0 0.0
      %3726 = vmatprep.subr.mxu0 0.0
      %3727 = vmatpush1.msra.mxu0 0.0
      %3728 = vmatprep.subr.mxu0 0.0
      %3729 = vmatpush1.msra.mxu0 0.0
      %3730 = vmatprep.subr.mxu0 0.0
      %3731 = vmatpush1.msra.mxu0 0.0
      %3732 = vmatprep.subr.mxu0 0.0
      %3733 = vmatpush1.msra.mxu0 0.0
      %3734 = vmatprep.subr.mxu0 0.0
      %3735 = vmatpush1.msra.mxu0 0.0
      %3736 = vmatprep.subr.mxu0 0.0
      %3737 = vmatpush1.msra.mxu0 0.0
      %3738 = vmatprep.subr.mxu0 0.0
      %3739 = vmatpush1.msra.mxu0 0.0
      %3740 = vmatprep.subr.mxu0 0.0
      %3741 = vmatpush1.msra.mxu0 0.0
      %3742 = vmatprep.subr.mxu0 0.0
      %3743 = vmatpush1.msra.mxu0 0.0
      %3744 = vmatprep.subr.mxu0 0.0
      %3745 = vmatpush1.msra.mxu0 0.0
      %3746 = vmatprep.subr.mxu0 0.0
      %3747 = vmatpush1.msra.mxu0 0.0
      %3748 = vmatprep.subr.mxu0 0.0
      %3749 = vmatpush1.msra.mxu0 0.0
      %3750 = vmatprep.subr.mxu0 0.0
      %3751 = vmatpush1.msra.mxu0 0.0
      %3752 = vmatprep.subr.mxu0 0.0
      %3753 = vmatpush1.msra.mxu0 0.0
      %3754 = vmatprep.mubr.f32.mxu0 0.0
      %3755 = vmatmul.mubr.f32.gmra.mrb[0].mxu0 %v3688
      %v3756 = vpop.f32.mrb[0].mxu0
      %v3757 = vadd.f32 0.0, %v3756
      %v3758 = vpop.f32.mrb[0].mxu0
      %3759 = vdwg.mxu0
      %v3760 = vadd.f32 %v3684, %v3757
      %v3761 = vmax.f32 %v3760, 0.0
      %v3762 = vld [vmem:[%s15] sm:$0x3]
      %v3763 = vld [vmem:[%s16] sm:$0x3]
      %3765 = vset.pattern.permute.xlu0 0
      %3766 = vperm.xlu0 %3765, %v3763
      %v3767 = vpop.permute.xlu0 %3766
      %v3770 = vsel %vm832, %v3762, 0
      %3772 = vmatprep.subr.mxu0 0.0
      %3773 = vmatpush1.msra.mxu0 %v3761
      %3774 = vmatprep.subr.mxu0 0.0
      %3775 = vmatpush1.msra.mxu0 0.0
      %3776 = vmatprep.subr.mxu0 0.0
      %3777 = vmatpush1.msra.mxu0 0.0
      %3778 = vmatprep.subr.mxu0 0.0
      %3779 = vmatpush1.msra.mxu0 0.0
      %3780 = vmatprep.subr.mxu0 0.0
      %3781 = vmatpush1.msra.mxu0 0.0
      %3782 = vmatprep.subr.mxu0 0.0
      %3783 = vmatpush1.msra.mxu0 0.0
      %3784 = vmatprep.subr.mxu0 0.0
      %3785 = vmatpush1.msra.mxu0 0.0
      %3786 = vmatprep.subr.mxu0 0.0
      %3787 = vmatpush1.msra.mxu0 0.0
      %3788 = vmatprep.subr.mxu0 0.0
      %3789 = vmatpush1.msra.mxu0 0.0
      %3790 = vmatprep.subr.mxu0 0.0
      %3791 = vmatpush1.msra.mxu0 0.0
      %3792 = vmatprep.subr.mxu0 0.0
      %3793 = vmatpush1.msra.mxu0 0.0
      %3794 = vmatprep.subr.mxu0 0.0
      %3795 = vmatpush1.msra.mxu0 0.0
      %3796 = vmatprep.subr.mxu0 0.0
      %3797 = vmatpush1.msra.mxu0 0.0
      %3798 = vmatprep.subr.mxu0 0.0
      %3799 = vmatpush1.msra.mxu0 0.0
      %3800 = vmatprep.subr.mxu0 0.0
      %3801 = vmatpush1.msra.mxu0 0.0
      %3802 = vmatprep.subr.mxu0 0.0
      %3803 = vmatpush1.msra.mxu0 0.0
      %3804 = vmatprep.subr.mxu0 0.0
      %3805 = vmatpush1.msra.mxu0 0.0
      %3806 = vmatprep.subr.mxu0 0.0
      %3807 = vmatpush1.msra.mxu0 0.0
      %3808 = vmatprep.subr.mxu0 0.0
      %3809 = vmatpush1.msra.mxu0 0.0
      %3810 = vmatprep.subr.mxu0 0.0
      %3811 = vmatpush1.msra.mxu0 0.0
      %3812 = vmatprep.subr.mxu0 0.0
      %3813 = vmatpush1.msra.mxu0 0.0
      %3814 = vmatprep.subr.mxu0 0.0
      %3815 = vmatpush1.msra.mxu0 0.0
      %3816 = vmatprep.subr.mxu0 0.0
      %3817 = vmatpush1.msra.mxu0 0.0
      %3818 = vmatprep.subr.mxu0 0.0
      %3819 = vmatpush1.msra.mxu0 0.0
      %3820 = vmatprep.subr.mxu0 0.0
      %3821 = vmatpush1.msra.mxu0 0.0
      %3822 = vmatprep.subr.mxu0 0.0
      %3823 = vmatpush1.msra.mxu0 0.0
      %3824 = vmatprep.subr.mxu0 0.0
      %3825 = vmatpush1.msra.mxu0 0.0
      %3826 = vmatprep.subr.mxu0 0.0
      %3827 = vmatpush1.msra.mxu0 0.0
      %3828 = vmatprep.subr.mxu0 0.0
      %3829 = vmatpush1.msra.mxu0 0.0
      %3830 = vmatprep.subr.mxu0 0.0
      %3831 = vmatpush1.msra.mxu0 0.0
      %3832 = vmatprep.subr.mxu0 0.0
      %3833 = vmatpush1.msra.mxu0 0.0
      %3834 = vmatprep.subr.mxu0 0.0
      %3835 = vmatpush1.msra.mxu0 0.0
      %3836 = vmatprep.mubr.f32.mxu0 0.0
      %3837 = vmatmul.mubr.f32.gmra.mrb[0].mxu0 %v3770
      %v3838 = vpop.f32.mrb[0].mxu0
      %v3839 = vadd.f32 %v3767, %v3838
      %v3840 = vpop.f32.mrb[0].mxu0
      %3841 = vdwg.mxu0
      %vm3842 = vcmask 123904
      %3843 = vst.msk [vmem:[%s546] sm:$0x3] %vm3842, %v3839
      %p3844 = scmp.lt.s32.totalorder %s28, 1
      %s3845 = scalar_select %p3844, %s28, 1
      %s3846 = smul.addr %s3845, 2
      %s3847 = scalar_lea.vmem %s17, %s3846
      // Predicated region
      $region89: #{deeplabv3plus_gru_v5_forward.2} parent=87 // pred_check
        %p3848 = pneg %p408
      $region90: #{deeplabv3plus_gru_v5_forward.2} parent=87 // pred_check_branch
        %3850 = sbr.rel (%p3848) target = $region92
      $region91: #{deeplabv3plus_gru_v5_forward.2} parent=87 // pred_region
        _
      $region92: #{deeplabv3plus_gru_v5_forward.2} parent=87 // pred_fallthru
        _
    $region88: #{deeplabv3plus_gru_v5_forward.2} parent=5 // pred_fallthru
      _
    %p3851 = scmp.le.s32.totalorder 2, %s23
    // Predicated region
    $region93: #{deeplabv3plus_gru_v5_forward.2} parent=5 // pred_check
      %p3852 = pneg %p3851
    $region94: #{deeplabv3plus_gru_v5_forward.2} parent=5 // pred_check_branch
      %3854 = sbr.rel (%p3852) target = $region96
    $region95: #{deeplabv3plus_gru_v5_forward.2} parent=5 // pred_region
      %s3855 = ssub.s32 %s23, 2
      // Predicated region
      $region97: #{deeplabv3plus_gru_v5_forward.2} parent=95 // pred_check
        %p3856 = pneg %p414
      $region98: #{deeplabv3plus_gru_v5_forward.2} parent=95 // pred_check_branch
        %3858 = sbr.rel (%p3856) target = $region100
      $region99: #{deeplabv3plus_gru_v5_forward.2} parent=95 // pred_region
        %p3859 = scmp.lt.s32.totalorder %s29, 1
        %s3860 = scalar_select %p3859, %s29, 1
        %s3861 = smul.addr %s3860, 2
        %s3862 = scalar_lea.vmem %s17, %s3861
      $region100: #{deeplabv3plus_gru_v5_forward.2} parent=95 // pred_fallthru
        _
    $region96: #{deeplabv3plus_gru_v5_forward.2} parent=5 // pred_fallthru
      _
  $region6: #{deeplabv3plus_gru_v5_forward.2} parent=0 // loop_footer
    %s27 = sadd.s32 1, %s23
  $region7: #{deeplabv3plus_gru_v5_forward.2} parent=0 // loop_footer_branch
    %22 = sbr.rel target = $region3
  $region8: #{deeplabv3plus_gru_v5_forward.2} parent=0 // loop_exit
    _

</llo_original>
